<compile_context>
chip_gen: v6e
topology: v6e:2x2x1
jax: 0.10.0
libtpu: 0.0.40
codegen_flags: <defaults>
</compile_context>

<pallas_src>
import jax
import jax.numpy as jnp
from jax import lax
from jax.experimental import pallas as pl
from jax.experimental.pallas import tpu as pltpu


KAPPA = 0.276                 # hard-coded in the torch forward's DDOpt call
BN_EPS = 1e-5                 # torch BatchNorm1d default
SOFTPLUS_THRESHOLD = 20.0     # torch Softplus default


# ----------------------------------------------------------------------------
# DDOpt: externally-injected operator in the torch module (constructor arg).
# TODO(synk): DDOpt has no definition in the provided module; a representative
#             2D gauged Wilson-Dirac operator (kappa hopping term, U(1) links)
#             is used as the stand-in.  This complex-arithmetic version is kept
#             only as the correctness reference for the fused Pallas kernel.
# ----------------------------------------------------------------------------
def _ddopt_reference(psi, U1, kappa=KAPPA):
    """psi: (1, L, L, 2) complex64, U1: (B, 2, L, L) complex64 -> (B, L, L, 2)."""
    g0 = jnp.array([[0.0, 1.0], [1.0, 0.0]], dtype=jnp.complex64)        # sigma_x
    g1 = jnp.array([[0.0, -1.0j], [1.0j, 0.0]], dtype=jnp.complex64)     # sigma_y
    U0 = U1[:, 0][..., None]   # (B, L, L, 1)
    Uy = U1[:, 1][..., None]   # (B, L, L, 1)

    fwd0 = U0 * jnp.roll(psi, -1, axis=1)
    bwd0 = jnp.conj(jnp.roll(U0, 1, axis=1)) * jnp.roll(psi, 1, axis=1)
    hop0 = (fwd0 - jnp.einsum("ij,bxyj->bxyi", g0, fwd0)) \
         + (bwd0 + jnp.einsum("ij,bxyj->bxyi", g0, bwd0))

    fwd1 = Uy * jnp.roll(psi, -1, axis=2)
    bwd1 = jnp.conj(jnp.roll(Uy, 1, axis=2)) * jnp.roll(psi, 1, axis=2)
    hop1 = (fwd1 - jnp.einsum("ij,bxyj->bxyi", g1, fwd1)) \
         + (bwd1 + jnp.einsum("ij,bxyj->bxyi", g1, bwd1))

    return psi - kappa * (hop0 + hop1)


def _reference_forward(params, U1):
    """Pure-JAX mirror of the torch module (with the DDOpt stand-in)."""
    basis = (params["basis_real"] + 1j * params["basis_imag"]).astype(jnp.complex64)
    outs = [_ddopt_reference(basis[i:i + 1], U1).reshape(U1.shape[0], -1)
            for i in range(basis.shape[0])]
    x = jnp.stack(outs, axis=1)
    x = jnp.concatenate([jnp.real(x), jnp.imag(x)], axis=1)
    x = x.reshape(x.shape[0], -1).astype(jnp.float32)

    h = jnp.dot(x, params["w1"], precision=lax.Precision.HIGHEST) + params["b1"]
    a = params["alpha"][0, 0]
    h = jnp.where(h >= 0.0, h, a * h)
    mean = jnp.mean(h, axis=0, keepdims=True)
    var = jnp.mean((h - mean) ** 2, axis=0, keepdims=True)
    h = (h - mean) * lax.rsqrt(var + BN_EPS) * params["gamma"] + params["beta"]
    z = jnp.dot(h, params["w2"], precision=lax.Precision.HIGHEST) + params["b2"]
    y = jnp.where(z > SOFTPLUS_THRESHOLD, z, jnp.log1p(jnp.exp(z)))
    half = y.shape[1] // 2
    return (y[:, :half] + 1j * y[:, half:]).astype(jnp.complex64)


# ----------------------------------------------------------------------------
# Fused Pallas kernel.
#
# Layouts (W = K * L*L*2, lane = k*L*L*2 + x*2L + y*2 + spin  ==  torch's
# cat([real blocks, imag blocks]).reshape order within each half):
#
# psi_ref : (18, W) f32 — 18 row types, each holding ALL K basis vectors
#           lane-concatenated:
#             0 re(psi)           1 im(psi)
#             2 re(psi_x+)  3 im(psi_x+)   4 re(swap psi_x+)  5 im(swap psi_x+)
#             6 re(psi_x-)  7 im(psi_x-)   8 re(swap psi_x-)  9 im(swap psi_x-)
#            10 re(psi_y+) 11 im(psi_y+)  12 re(swap psi_y+) 13 im(swap psi_y+)
#            14 re(psi_y-) 15 im(psi_y-)  16 re(swap psi_y-) 17 im(swap psi_y-)
#           "swap" exchanges the two spin components; x+/x-/y+/y- are the
#           nearest-neighbour lattice shifts (precomputed from the parameters).
# u_ref   : (8*B, W) f32, spin-duplicated gauge links tiled K times along
#           lanes; row groups of B:
#             [re U0, im U0, re U0(x-1), im U0(x-1),
#              re Uy, im Uy, re Uy(y-1), im Uy(y-1)]
# w1_ref  : (2*W, H1) f32 — torch w1 as-is (rows 0..W-1 = real features,
#           W..2W-1 = imag features, exactly torch's feature order).
# bn_ref  : (3, H1) f32 = [b1 ; gamma ; beta]
# alpha   : (1, 1) f32 in SMEM (shared PReLU slope)
# w2_ref  : (H1, H2p) f32, b2_ref : (1, H2p) f32 (zero-padded, lane-dense)
# o_ref   : (B, H2p) f32
# ----------------------------------------------------------------------------
def _fused_kernel(psi_ref, u_ref, w1_ref, bn_ref, alpha_ref, w2_ref, b2_ref, o_ref):
    W = psi_ref.shape[1]                   # K * L*L*2
    B = u_ref.shape[0] // 8

    # -1 on even (spin-0) lanes, +1 on odd (spin-1) lanes: the sign pattern of
    # the sigma_y spin mixing in the interleaved layout (L*L*2 is even, so the
    # parity is preserved across the K lane-tiles).
    lane = lax.broadcasted_iota(jnp.int32, (1, W), 1)
    sgn = jnp.where(lane % 2 == 0, -1.0, 1.0).astype(jnp.float32)

    def u(idx):                            # (B, W)
        return u_ref[idx * B:(idx + 1) * B, :]

    def p(r):                              # (1, W)
        return psi_ref[r:r + 1, :]

    u0r, u0i, u0mr, u0mi = u(0), u(1), u(2), u(3)
    uyr, uyi, uymr, uymi = u(4), u(5), u(6), u(7)

    pc_r, pc_i = p(0), p(1)
    pxp_r, pxp_i, sxp_r, sxp_i = p(2), p(3), p(4), p(5)
    pxm_r, pxm_i, sxm_r, sxm_i = p(6), p(7), p(8), p(9)
    pyp_r, pyp_i, syp_r, syp_i = p(10), p(11), p(12), p(13)
    pym_r, pym_i, sym_r, sym_i = p(14), p(15), p(16), p(17)

    # ---- x-direction hop, sigma_x spin structure --------------------------
    # forward: w = U0 * psi_x+ ; apply (I - g0): w - swap(w)
    f_re = u0r * pxp_r - u0i * pxp_i
    f_im = u0r * pxp_i + u0i * pxp_r
    fs_re = u0r * sxp_r - u0i * sxp_i              # swap(w) = U0 * swap(psi)
    fs_im = u0r * sxp_i + u0i * sxp_r
    # backward: w = conj(U0(x-1)) * psi_x- ; apply (I + g0): w + swap(w)
    b_re = u0mr * pxm_r + u0mi * pxm_i
    b_im = u0mr * pxm_i - u0mi * pxm_r
    bs_re = u0mr * sxm_r + u0mi * sxm_i
    bs_im = u0mr * sxm_i - u0mi * sxm_r
    hop_re = (f_re - fs_re) + (b_re + bs_re)
    hop_im = (f_im - fs_im) + (b_im + bs_im)

    # ---- y-direction hop, sigma_y spin structure ---------------------------
    # forward: w = Uy * psi_y+ ; (I - g1): re += sgn*swap(im), im -= sgn*swap(re)
    f_re = uyr * pyp_r - uyi * pyp_i
    f_im = uyr * pyp_i + uyi * pyp_r
    fs_re = uyr * syp_r - uyi * syp_i
    fs_im = uyr * syp_i + uyi * syp_r
    # backward: w = conj(Uy(y-1)) * psi_y- ; (I + g1): opposite signs
    b_re = uymr * pym_r + uymi * pym_i
    b_im = uymr * pym_i - uymi * pym_r
    bs_re = uymr * sym_r + uymi * sym_i
    bs_im = uymr * sym_i - uymi * sym_r
    hop_re += (f_re + sgn * fs_im) + (b_re - sgn * bs_im)
    hop_im += (f_im - sgn * fs_re) + (b_im + sgn * bs_re)

    out_re = pc_r - KAPPA * hop_re                 # (B, W)  real feature slab
    out_im = pc_i - KAPPA * hop_im                 # (B, W)  imag feature slab

    # ---- Linear 1: torch order = [real features ; imag features] ----------
    h = (bn_ref[0:1, :]                                                   # + b1
         + jnp.dot(out_re, w1_ref[0:W, :], preferred_element_type=jnp.float32)
         + jnp.dot(out_im, w1_ref[W:2 * W, :], preferred_element_type=jnp.float32))

    # ---- PReLU (single shared alpha, torch default num_parameters=1) ------
    a = alpha_ref[0, 0]
    h = jnp.where(h >= 0.0, h, a * h)

    # ---- BatchNorm1d, training-mode (biased) batch stats, single pass -----
    inv_b = 1.0 / B
    mean = jnp.sum(h, axis=0, keepdims=True) * inv_b
    msq = jnp.sum(h * h, axis=0, keepdims=True) * inv_b
    var = jnp.maximum(msq - mean * mean, 0.0)
    scale = bn_ref[1:2, :] * lax.rsqrt(var + BN_EPS)               # gamma * rsqrt
    shift = bn_ref[2:3, :] - mean * scale                          # beta - mean*scale
    h = h * scale + shift

    # ---- Linear 2 (lane-dense padded output) + Softplus --------------------
    z = jnp.dot(h, w2_ref[...], preferred_element_type=jnp.float32) + b2_ref[...]
    o_ref[...] = jnp.where(z > SOFTPLUS_THRESHOLD, z, jnp.log1p(jnp.exp(z)))


# ----------------------------------------------------------------------------
# Wrapper-side (cheap, KB-sized) preprocessing + pallas_call
# ----------------------------------------------------------------------------
def _prep_basis(basis_real, basis_imag):
    """(K, L, L, 2) re/im params -> (18, K*L*L*2) f32 field stack.

    Lane layout is lane = k*L*L*2 + torch-flatten(x, y, spin); the spin-swapped
    copies let the kernel apply the Pauli spin mixing with no in-kernel
    shuffle.  Parameter-only preprocessing: in a solver loop this is computed
    once and hoisted.
    """
    br = basis_real.astype(jnp.float32)
    bi = basis_imag.astype(jnp.float32)
    sr, si = br[..., ::-1], bi[..., ::-1]                      # spin-swapped

    rows = [br, bi]
    for shift, axis in ((-1, 1), (1, 1), (-1, 2), (1, 2)):     # x+, x-, y+, y-
        rows += [jnp.roll(br, shift, axis=axis), jnp.roll(bi, shift, axis=axis),
                 jnp.roll(sr, shift, axis=axis), jnp.roll(si, shift, axis=axis)]
    return jnp.stack([r.reshape(-1) for r in rows], axis=0)    # (18, K*L*L*2)


def _prep_links(U1, K):
    """(B, 2, L, L) complex64 gauge links -> (8*B, K*L*L*2) f32.

    Spin-duplicated along lanes and tiled K times so one elementwise pass in
    the kernel covers all basis vectors.
    """
    B, _, L, _ = U1.shape
    ll2 = L * L * 2
    u0, uy = U1[:, 0], U1[:, 1]
    u0m = jnp.roll(u0, 1, axis=1)                              # x - 1
    uym = jnp.roll(uy, 1, axis=2)                              # y - 1

    def dup(a):                                                # (B, L, L) -> (B, ll2)
        return jnp.broadcast_to(a[..., None], (B, L, L, 2)).reshape(B, ll2)

    rows = [dup(jnp.real(u0)), dup(jnp.imag(u0)),
            dup(jnp.real(u0m)), dup(jnp.imag(u0m)),
            dup(jnp.real(uy)), dup(jnp.imag(uy)),
            dup(jnp.real(uym)), dup(jnp.imag(uym))]
    lnk = jnp.stack(rows, axis=0).reshape(8 * B, ll2).astype(jnp.float32)
    return jnp.tile(lnk, (1, K))                               # (8B, K*ll2)


def neural_preconditioner_forward(params, U1):
    """Fused NeuralPreconditioner.forward.  Returns complex64 (B, H2 // 2)."""
    B = U1.shape[0]
    K = params["basis_real"].shape[0]
    H1 = params["w1"].shape[1]
    H2 = params["w2"].shape[1]
    H2p = ((H2 + 127) // 128) * 128                            # lane-dense output

    psi = _prep_basis(params["basis_real"], params["basis_imag"])   # (18, K*LL2)
    lnk = _prep_links(U1, K)                                        # (8B, K*LL2)
    w1 = params["w1"].astype(jnp.float32)                           # (2K*LL2, H1)
    bn = jnp.concatenate([params["b1"], params["gamma"], params["beta"]],
                         axis=0).astype(jnp.float32)                # (3, H1)
    w2p = jnp.pad(params["w2"].astype(jnp.float32), ((0, 0), (0, H2p - H2)))
    b2p = jnp.pad(params["b2"].astype(jnp.float32), ((0, 0), (0, H2p - H2)))
    alpha = params["alpha"].astype(jnp.float32).reshape(1, 1)

    vmem = pl.BlockSpec(memory_space=pltpu.MemorySpace.VMEM)
    smem = pl.BlockSpec(memory_space=pltpu.MemorySpace.SMEM)

    y = pl.pallas_call(
        _fused_kernel,
        out_shape=jax.ShapeDtypeStruct((B, H2p), jnp.float32),
        in_specs=[vmem, vmem, vmem, vmem, smem, vmem, vmem],
        out_specs=vmem,
    )(psi, lnk, w1, bn, alpha, w2p, b2p)

    y = y[:, :H2]
    half = H2 // 2
    return (y[:, :half] + 1j * y[:, half:]).astype(jnp.complex64)


# ----------------------------------------------------------------------------
# Deterministic parameter / input construction + run + self-check
# ----------------------------------------------------------------------------
if __name__ == "__main__":
    key = jax.random.PRNGKey(0)
    ks = jax.random.split(key, 10)

    K = 2                         # basis_size
    L = 8                         # lattice size (fixed by the 8x8x2 basis params)
    B = 2                         # batch of gauge configurations
    F0 = 2 * K * L * L * 2        # = 512, input width to the MLP
    hidden_layers = [F0, 128, 64]

    params = {
        "basis_real": jax.random.normal(ks[0], (K, L, L, 2), jnp.float32),
        "basis_imag": jax.random.normal(ks[1], (K, L, L, 2), jnp.float32),
        "w1": jax.random.normal(ks[2], (hidden_layers[0], hidden_layers[1]),
                                jnp.float32) / jnp.sqrt(hidden_layers[0]),
        "b1": 0.01 * jax.random.normal(ks[3], (1, hidden_layers[1]), jnp.float32),
        "alpha": jnp.full((1, 1), 0.25, jnp.float32),                # PReLU init
        "gamma": jnp.ones((1, hidden_layers[1]), jnp.float32),       # BN weight
        "beta": jnp.zeros((1, hidden_layers[1]), jnp.float32),       # BN bias
        "w2": jax.random.normal(ks[4], (hidden_layers[1], hidden_layers[2]),
                                jnp.float32) / jnp.sqrt(hidden_layers[1]),
        "b2": 0.01 * jax.random.normal(ks[5], (1, hidden_layers[2]), jnp.float32),
    }

    # U(1) gauge links: unit-modulus complex phases, (B, 2, L, L)
    theta = jax.random.uniform(ks[6], (B, 2, L, L), jnp.float32,
                               minval=0.0, maxval=2.0 * jnp.pi)
    U1 = jnp.exp(1j * theta).astype(jnp.complex64)

    out = jax.jit(neural_preconditioner_forward)(params, U1)
    jax.block_until_ready(out)

    assert out.shape == (B, hidden_layers[-1] // 2)
    assert out.dtype == jnp.complex64

    # Numerical check of the fused Pallas kernel against the plain-JAX reference.
    ref = jax.jit(_reference_forward)(params, U1)
    jax.block_until_ready(ref)
    max_err = float(jnp.max(jnp.abs(out - ref)))
    assert max_err < 5e-2, f"kernel/reference mismatch: max |diff| = {max_err}"

    print("KERNEL_OK")
</pallas_src>

<mosaic_0001>
module attributes {stable_mosaic.version = 11 : i64} {
  func.func @_fused_kernel(%arg0: memref<18x256xf32, #tpu.memory_space<vmem>>, %arg1: memref<16x256xf32, #tpu.memory_space<vmem>>, %arg2: memref<512x128xf32, #tpu.memory_space<vmem>>, %arg3: memref<3x128xf32, #tpu.memory_space<vmem>>, %arg4: memref<1x1xf32, #tpu.memory_space<smem>>, %arg5: memref<128x128xf32, #tpu.memory_space<vmem>>, %arg6: memref<1x128xf32, #tpu.memory_space<vmem>>, %arg7: memref<2x128xf32, #tpu.memory_space<vmem>>) attributes {dimension_semantics = [], scalar_prefetch = 0 : i64, scratch_operands = 0 : i64, tpu.core_type = #tpu.core_type<tc>} {
    %0 = tpu.iota {dimensions = array<i32: 1>} : vector<1x256xi32>
    %c2_i32 = arith.constant 2 : i32
    %c0_i32 = arith.constant 0 : i32
    %1 = arith.cmpi eq, %c2_i32, %c0_i32 : i32
    %c1_i32 = arith.constant 1 : i32
    %2 = arith.select %1, %c1_i32, %c2_i32 : i32
    %3 = vector.broadcast %2 : i32 to vector<1x256xi32>
    %4 = arith.remsi %0, %3 : vector<1x256xi32>
    %c0_i32_0 = arith.constant 0 : i32
    %5 = vector.broadcast %c0_i32_0 : i32 to vector<1x256xi32>
    %6 = arith.cmpi ne, %4, %5 : vector<1x256xi32>
    %c0_i32_1 = arith.constant 0 : i32
    %7 = vector.broadcast %c0_i32_1 : i32 to vector<1x256xi32>
    %8 = arith.cmpi slt, %4, %7 : vector<1x256xi32>
    %c0_i32_2 = arith.constant 0 : i32
    %9 = arith.cmpi slt, %2, %c0_i32_2 : i32
    %10 = vector.broadcast %9 : i1 to vector<1x256xi1>
    %11 = vector.broadcast %10 : vector<1x256xi1> to vector<1x256xi1>
    %12 = arith.xori %8, %11 : vector<1x256xi1>
    %13 = arith.andi %12, %6 : vector<1x256xi1>
    %14 = vector.broadcast %2 : i32 to vector<1x256xi32>
    %15 = arith.addi %4, %14 : vector<1x256xi32>
    %16 = arith.select %13, %15, %4 : vector<1x256xi1>, vector<1x256xi32>
    %c0_i32_3 = arith.constant 0 : i32
    %17 = vector.broadcast %c0_i32_3 : i32 to vector<1x256xi32>
    %18 = arith.cmpi eq, %16, %17 : vector<1x256xi32>
    %cst = arith.constant -1.000000e+00 : f32
    %cst_4 = arith.constant 1.000000e+00 : f32
    %19 = vector.broadcast %cst : f32 to vector<1x256xf32>
    %20 = vector.broadcast %cst_4 : f32 to vector<1x256xf32>
    %21 = arith.select %18, %19, %20 : vector<1x256xi1>, vector<1x256xf32>
    %c0 = arith.constant 0 : index
    %c0_5 = arith.constant 0 : index
    %22 = vector.load %arg1[%c0, %c0_5] : memref<16x256xf32, #tpu.memory_space<vmem>>, vector<2x256xf32>
    %c2 = arith.constant 2 : index
    %c0_6 = arith.constant 0 : index
    %23 = vector.load %arg1[%c2, %c0_6] : memref<16x256xf32, #tpu.memory_space<vmem>>, vector<2x256xf32>
    %c4 = arith.constant 4 : index
    %c0_7 = arith.constant 0 : index
    %24 = vector.load %arg1[%c4, %c0_7] : memref<16x256xf32, #tpu.memory_space<vmem>>, vector<2x256xf32>
    %c6 = arith.constant 6 : index
    %c0_8 = arith.constant 0 : index
    %25 = vector.load %arg1[%c6, %c0_8] : memref<16x256xf32, #tpu.memory_space<vmem>>, vector<2x256xf32>
    %c8 = arith.constant 8 : index
    %c0_9 = arith.constant 0 : index
    %26 = vector.load %arg1[%c8, %c0_9] : memref<16x256xf32, #tpu.memory_space<vmem>>, vector<2x256xf32>
    %c10 = arith.constant 10 : index
    %c0_10 = arith.constant 0 : index
    %27 = vector.load %arg1[%c10, %c0_10] : memref<16x256xf32, #tpu.memory_space<vmem>>, vector<2x256xf32>
    %c12 = arith.constant 12 : index
    %c0_11 = arith.constant 0 : index
    %28 = vector.load %arg1[%c12, %c0_11] : memref<16x256xf32, #tpu.memory_space<vmem>>, vector<2x256xf32>
    %c14 = arith.constant 14 : index
    %c0_12 = arith.constant 0 : index
    %29 = vector.load %arg1[%c14, %c0_12] : memref<16x256xf32, #tpu.memory_space<vmem>>, vector<2x256xf32>
    %c0_13 = arith.constant 0 : index
    %c0_14 = arith.constant 0 : index
    %30 = vector.load %arg0[%c0_13, %c0_14] : memref<18x256xf32, #tpu.memory_space<vmem>>, vector<1x256xf32>
    %c1 = arith.constant 1 : index
    %c0_15 = arith.constant 0 : index
    %31 = vector.load %arg0[%c1, %c0_15] : memref<18x256xf32, #tpu.memory_space<vmem>>, vector<1x256xf32>
    %c2_16 = arith.constant 2 : index
    %c0_17 = arith.constant 0 : index
    %32 = vector.load %arg0[%c2_16, %c0_17] : memref<18x256xf32, #tpu.memory_space<vmem>>, vector<1x256xf32>
    %c3 = arith.constant 3 : index
    %c0_18 = arith.constant 0 : index
    %33 = vector.load %arg0[%c3, %c0_18] : memref<18x256xf32, #tpu.memory_space<vmem>>, vector<1x256xf32>
    %c4_19 = arith.constant 4 : index
    %c0_20 = arith.constant 0 : index
    %34 = vector.load %arg0[%c4_19, %c0_20] : memref<18x256xf32, #tpu.memory_space<vmem>>, vector<1x256xf32>
    %c5 = arith.constant 5 : index
    %c0_21 = arith.constant 0 : index
    %35 = vector.load %arg0[%c5, %c0_21] : memref<18x256xf32, #tpu.memory_space<vmem>>, vector<1x256xf32>
    %c6_22 = arith.constant 6 : index
    %c0_23 = arith.constant 0 : index
    %36 = vector.load %arg0[%c6_22, %c0_23] : memref<18x256xf32, #tpu.memory_space<vmem>>, vector<1x256xf32>
    %c7 = arith.constant 7 : index
    %c0_24 = arith.constant 0 : index
    %37 = vector.load %arg0[%c7, %c0_24] : memref<18x256xf32, #tpu.memory_space<vmem>>, vector<1x256xf32>
    %c8_25 = arith.constant 8 : index
    %c0_26 = arith.constant 0 : index
    %38 = vector.load %arg0[%c8_25, %c0_26] : memref<18x256xf32, #tpu.memory_space<vmem>>, vector<1x256xf32>
    %c9 = arith.constant 9 : index
    %c0_27 = arith.constant 0 : index
    %39 = vector.load %arg0[%c9, %c0_27] : memref<18x256xf32, #tpu.memory_space<vmem>>, vector<1x256xf32>
    %c10_28 = arith.constant 10 : index
    %c0_29 = arith.constant 0 : index
    %40 = vector.load %arg0[%c10_28, %c0_29] : memref<18x256xf32, #tpu.memory_space<vmem>>, vector<1x256xf32>
    %c11 = arith.constant 11 : index
    %c0_30 = arith.constant 0 : index
    %41 = vector.load %arg0[%c11, %c0_30] : memref<18x256xf32, #tpu.memory_space<vmem>>, vector<1x256xf32>
    %c12_31 = arith.constant 12 : index
    %c0_32 = arith.constant 0 : index
    %42 = vector.load %arg0[%c12_31, %c0_32] : memref<18x256xf32, #tpu.memory_space<vmem>>, vector<1x256xf32>
    %c13 = arith.constant 13 : index
    %c0_33 = arith.constant 0 : index
    %43 = vector.load %arg0[%c13, %c0_33] : memref<18x256xf32, #tpu.memory_space<vmem>>, vector<1x256xf32>
    %c14_34 = arith.constant 14 : index
    %c0_35 = arith.constant 0 : index
    %44 = vector.load %arg0[%c14_34, %c0_35] : memref<18x256xf32, #tpu.memory_space<vmem>>, vector<1x256xf32>
    %c15 = arith.constant 15 : index
    %c0_36 = arith.constant 0 : index
    %45 = vector.load %arg0[%c15, %c0_36] : memref<18x256xf32, #tpu.memory_space<vmem>>, vector<1x256xf32>
    %c16 = arith.constant 16 : index
    %c0_37 = arith.constant 0 : index
    %46 = vector.load %arg0[%c16, %c0_37] : memref<18x256xf32, #tpu.memory_space<vmem>>, vector<1x256xf32>
    %c17 = arith.constant 17 : index
    %c0_38 = arith.constant 0 : index
    %47 = vector.load %arg0[%c17, %c0_38] : memref<18x256xf32, #tpu.memory_space<vmem>>, vector<1x256xf32>
    %48 = vector.broadcast %32 : vector<1x256xf32> to vector<2x256xf32>
    %49 = arith.mulf %22, %48 : vector<2x256xf32>
    %50 = vector.broadcast %33 : vector<1x256xf32> to vector<2x256xf32>
    %51 = arith.mulf %23, %50 : vector<2x256xf32>
    %52 = arith.subf %49, %51 : vector<2x256xf32>
    %53 = vector.broadcast %33 : vector<1x256xf32> to vector<2x256xf32>
    %54 = arith.mulf %22, %53 : vector<2x256xf32>
    %55 = vector.broadcast %32 : vector<1x256xf32> to vector<2x256xf32>
    %56 = arith.mulf %23, %55 : vector<2x256xf32>
    %57 = arith.addf %54, %56 : vector<2x256xf32>
    %58 = vector.broadcast %34 : vector<1x256xf32> to vector<2x256xf32>
    %59 = arith.mulf %22, %58 : vector<2x256xf32>
    %60 = vector.broadcast %35 : vector<1x256xf32> to vector<2x256xf32>
    %61 = arith.mulf %23, %60 : vector<2x256xf32>
    %62 = arith.subf %59, %61 : vector<2x256xf32>
    %63 = vector.broadcast %35 : vector<1x256xf32> to vector<2x256xf32>
    %64 = arith.mulf %22, %63 : vector<2x256xf32>
    %65 = vector.broadcast %34 : vector<1x256xf32> to vector<2x256xf32>
    %66 = arith.mulf %23, %65 : vector<2x256xf32>
    %67 = arith.addf %64, %66 : vector<2x256xf32>
    %68 = vector.broadcast %36 : vector<1x256xf32> to vector<2x256xf32>
    %69 = arith.mulf %24, %68 : vector<2x256xf32>
    %70 = vector.broadcast %37 : vector<1x256xf32> to vector<2x256xf32>
    %71 = arith.mulf %25, %70 : vector<2x256xf32>
    %72 = arith.addf %69, %71 : vector<2x256xf32>
    %73 = vector.broadcast %37 : vector<1x256xf32> to vector<2x256xf32>
    %74 = arith.mulf %24, %73 : vector<2x256xf32>
    %75 = vector.broadcast %36 : vector<1x256xf32> to vector<2x256xf32>
    %76 = arith.mulf %25, %75 : vector<2x256xf32>
    %77 = arith.subf %74, %76 : vector<2x256xf32>
    %78 = vector.broadcast %38 : vector<1x256xf32> to vector<2x256xf32>
    %79 = arith.mulf %24, %78 : vector<2x256xf32>
    %80 = vector.broadcast %39 : vector<1x256xf32> to vector<2x256xf32>
    %81 = arith.mulf %25, %80 : vector<2x256xf32>
    %82 = arith.addf %79, %81 : vector<2x256xf32>
    %83 = vector.broadcast %39 : vector<1x256xf32> to vector<2x256xf32>
    %84 = arith.mulf %24, %83 : vector<2x256xf32>
    %85 = vector.broadcast %38 : vector<1x256xf32> to vector<2x256xf32>
    %86 = arith.mulf %25, %85 : vector<2x256xf32>
    %87 = arith.subf %84, %86 : vector<2x256xf32>
    %88 = arith.subf %52, %62 : vector<2x256xf32>
    %89 = arith.addf %72, %82 : vector<2x256xf32>
    %90 = arith.addf %88, %89 : vector<2x256xf32>
    %91 = arith.subf %57, %67 : vector<2x256xf32>
    %92 = arith.addf %77, %87 : vector<2x256xf32>
    %93 = arith.addf %91, %92 : vector<2x256xf32>
    %94 = vector.broadcast %40 : vector<1x256xf32> to vector<2x256xf32>
    %95 = arith.mulf %26, %94 : vector<2x256xf32>
    %96 = vector.broadcast %41 : vector<1x256xf32> to vector<2x256xf32>
    %97 = arith.mulf %27, %96 : vector<2x256xf32>
    %98 = arith.subf %95, %97 : vector<2x256xf32>
    %99 = vector.broadcast %41 : vector<1x256xf32> to vector<2x256xf32>
    %100 = arith.mulf %26, %99 : vector<2x256xf32>
    %101 = vector.broadcast %40 : vector<1x256xf32> to vector<2x256xf32>
    %102 = arith.mulf %27, %101 : vector<2x256xf32>
    %103 = arith.addf %100, %102 : vector<2x256xf32>
    %104 = vector.broadcast %42 : vector<1x256xf32> to vector<2x256xf32>
    %105 = arith.mulf %26, %104 : vector<2x256xf32>
    %106 = vector.broadcast %43 : vector<1x256xf32> to vector<2x256xf32>
    %107 = arith.mulf %27, %106 : vector<2x256xf32>
    %108 = arith.subf %105, %107 : vector<2x256xf32>
    %109 = vector.broadcast %43 : vector<1x256xf32> to vector<2x256xf32>
    %110 = arith.mulf %26, %109 : vector<2x256xf32>
    %111 = vector.broadcast %42 : vector<1x256xf32> to vector<2x256xf32>
    %112 = arith.mulf %27, %111 : vector<2x256xf32>
    %113 = arith.addf %110, %112 : vector<2x256xf32>
    %114 = vector.broadcast %44 : vector<1x256xf32> to vector<2x256xf32>
    %115 = arith.mulf %28, %114 : vector<2x256xf32>
    %116 = vector.broadcast %45 : vector<1x256xf32> to vector<2x256xf32>
    %117 = arith.mulf %29, %116 : vector<2x256xf32>
    %118 = arith.addf %115, %117 : vector<2x256xf32>
    %119 = vector.broadcast %45 : vector<1x256xf32> to vector<2x256xf32>
    %120 = arith.mulf %28, %119 : vector<2x256xf32>
    %121 = vector.broadcast %44 : vector<1x256xf32> to vector<2x256xf32>
    %122 = arith.mulf %29, %121 : vector<2x256xf32>
    %123 = arith.subf %120, %122 : vector<2x256xf32>
    %124 = vector.broadcast %46 : vector<1x256xf32> to vector<2x256xf32>
    %125 = arith.mulf %28, %124 : vector<2x256xf32>
    %126 = vector.broadcast %47 : vector<1x256xf32> to vector<2x256xf32>
    %127 = arith.mulf %29, %126 : vector<2x256xf32>
    %128 = arith.addf %125, %127 : vector<2x256xf32>
    %129 = vector.broadcast %47 : vector<1x256xf32> to vector<2x256xf32>
    %130 = arith.mulf %28, %129 : vector<2x256xf32>
    %131 = vector.broadcast %46 : vector<1x256xf32> to vector<2x256xf32>
    %132 = arith.mulf %29, %131 : vector<2x256xf32>
    %133 = arith.subf %130, %132 : vector<2x256xf32>
    %134 = vector.broadcast %21 : vector<1x256xf32> to vector<2x256xf32>
    %135 = arith.mulf %134, %113 : vector<2x256xf32>
    %136 = arith.addf %98, %135 : vector<2x256xf32>
    %137 = vector.broadcast %21 : vector<1x256xf32> to vector<2x256xf32>
    %138 = arith.mulf %137, %133 : vector<2x256xf32>
    %139 = arith.subf %118, %138 : vector<2x256xf32>
    %140 = arith.addf %136, %139 : vector<2x256xf32>
    %141 = arith.addf %90, %140 : vector<2x256xf32>
    %142 = vector.broadcast %21 : vector<1x256xf32> to vector<2x256xf32>
    %143 = arith.mulf %142, %108 : vector<2x256xf32>
    %144 = arith.subf %103, %143 : vector<2x256xf32>
    %145 = vector.broadcast %21 : vector<1x256xf32> to vector<2x256xf32>
    %146 = arith.mulf %145, %128 : vector<2x256xf32>
    %147 = arith.addf %123, %146 : vector<2x256xf32>
    %148 = arith.addf %144, %147 : vector<2x256xf32>
    %149 = arith.addf %93, %148 : vector<2x256xf32>
    %cst_39 = arith.constant 2.760000e-01 : f32
    %150 = vector.broadcast %cst_39 : f32 to vector<2x256xf32>
    %151 = arith.mulf %150, %141 : vector<2x256xf32>
    %152 = vector.broadcast %30 : vector<1x256xf32> to vector<2x256xf32>
    %153 = arith.subf %152, %151 : vector<2x256xf32>
    %cst_40 = arith.constant 2.760000e-01 : f32
    %154 = vector.broadcast %cst_40 : f32 to vector<2x256xf32>
    %155 = arith.mulf %154, %149 : vector<2x256xf32>
    %156 = vector.broadcast %31 : vector<1x256xf32> to vector<2x256xf32>
    %157 = arith.subf %156, %155 : vector<2x256xf32>
    %c0_41 = arith.constant 0 : index
    %c0_42 = arith.constant 0 : index
    %158 = vector.load %arg3[%c0_41, %c0_42] : memref<3x128xf32, #tpu.memory_space<vmem>>, vector<1x128xf32>
    %c0_43 = arith.constant 0 : index
    %c0_44 = arith.constant 0 : index
    %159 = vector.load %arg2[%c0_43, %c0_44] : memref<512x128xf32, #tpu.memory_space<vmem>>, vector<256x128xf32>
    %cst_45 = arith.constant dense<0.000000e+00> : vector<2x128xf32>
    %160 = tpu.matmul %153, %159, %cst_45 {dimension_numbers = #tpu.dot_dimension_numbers<[1], [0], [0], [1], [0, 0, 1, 1], [], []>} : vector<2x256xf32>, vector<256x128xf32>, vector<2x128xf32> -> vector<2x128xf32>
    %161 = vector.broadcast %158 : vector<1x128xf32> to vector<2x128xf32>
    %162 = arith.addf %161, %160 : vector<2x128xf32>
    %c256 = arith.constant 256 : index
    %c0_46 = arith.constant 0 : index
    %163 = vector.load %arg2[%c256, %c0_46] : memref<512x128xf32, #tpu.memory_space<vmem>>, vector<256x128xf32>
    %cst_47 = arith.constant dense<0.000000e+00> : vector<2x128xf32>
    %164 = tpu.matmul %157, %163, %cst_47 {dimension_numbers = #tpu.dot_dimension_numbers<[1], [0], [0], [1], [0, 0, 1, 1], [], []>} : vector<2x256xf32>, vector<256x128xf32>, vector<2x128xf32> -> vector<2x128xf32>
    %165 = arith.addf %162, %164 : vector<2x128xf32>
    %c0_48 = arith.constant 0 : index
    %c0_49 = arith.constant 0 : index
    %166 = memref.load %arg4[%c0_48, %c0_49] : memref<1x1xf32, #tpu.memory_space<smem>>
    %cst_50 = arith.constant 0.000000e+00 : f32
    %167 = vector.broadcast %cst_50 : f32 to vector<2x128xf32>
    %168 = arith.cmpf oge, %165, %167 : vector<2x128xf32>
    %169 = vector.broadcast %166 : f32 to vector<2x128xf32>
    %170 = arith.mulf %169, %165 : vector<2x128xf32>
    %171 = arith.select %168, %165, %170 : vector<2x128xi1>, vector<2x128xf32>
    %cst_51 = arith.constant dense<0.000000e+00> : vector<128xf32>
    %172 = vector.multi_reduction <add>, %171, %cst_51 [0] : vector<2x128xf32> to vector<128xf32>
    %173 = vector.shape_cast %172 : vector<128xf32> to vector<1x128xf32>
    %cst_52 = arith.constant 5.000000e-01 : f32
    %174 = vector.broadcast %cst_52 : f32 to vector<1x128xf32>
    %175 = arith.mulf %173, %174 : vector<1x128xf32>
    %176 = arith.mulf %171, %171 : vector<2x128xf32>
    %cst_53 = arith.constant dense<0.000000e+00> : vector<128xf32>
    %177 = vector.multi_reduction <add>, %176, %cst_53 [0] : vector<2x128xf32> to vector<128xf32>
    %178 = vector.shape_cast %177 : vector<128xf32> to vector<1x128xf32>
    %cst_54 = arith.constant 5.000000e-01 : f32
    %179 = vector.broadcast %cst_54 : f32 to vector<1x128xf32>
    %180 = arith.mulf %178, %179 : vector<1x128xf32>
    %181 = arith.mulf %175, %175 : vector<1x128xf32>
    %182 = arith.subf %180, %181 : vector<1x128xf32>
    %cst_55 = arith.constant 0.000000e+00 : f32
    %183 = vector.broadcast %cst_55 : f32 to vector<1x128xf32>
    %184 = arith.maximumf %182, %183 : vector<1x128xf32>
    %c1_56 = arith.constant 1 : index
    %c0_57 = arith.constant 0 : index
    %185 = vector.load %arg3[%c1_56, %c0_57] : memref<3x128xf32, #tpu.memory_space<vmem>>, vector<1x128xf32>
    %cst_58 = arith.constant 9.99999974E-6 : f32
    %186 = vector.broadcast %cst_58 : f32 to vector<1x128xf32>
    %187 = arith.addf %184, %186 : vector<1x128xf32>
    %188 = math.rsqrt %187 : vector<1x128xf32>
    %189 = arith.mulf %185, %188 : vector<1x128xf32>
    %c2_59 = arith.constant 2 : index
    %c0_60 = arith.constant 0 : index
    %190 = vector.load %arg3[%c2_59, %c0_60] : memref<3x128xf32, #tpu.memory_space<vmem>>, vector<1x128xf32>
    %191 = arith.mulf %175, %189 : vector<1x128xf32>
    %192 = arith.subf %190, %191 : vector<1x128xf32>
    %193 = vector.broadcast %189 : vector<1x128xf32> to vector<2x128xf32>
    %194 = arith.mulf %171, %193 : vector<2x128xf32>
    %195 = vector.broadcast %192 : vector<1x128xf32> to vector<2x128xf32>
    %196 = arith.addf %194, %195 : vector<2x128xf32>
    %c0_61 = arith.constant 0 : index
    %c0_62 = arith.constant 0 : index
    %197 = vector.load %arg5[%c0_61, %c0_62] : memref<128x128xf32, #tpu.memory_space<vmem>>, vector<128x128xf32>
    %cst_63 = arith.constant dense<0.000000e+00> : vector<2x128xf32>
    %198 = tpu.matmul %196, %197, %cst_63 {dimension_numbers = #tpu.dot_dimension_numbers<[1], [0], [0], [1], [0, 0, 1, 1], [], []>} : vector<2x128xf32>, vector<128x128xf32>, vector<2x128xf32> -> vector<2x128xf32>
    %c0_64 = arith.constant 0 : index
    %c0_65 = arith.constant 0 : index
    %199 = vector.load %arg6[%c0_64, %c0_65] : memref<1x128xf32, #tpu.memory_space<vmem>>, vector<1x128xf32>
    %200 = vector.broadcast %199 : vector<1x128xf32> to vector<2x128xf32>
    %201 = arith.addf %198, %200 : vector<2x128xf32>
    %cst_66 = arith.constant 2.000000e+01 : f32
    %202 = vector.broadcast %cst_66 : f32 to vector<2x128xf32>
    %203 = arith.cmpf ogt, %201, %202 : vector<2x128xf32>
    %204 = math.exp %201 : vector<2x128xf32>
    %205 = math.log1p %204 : vector<2x128xf32>
    %206 = arith.select %203, %201, %205 : vector<2x128xi1>, vector<2x128xf32>
    %c0_67 = arith.constant 0 : index
    %c0_68 = arith.constant 0 : index
    %207 = vector.load %arg7[%c0_67, %c0_68] : memref<2x128xf32, #tpu.memory_space<vmem>>, vector<2x128xf32>
    tpu.vector_store %arg7[%c0_67, %c0_68], %206 {strides = array<i32>} : memref<2x128xf32, #tpu.memory_space<vmem>>, vector<2x128xf32>,
    return
  }
}

</mosaic_0001>

<llo_original>
// kernel: reverse.1
$region0: #{reverse.1}
  %s0 = inlined_call_operand.vmem [shape: f32[2,1,8,2], index: 0, kind: input, shape index: {}]
  %s1 = inlined_call_operand.vmem [shape: f32[2,1,8,2], index: 1, kind: output, shape index: {}]
  $region1: #{reverse.1} parent=0
    #allocation0 [shape = 'u8[16384]{0}', space=vmem, size = 0x4000, scoped, tag = 'operand span for operand 0']
    #allocation1 [shape = 'u8[4096]{0}', space=vmem, size = 0x1000, scoped, tag = 'packed  for operand 0']
    #allocation2 [shape = 'u8[8192]{0}', space=vmem, size = 0x2000, scoped, tag = 'operand span for operand 1']
    #allocation3 [shape = 'u8[2048]{0}', space=vmem, size = 0x800, scoped, tag = 'packed  for operand 1']
    %s2 = scalar_lea.vmem [#allocation1], 2
    // Predicated region
    $region2: #{reverse.1} parent=1 // pred_check
      _
    $region3: #{reverse.1} parent=1 // pred_check_branch
      %4 = sbr.rel (0) target = $region5
    $region4: #{reverse.1} parent=1 // pred_region
      // Predicated region
      $region6: #{reverse.1} parent=4 // pred_check
        _
      $region7: #{reverse.1} parent=4 // pred_check_branch
        %6 = sbr.rel target = $region9
      $region8: #{reverse.1} parent=4 // pred_region
        // Predicated region
        $region21: #{reverse.1} parent=8 // pred_check
          _
        $region22: #{reverse.1} parent=8 // pred_check_branch
          %24 = sbr.rel (0) target = $region24
        $region23: #{reverse.1} parent=8 // pred_region
          %s26 = ssub.s32 4, 1
          loop: start=0, step=1, limit=1
          $region25: #{reverse.1} parent=23 // loop_pre_header
            _
          $region26: #{reverse.1} parent=23 // loop_header
            %s28 = sphi 0, %s32
            %p29 = scmp.ge.s32.totalorder %s28, 1
            %s33 = sphi %s0, %s0
            %s34 = sphi %s2, %s2
          $region27: #{reverse.1} parent=23 // loop_header_branch
            %31 = sbr.rel (%p29) target = $region31
          $region28: #{reverse.1} parent=23 // loop_body
            %v35 = vld [vmem:[%s33] sm:%s26]
            %36 = vst [vmem:[%s34] sm:%s26] %v35
            %v37 = vld [vmem:[%s33 + $0x2] sm:%s26]
            %38 = vst [vmem:[%s34 + $0x4] sm:%s26] %v37
          $region29: #{reverse.1} parent=23 // loop_footer
            %s32 = sadd.s32 1, %s28
          $region30: #{reverse.1} parent=23 // loop_footer_branch
            %27 = sbr.rel target = $region26
          $region31: #{reverse.1} parent=23 // loop_exit
            _
        $region24: #{reverse.1} parent=8 // pred_fallthru
          _
      $region9: #{reverse.1} parent=4 // pred_fallthru
        _
      // Predicated region
      $region10: #{reverse.1} parent=4 // pred_check
        _
      $region11: #{reverse.1} parent=4 // pred_check_branch
        %8 = sbr.rel (0) target = $region13
      $region12: #{reverse.1} parent=4 // pred_region
        %s10 = ssub.s32 4, 1
        loop: start=0, step=1, limit=1
        $region14: #{reverse.1} parent=12 // loop_pre_header
          _
        $region15: #{reverse.1} parent=12 // loop_header
          %s12 = sphi 0, %s16
          %p13 = scmp.ge.s32.totalorder %s12, 1
          %s17 = sphi %s0, %s0
          %s18 = sphi %s2, %s2
        $region16: #{reverse.1} parent=12 // loop_header_branch
          %15 = sbr.rel (%p13) target = $region20
        $region17: #{reverse.1} parent=12 // loop_body
          %v19 = vld [vmem:[%s17] sm:%s10]
          %20 = vst [vmem:[%s18] sm:%s10] %v19
          %v21 = vld [vmem:[%s17 + $0x2] sm:%s10]
          %22 = vst [vmem:[%s18 + $0x4] sm:%s10] %v21
        $region18: #{reverse.1} parent=12 // loop_footer
          %s16 = sadd.s32 1, %s12
        $region19: #{reverse.1} parent=12 // loop_footer_branch
          %11 = sbr.rel target = $region15
        $region20: #{reverse.1} parent=12 // loop_exit
          _
      $region13: #{reverse.1} parent=4 // pred_fallthru
        _
    $region5: #{reverse.1} parent=1 // pred_fallthru
      _
    %39 = vnop
    %s41 = sshll.u32 1, 2
    %s42 = ssub.s32 %s41, 1
    %s43 = smul.addr 2, 3
    %s44 = scalar_lea.vmem [#allocation1], %s43
    %v45 = vld [vmem:[%s44] sm:%s42]
    %s46 = scalar_lea.vmem [#allocation0], 24
    %47 = vst [vmem:[%s46] sm:%s42] %v45
    %s48 = smul.addr 2, 2
    %s49 = scalar_lea.vmem [#allocation1], %s48
    %v50 = vld [vmem:[%s49] sm:%s42]
    %s51 = scalar_lea.vmem [#allocation0], 16
    %52 = vst [vmem:[%s51] sm:%s42] %v50
    %s53 = scalar_lea.vmem [#allocation1], 2
    %v54 = vld [vmem:[%s53] sm:%s42]
    %s55 = scalar_lea.vmem [#allocation0], 8
    %56 = vst [vmem:[%s55] sm:%s42] %v54
    %v57 = vld [vmem:[#allocation1] sm:%s42]
    %58 = vst [vmem:[#allocation0] sm:%s42] %v57
    %s59 = scalar_lea.vmem [#allocation0], 7
    %v60 = vld [vmem:[%s59] ss:$-1 sm:$0xff]
    %v61 = vrot.slane %v60, 6
    %62 = vst [vmem:[#allocation2] sm:$0xff] %v61
    %s63 = scalar_lea.vmem [#allocation0], 8
    %s64 = scalar_lea.vmem %s63, 7 [#allocation0]
    %v65 = vld [vmem:[%s64] ss:$-1 sm:$0xff]
    %v66 = vrot.slane %v65, 6
    %v67 = vlaneseq
    %v68 = vshrl.u32 %v67, 7
    %vm69 = vcmp.lt.s32.totalorder %v68, 2
    %70 = vst.msk [vmem:[#allocation2] sm:$0xff] %vm69, %v66
    %s71 = scalar_lea.vmem [#allocation2], 8
    %s72 = scalar_lea.vmem [#allocation0], 16
    %s73 = scalar_lea.vmem %s72, 7 [#allocation0]
    %v74 = vld [vmem:[%s73] ss:$-1 sm:$0xff]
    %v75 = vrot.slane %v74, 6
    %76 = vst [vmem:[%s71] sm:$0xff] %v75
    %s77 = scalar_lea.vmem %s72, 8 [#allocation0]
    %s78 = scalar_lea.vmem %s77, 7 [#allocation0]
    %v79 = vld [vmem:[%s78] ss:$-1 sm:$0xff]
    %v80 = vrot.slane %v79, 6
    %v81 = vlaneseq
    %v82 = vshrl.u32 %v81, 7
    %vm83 = vcmp.lt.s32.totalorder %v82, 2
    %84 = vst.msk [vmem:[%s71] sm:$0xff] %vm83, %v80
    %s86 = sshll.u32 1, 2
    %s87 = ssub.s32 %s86, 1
    %v89 = vld [vmem:[#allocation2] sm:%s87]
    %s90 = sshll.u32 1, 2
    %s91 = ssub.s32 %s90, 1
    %92 = vst [vmem:[#allocation3] sm:%s91] %v89
    %s93 = scalar_lea.vmem [#allocation2], 8
    %v94 = vld [vmem:[%s93] sm:%s87]
    %s95 = sshll.u32 1, 2
    %s96 = ssub.s32 %s95, 1
    %s97 = scalar_lea.vmem [#allocation3], 2
    %98 = vst [vmem:[%s97] sm:%s96] %v94
    // Predicated region
    $region32: #{reverse.1} parent=1 // pred_check
      _
    $region33: #{reverse.1} parent=1 // pred_check_branch
      %100 = sbr.rel (0) target = $region35
    $region34: #{reverse.1} parent=1 // pred_region
      // Predicated region
      $region36: #{reverse.1} parent=34 // pred_check
        _
      $region37: #{reverse.1} parent=34 // pred_check_branch
        %102 = sbr.rel target = $region39
      $region38: #{reverse.1} parent=34 // pred_region
        // Predicated region
        $region51: #{reverse.1} parent=38 // pred_check
          _
        $region52: #{reverse.1} parent=38 // pred_check_branch
          %120 = sbr.rel (0) target = $region54
        $region53: #{reverse.1} parent=38 // pred_region
          %s122 = ssub.s32 4, 1
          loop: start=0, step=1, limit=1
          $region55: #{reverse.1} parent=53 // loop_pre_header
            _
          $region56: #{reverse.1} parent=53 // loop_header
            %s124 = sphi 0, %s128
            %p125 = scmp.ge.s32.totalorder %s124, 1
            %s129 = sphi [#allocation3], [#allocation3]
            %s130 = sphi %s1, %s1
          $region57: #{reverse.1} parent=53 // loop_header_branch
            %127 = sbr.rel (%p125) target = $region61
          $region58: #{reverse.1} parent=53 // loop_body
            %v131 = vld [vmem:[%s129] sm:%s122]
            %132 = vst [vmem:[%s130] sm:%s122] %v131
            %v133 = vld [vmem:[%s129 + $0x2] sm:%s122]
            %134 = vst [vmem:[%s130 + $0x2] sm:%s122] %v133
          $region59: #{reverse.1} parent=53 // loop_footer
            %s128 = sadd.s32 1, %s124
          $region60: #{reverse.1} parent=53 // loop_footer_branch
            %123 = sbr.rel target = $region56
          $region61: #{reverse.1} parent=53 // loop_exit
            _
        $region54: #{reverse.1} parent=38 // pred_fallthru
          _
      $region39: #{reverse.1} parent=34 // pred_fallthru
        _
      // Predicated region
      $region40: #{reverse.1} parent=34 // pred_check
        _
      $region41: #{reverse.1} parent=34 // pred_check_branch
        %104 = sbr.rel (0) target = $region43
      $region42: #{reverse.1} parent=34 // pred_region
        %s106 = ssub.s32 4, 1
        loop: start=0, step=1, limit=1
        $region44: #{reverse.1} parent=42 // loop_pre_header
          _
        $region45: #{reverse.1} parent=42 // loop_header
          %s108 = sphi 0, %s112
          %p109 = scmp.ge.s32.totalorder %s108, 1
          %s113 = sphi [#allocation3], [#allocation3]
          %s114 = sphi %s1, %s1
        $region46: #{reverse.1} parent=42 // loop_header_branch
          %111 = sbr.rel (%p109) target = $region50
        $region47: #{reverse.1} parent=42 // loop_body
          %v115 = vld [vmem:[%s113] sm:%s106]
          %116 = vst [vmem:[%s114] sm:%s106] %v115
          %v117 = vld [vmem:[%s113 + $0x2] sm:%s106]
          %118 = vst [vmem:[%s114 + $0x2] sm:%s106] %v117
        $region48: #{reverse.1} parent=42 // loop_footer
          %s112 = sadd.s32 1, %s108
        $region49: #{reverse.1} parent=42 // loop_footer_branch
          %107 = sbr.rel target = $region45
        $region50: #{reverse.1} parent=42 // loop_exit
          _
      $region43: #{reverse.1} parent=34 // pred_fallthru
        _
    $region35: #{reverse.1} parent=1 // pred_fallthru
      _
    %135 = vnop

// kernel: reverse
$region0: #{reverse}
  %s0 = inlined_call_operand.vmem [shape: f32[2,7,8,2], index: 0, kind: input, shape index: {}]
  %s1 = inlined_call_operand.vmem [shape: f32[2,7,8,2], index: 1, kind: output, shape index: {}]
  $region1: #{reverse} parent=0
    #allocation0 [shape = 'u8[114688]{0}', space=vmem, size = 0x1c000, scoped, tag = 'operand span for operand 0']
    #allocation1 [shape = 'u8[28672]{0}', space=vmem, size = 0x7000, scoped, tag = 'packed  for operand 0']
    #allocation2 [shape = 'u8[57344]{0}', space=vmem, size = 0xe000, scoped, tag = 'operand span for operand 1']
    #allocation3 [shape = 'u8[14336]{0}', space=vmem, size = 0x3800, scoped, tag = 'packed  for operand 1']
    %s2 = scalar_lea.vmem [#allocation1], 2
    // Predicated region
    $region2: #{reverse} parent=1 // pred_check
      _
    $region3: #{reverse} parent=1 // pred_check_branch
      %4 = sbr.rel (0) target = $region5
    $region4: #{reverse} parent=1 // pred_region
      // Predicated region
      $region6: #{reverse} parent=4 // pred_check
        _
      $region7: #{reverse} parent=4 // pred_check_branch
        %6 = sbr.rel target = $region9
      $region8: #{reverse} parent=4 // pred_region
        // Predicated region
        $region21: #{reverse} parent=8 // pred_check
          _
        $region22: #{reverse} parent=8 // pred_check_branch
          %48 = sbr.rel (0) target = $region24
        $region23: #{reverse} parent=8 // pred_region
          loop: start=0, step=1, limit=1
          $region25: #{reverse} parent=23 // loop_pre_header
            _
          $region26: #{reverse} parent=23 // loop_header
            %s50 = sphi 0, %s54
            %p51 = scmp.ge.s32.totalorder %s50, 1
            %s55 = sphi %s0, %s0
            %s56 = sphi %s2, %s2
          $region27: #{reverse} parent=23 // loop_header_branch
            %53 = sbr.rel (%p51) target = $region31
          $region28: #{reverse} parent=23 // loop_body
            _
          $region29: #{reverse} parent=23 // loop_footer
            %s54 = sadd.s32 1, %s50
          $region30: #{reverse} parent=23 // loop_footer_branch
            %49 = sbr.rel target = $region26
          $region31: #{reverse} parent=23 // loop_exit
            _
          %s58 = ssub.s32 4, 1
          loop: start=0, step=1, limit=1
          $region32: #{reverse} parent=23 // loop_pre_header
            _
          $region33: #{reverse} parent=23 // loop_header
            %s60 = sphi 0, %s64
            %p61 = scmp.ge.s32.totalorder %s60, 1
            %s65 = sphi %s0, %s0
            %s66 = sphi %s2, %s2
          $region34: #{reverse} parent=23 // loop_header_branch
            %63 = sbr.rel (%p61) target = $region38
          $region35: #{reverse} parent=23 // loop_body
            %v67 = vld [vmem:[%s65] sm:%s58]
            %68 = vst [vmem:[%s66] sm:%s58] %v67
            %v69 = vld [vmem:[%s65 + $0x2] sm:%s58]
            %70 = vst [vmem:[%s66 + $0x4] sm:%s58] %v69
            %v71 = vld [vmem:[%s65 + $0x4] sm:%s58]
            %72 = vst [vmem:[%s66 + $0x8] sm:%s58] %v71
            %v73 = vld [vmem:[%s65 + $0x6] sm:%s58]
            %74 = vst [vmem:[%s66 + $0xc] sm:%s58] %v73
            %v75 = vld [vmem:[%s65 + $0x8] sm:%s58]
            %76 = vst [vmem:[%s66 + $0x10] sm:%s58] %v75
            %v77 = vld [vmem:[%s65 + $0xa] sm:%s58]
            %78 = vst [vmem:[%s66 + $0x14] sm:%s58] %v77
            %v79 = vld [vmem:[%s65 + $0xc] sm:%s58]
            %80 = vst [vmem:[%s66 + $0x18] sm:%s58] %v79
            %v81 = vld [vmem:[%s65 + $0xe] sm:%s58]
            %82 = vst [vmem:[%s66 + $0x1c] sm:%s58] %v81
            %v83 = vld [vmem:[%s65 + $0x10] sm:%s58]
            %84 = vst [vmem:[%s66 + $0x20] sm:%s58] %v83
            %v85 = vld [vmem:[%s65 + $0x12] sm:%s58]
            %86 = vst [vmem:[%s66 + $0x24] sm:%s58] %v85
            %v87 = vld [vmem:[%s65 + $0x14] sm:%s58]
            %88 = vst [vmem:[%s66 + $0x28] sm:%s58] %v87
            %v89 = vld [vmem:[%s65 + $0x16] sm:%s58]
            %90 = vst [vmem:[%s66 + $0x2c] sm:%s58] %v89
            %v91 = vld [vmem:[%s65 + $0x18] sm:%s58]
            %92 = vst [vmem:[%s66 + $0x30] sm:%s58] %v91
            %v93 = vld [vmem:[%s65 + $0x1a] sm:%s58]
            %94 = vst [vmem:[%s66 + $0x34] sm:%s58] %v93
          $region36: #{reverse} parent=23 // loop_footer
            %s64 = sadd.s32 1, %s60
          $region37: #{reverse} parent=23 // loop_footer_branch
            %59 = sbr.rel target = $region33
          $region38: #{reverse} parent=23 // loop_exit
            _
        $region24: #{reverse} parent=8 // pred_fallthru
          _
      $region9: #{reverse} parent=4 // pred_fallthru
        _
      // Predicated region
      $region10: #{reverse} parent=4 // pred_check
        _
      $region11: #{reverse} parent=4 // pred_check_branch
        %8 = sbr.rel (0) target = $region13
      $region12: #{reverse} parent=4 // pred_region
        %s10 = ssub.s32 4, 1
        loop: start=0, step=1, limit=1
        $region14: #{reverse} parent=12 // loop_pre_header
          _
        $region15: #{reverse} parent=12 // loop_header
          %s12 = sphi 0, %s16
          %p13 = scmp.ge.s32.totalorder %s12, 1
          %s17 = sphi %s0, %s0
          %s18 = sphi %s2, %s2
        $region16: #{reverse} parent=12 // loop_header_branch
          %15 = sbr.rel (%p13) target = $region20
        $region17: #{reverse} parent=12 // loop_body
          %v19 = vld [vmem:[%s17] sm:%s10]
          %20 = vst [vmem:[%s18] sm:%s10] %v19
          %v21 = vld [vmem:[%s17 + $0x2] sm:%s10]
          %22 = vst [vmem:[%s18 + $0x4] sm:%s10] %v21
          %v23 = vld [vmem:[%s17 + $0x4] sm:%s10]
          %24 = vst [vmem:[%s18 + $0x8] sm:%s10] %v23
          %v25 = vld [vmem:[%s17 + $0x6] sm:%s10]
          %26 = vst [vmem:[%s18 + $0xc] sm:%s10] %v25
          %v27 = vld [vmem:[%s17 + $0x8] sm:%s10]
          %28 = vst [vmem:[%s18 + $0x10] sm:%s10] %v27
          %v29 = vld [vmem:[%s17 + $0xa] sm:%s10]
          %30 = vst [vmem:[%s18 + $0x14] sm:%s10] %v29
          %v31 = vld [vmem:[%s17 + $0xc] sm:%s10]
          %32 = vst [vmem:[%s18 + $0x18] sm:%s10] %v31
          %v33 = vld [vmem:[%s17 + $0xe] sm:%s10]
          %34 = vst [vmem:[%s18 + $0x1c] sm:%s10] %v33
          %v35 = vld [vmem:[%s17 + $0x10] sm:%s10]
          %36 = vst [vmem:[%s18 + $0x20] sm:%s10] %v35
          %v37 = vld [vmem:[%s17 + $0x12] sm:%s10]
          %38 = vst [vmem:[%s18 + $0x24] sm:%s10] %v37
          %v39 = vld [vmem:[%s17 + $0x14] sm:%s10]
          %40 = vst [vmem:[%s18 + $0x28] sm:%s10] %v39
          %v41 = vld [vmem:[%s17 + $0x16] sm:%s10]
          %42 = vst [vmem:[%s18 + $0x2c] sm:%s10] %v41
          %v43 = vld [vmem:[%s17 + $0x18] sm:%s10]
          %44 = vst [vmem:[%s18 + $0x30] sm:%s10] %v43
          %v45 = vld [vmem:[%s17 + $0x1a] sm:%s10]
          %46 = vst [vmem:[%s18 + $0x34] sm:%s10] %v45
        $region18: #{reverse} parent=12 // loop_footer
          %s16 = sadd.s32 1, %s12
        $region19: #{reverse} parent=12 // loop_footer_branch
          %11 = sbr.rel target = $region15
        $region20: #{reverse} parent=12 // loop_exit
          _
      $region13: #{reverse} parent=4 // pred_fallthru
        _
    $region5: #{reverse} parent=1 // pred_fallthru
      _
    %95 = vnop
    %s97 = sshll.u32 1, 2
    %s98 = ssub.s32 %s97, 1
    %s99 = smul.addr 2, 27
    %s100 = scalar_lea.vmem [#allocation1], %s99
    %v101 = vld [vmem:[%s100] sm:%s98]
    %s102 = scalar_lea.vmem [#allocation0], 216
    %103 = vst [vmem:[%s102] sm:%s98] %v101
    %s104 = smul.addr 2, 26
    %s105 = scalar_lea.vmem [#allocation1], %s104
    %v106 = vld [vmem:[%s105] sm:%s98]
    %s107 = scalar_lea.vmem [#allocation0], 208
    %108 = vst [vmem:[%s107] sm:%s98] %v106
    %s109 = smul.addr 2, 25
    %s110 = scalar_lea.vmem [#allocation1], %s109
    %v111 = vld [vmem:[%s110] sm:%s98]
    %s112 = scalar_lea.vmem [#allocation0], 200
    %113 = vst [vmem:[%s112] sm:%s98] %v111
    %s114 = smul.addr 2, 24
    %s115 = scalar_lea.vmem [#allocation1], %s114
    %v116 = vld [vmem:[%s115] sm:%s98]
    %s117 = scalar_lea.vmem [#allocation0], 192
    %118 = vst [vmem:[%s117] sm:%s98] %v116
    %s119 = smul.addr 2, 23
    %s120 = scalar_lea.vmem [#allocation1], %s119
    %v121 = vld [vmem:[%s120] sm:%s98]
    %s122 = scalar_lea.vmem [#allocation0], 184
    %123 = vst [vmem:[%s122] sm:%s98] %v121
    %s124 = smul.addr 2, 22
    %s125 = scalar_lea.vmem [#allocation1], %s124
    %v126 = vld [vmem:[%s125] sm:%s98]
    %s127 = scalar_lea.vmem [#allocation0], 176
    %128 = vst [vmem:[%s127] sm:%s98] %v126
    %s129 = smul.addr 2, 21
    %s130 = scalar_lea.vmem [#allocation1], %s129
    %v131 = vld [vmem:[%s130] sm:%s98]
    %s132 = scalar_lea.vmem [#allocation0], 168
    %133 = vst [vmem:[%s132] sm:%s98] %v131
    %s134 = smul.addr 2, 20
    %s135 = scalar_lea.vmem [#allocation1], %s134
    %v136 = vld [vmem:[%s135] sm:%s98]
    %s137 = scalar_lea.vmem [#allocation0], 160
    %138 = vst [vmem:[%s137] sm:%s98] %v136
    %s139 = smul.addr 2, 19
    %s140 = scalar_lea.vmem [#allocation1], %s139
    %v141 = vld [vmem:[%s140] sm:%s98]
    %s142 = scalar_lea.vmem [#allocation0], 152
    %143 = vst [vmem:[%s142] sm:%s98] %v141
    %s144 = smul.addr 2, 18
    %s145 = scalar_lea.vmem [#allocation1], %s144
    %v146 = vld [vmem:[%s145] sm:%s98]
    %s147 = scalar_lea.vmem [#allocation0], 144
    %148 = vst [vmem:[%s147] sm:%s98] %v146
    %s149 = smul.addr 2, 17
    %s150 = scalar_lea.vmem [#allocation1], %s149
    %v151 = vld [vmem:[%s150] sm:%s98]
    %s152 = scalar_lea.vmem [#allocation0], 136
    %153 = vst [vmem:[%s152] sm:%s98] %v151
    %s154 = smul.addr 2, 16
    %s155 = scalar_lea.vmem [#allocation1], %s154
    %v156 = vld [vmem:[%s155] sm:%s98]
    %s157 = scalar_lea.vmem [#allocation0], 128
    %158 = vst [vmem:[%s157] sm:%s98] %v156
    %s159 = smul.addr 2, 15
    %s160 = scalar_lea.vmem [#allocation1], %s159
    %v161 = vld [vmem:[%s160] sm:%s98]
    %s162 = scalar_lea.vmem [#allocation0], 120
    %163 = vst [vmem:[%s162] sm:%s98] %v161
    %s164 = smul.addr 2, 14
    %s165 = scalar_lea.vmem [#allocation1], %s164
    %v166 = vld [vmem:[%s165] sm:%s98]
    %s167 = scalar_lea.vmem [#allocation0], 112
    %168 = vst [vmem:[%s167] sm:%s98] %v166
    %s169 = smul.addr 2, 13
    %s170 = scalar_lea.vmem [#allocation1], %s169
    %v171 = vld [vmem:[%s170] sm:%s98]
    %s172 = scalar_lea.vmem [#allocation0], 104
    %173 = vst [vmem:[%s172] sm:%s98] %v171
    %s174 = smul.addr 2, 12
    %s175 = scalar_lea.vmem [#allocation1], %s174
    %v176 = vld [vmem:[%s175] sm:%s98]
    %s177 = scalar_lea.vmem [#allocation0], 96
    %178 = vst [vmem:[%s177] sm:%s98] %v176
    %s179 = smul.addr 2, 11
    %s180 = scalar_lea.vmem [#allocation1], %s179
    %v181 = vld [vmem:[%s180] sm:%s98]
    %s182 = scalar_lea.vmem [#allocation0], 88
    %183 = vst [vmem:[%s182] sm:%s98] %v181
    %s184 = smul.addr 2, 10
    %s185 = scalar_lea.vmem [#allocation1], %s184
    %v186 = vld [vmem:[%s185] sm:%s98]
    %s187 = scalar_lea.vmem [#allocation0], 80
    %188 = vst [vmem:[%s187] sm:%s98] %v186
    %s189 = smul.addr 2, 9
    %s190 = scalar_lea.vmem [#allocation1], %s189
    %v191 = vld [vmem:[%s190] sm:%s98]
    %s192 = scalar_lea.vmem [#allocation0], 72
    %193 = vst [vmem:[%s192] sm:%s98] %v191
    %s194 = smul.addr 2, 8
    %s195 = scalar_lea.vmem [#allocation1], %s194
    %v196 = vld [vmem:[%s195] sm:%s98]
    %s197 = scalar_lea.vmem [#allocation0], 64
    %198 = vst [vmem:[%s197] sm:%s98] %v196
    %s199 = smul.addr 2, 7
    %s200 = scalar_lea.vmem [#allocation1], %s199
    %v201 = vld [vmem:[%s200] sm:%s98]
    %s202 = scalar_lea.vmem [#allocation0], 56
    %203 = vst [vmem:[%s202] sm:%s98] %v201
    %s204 = smul.addr 2, 6
    %s205 = scalar_lea.vmem [#allocation1], %s204
    %v206 = vld [vmem:[%s205] sm:%s98]
    %s207 = scalar_lea.vmem [#allocation0], 48
    %208 = vst [vmem:[%s207] sm:%s98] %v206
    %s209 = smul.addr 2, 5
    %s210 = scalar_lea.vmem [#allocation1], %s209
    %v211 = vld [vmem:[%s210] sm:%s98]
    %s212 = scalar_lea.vmem [#allocation0], 40
    %213 = vst [vmem:[%s212] sm:%s98] %v211
    %s214 = smul.addr 2, 4
    %s215 = scalar_lea.vmem [#allocation1], %s214
    %v216 = vld [vmem:[%s215] sm:%s98]
    %s217 = scalar_lea.vmem [#allocation0], 32
    %218 = vst [vmem:[%s217] sm:%s98] %v216
    %s219 = smul.addr 2, 3
    %s220 = scalar_lea.vmem [#allocation1], %s219
    %v221 = vld [vmem:[%s220] sm:%s98]
    %s222 = scalar_lea.vmem [#allocation0], 24
    %223 = vst [vmem:[%s222] sm:%s98] %v221
    %s224 = smul.addr 2, 2
    %s225 = scalar_lea.vmem [#allocation1], %s224
    %v226 = vld [vmem:[%s225] sm:%s98]
    %s227 = scalar_lea.vmem [#allocation0], 16
    %228 = vst [vmem:[%s227] sm:%s98] %v226
    %s229 = scalar_lea.vmem [#allocation1], 2
    %v230 = vld [vmem:[%s229] sm:%s98]
    %s231 = scalar_lea.vmem [#allocation0], 8
    %232 = vst [vmem:[%s231] sm:%s98] %v230
    %v233 = vld [vmem:[#allocation1] sm:%s98]
    %234 = vst [vmem:[#allocation0] sm:%s98] %v233
    %s235 = scalar_lea.vmem [#allocation0], 7
    %v236 = vld [vmem:[%s235] ss:$-1 sm:$0xff]
    %v237 = vrot.slane %v236, 6
    %238 = vst [vmem:[#allocation2] sm:$0xff] %v237
    %s239 = scalar_lea.vmem [#allocation0], 8
    %s240 = scalar_lea.vmem %s239, 7 [#allocation0]
    %v241 = vld [vmem:[%s240] ss:$-1 sm:$0xff]
    %v242 = vrot.slane %v241, 6
    %v243 = vlaneseq
    %v244 = vshrl.u32 %v243, 7
    %vm245 = vcmp.lt.s32.totalorder %v244, 2
    %246 = vst.msk [vmem:[#allocation2] sm:$0xff] %vm245, %v242
    %s247 = scalar_lea.vmem [#allocation2], 8
    %s248 = scalar_lea.vmem [#allocation0], 16
    %s249 = scalar_lea.vmem %s248, 7 [#allocation0]
    %v250 = vld [vmem:[%s249] ss:$-1 sm:$0xff]
    %v251 = vrot.slane %v250, 6
    %252 = vst [vmem:[%s247] sm:$0xff] %v251
    %s253 = scalar_lea.vmem %s248, 8 [#allocation0]
    %s254 = scalar_lea.vmem %s253, 7 [#allocation0]
    %v255 = vld [vmem:[%s254] ss:$-1 sm:$0xff]
    %v256 = vrot.slane %v255, 6
    %v257 = vlaneseq
    %v258 = vshrl.u32 %v257, 7
    %vm259 = vcmp.lt.s32.totalorder %v258, 2
    %260 = vst.msk [vmem:[%s247] sm:$0xff] %vm259, %v256
    %s261 = scalar_lea.vmem [#allocation2], 16
    %s262 = scalar_lea.vmem [#allocation0], 32
    %s263 = scalar_lea.vmem %s262, 7 [#allocation0]
    %v264 = vld [vmem:[%s263] ss:$-1 sm:$0xff]
    %v265 = vrot.slane %v264, 6
    %266 = vst [vmem:[%s261] sm:$0xff] %v265
    %s267 = scalar_lea.vmem %s262, 8 [#allocation0]
    %s268 = scalar_lea.vmem %s267, 7 [#allocation0]
    %v269 = vld [vmem:[%s268] ss:$-1 sm:$0xff]
    %v270 = vrot.slane %v269, 6
    %v271 = vlaneseq
    %v272 = vshrl.u32 %v271, 7
    %vm273 = vcmp.lt.s32.totalorder %v272, 2
    %274 = vst.msk [vmem:[%s261] sm:$0xff] %vm273, %v270
    %s275 = scalar_lea.vmem [#allocation2], 24
    %s276 = scalar_lea.vmem [#allocation0], 48
    %s277 = scalar_lea.vmem %s276, 7 [#allocation0]
    %v278 = vld [vmem:[%s277] ss:$-1 sm:$0xff]
    %v279 = vrot.slane %v278, 6
    %280 = vst [vmem:[%s275] sm:$0xff] %v279
    %s281 = scalar_lea.vmem %s276, 8 [#allocation0]
    %s282 = scalar_lea.vmem %s281, 7 [#allocation0]
    %v283 = vld [vmem:[%s282] ss:$-1 sm:$0xff]
    %v284 = vrot.slane %v283, 6
    %v285 = vlaneseq
    %v286 = vshrl.u32 %v285, 7
    %vm287 = vcmp.lt.s32.totalorder %v286, 2
    %288 = vst.msk [vmem:[%s275] sm:$0xff] %vm287, %v284
    %s289 = scalar_lea.vmem [#allocation2], 32
    %s290 = scalar_lea.vmem [#allocation0], 64
    %s291 = scalar_lea.vmem %s290, 7 [#allocation0]
    %v292 = vld [vmem:[%s291] ss:$-1 sm:$0xff]
    %v293 = vrot.slane %v292, 6
    %294 = vst [vmem:[%s289] sm:$0xff] %v293
    %s295 = scalar_lea.vmem %s290, 8 [#allocation0]
    %s296 = scalar_lea.vmem %s295, 7 [#allocation0]
    %v297 = vld [vmem:[%s296] ss:$-1 sm:$0xff]
    %v298 = vrot.slane %v297, 6
    %v299 = vlaneseq
    %v300 = vshrl.u32 %v299, 7
    %vm301 = vcmp.lt.s32.totalorder %v300, 2
    %302 = vst.msk [vmem:[%s289] sm:$0xff] %vm301, %v298
    %s303 = scalar_lea.vmem [#allocation2], 40
    %s304 = scalar_lea.vmem [#allocation0], 80
    %s305 = scalar_lea.vmem %s304, 7 [#allocation0]
    %v306 = vld [vmem:[%s305] ss:$-1 sm:$0xff]
    %v307 = vrot.slane %v306, 6
    %308 = vst [vmem:[%s303] sm:$0xff] %v307
    %s309 = scalar_lea.vmem %s304, 8 [#allocation0]
    %s310 = scalar_lea.vmem %s309, 7 [#allocation0]
    %v311 = vld [vmem:[%s310] ss:$-1 sm:$0xff]
    %v312 = vrot.slane %v311, 6
    %v313 = vlaneseq
    %v314 = vshrl.u32 %v313, 7
    %vm315 = vcmp.lt.s32.totalorder %v314, 2
    %316 = vst.msk [vmem:[%s303] sm:$0xff] %vm315, %v312
    %s317 = scalar_lea.vmem [#allocation2], 48
    %s318 = scalar_lea.vmem [#allocation0], 96
    %s319 = scalar_lea.vmem %s318, 7 [#allocation0]
    %v320 = vld [vmem:[%s319] ss:$-1 sm:$0xff]
    %v321 = vrot.slane %v320, 6
    %322 = vst [vmem:[%s317] sm:$0xff] %v321
    %s323 = scalar_lea.vmem %s318, 8 [#allocation0]
    %s324 = scalar_lea.vmem %s323, 7 [#allocation0]
    %v325 = vld [vmem:[%s324] ss:$-1 sm:$0xff]
    %v326 = vrot.slane %v325, 6
    %v327 = vlaneseq
    %v328 = vshrl.u32 %v327, 7
    %vm329 = vcmp.lt.s32.totalorder %v328, 2
    %330 = vst.msk [vmem:[%s317] sm:$0xff] %vm329, %v326
    %s331 = scalar_lea.vmem [#allocation2], 56
    %s332 = scalar_lea.vmem [#allocation0], 112
    %s333 = scalar_lea.vmem %s332, 7 [#allocation0]
    %v334 = vld [vmem:[%s333] ss:$-1 sm:$0xff]
    %v335 = vrot.slane %v334, 6
    %336 = vst [vmem:[%s331] sm:$0xff] %v335
    %s337 = scalar_lea.vmem %s332, 8 [#allocation0]
    %s338 = scalar_lea.vmem %s337, 7 [#allocation0]
    %v339 = vld [vmem:[%s338] ss:$-1 sm:$0xff]
    %v340 = vrot.slane %v339, 6
    %v341 = vlaneseq
    %v342 = vshrl.u32 %v341, 7
    %vm343 = vcmp.lt.s32.totalorder %v342, 2
    %344 = vst.msk [vmem:[%s331] sm:$0xff] %vm343, %v340
    %s345 = scalar_lea.vmem [#allocation2], 64
    %s346 = scalar_lea.vmem [#allocation0], 128
    %s347 = scalar_lea.vmem %s346, 7 [#allocation0]
    %v348 = vld [vmem:[%s347] ss:$-1 sm:$0xff]
    %v349 = vrot.slane %v348, 6
    %350 = vst [vmem:[%s345] sm:$0xff] %v349
    %s351 = scalar_lea.vmem %s346, 8 [#allocation0]
    %s352 = scalar_lea.vmem %s351, 7 [#allocation0]
    %v353 = vld [vmem:[%s352] ss:$-1 sm:$0xff]
    %v354 = vrot.slane %v353, 6
    %v355 = vlaneseq
    %v356 = vshrl.u32 %v355, 7
    %vm357 = vcmp.lt.s32.totalorder %v356, 2
    %358 = vst.msk [vmem:[%s345] sm:$0xff] %vm357, %v354
    %s359 = scalar_lea.vmem [#allocation2], 72
    %s360 = scalar_lea.vmem [#allocation0], 144
    %s361 = scalar_lea.vmem %s360, 7 [#allocation0]
    %v362 = vld [vmem:[%s361] ss:$-1 sm:$0xff]
    %v363 = vrot.slane %v362, 6
    %364 = vst [vmem:[%s359] sm:$0xff] %v363
    %s365 = scalar_lea.vmem %s360, 8 [#allocation0]
    %s366 = scalar_lea.vmem %s365, 7 [#allocation0]
    %v367 = vld [vmem:[%s366] ss:$-1 sm:$0xff]
    %v368 = vrot.slane %v367, 6
    %v369 = vlaneseq
    %v370 = vshrl.u32 %v369, 7
    %vm371 = vcmp.lt.s32.totalorder %v370, 2
    %372 = vst.msk [vmem:[%s359] sm:$0xff] %vm371, %v368
    %s373 = scalar_lea.vmem [#allocation2], 80
    %s374 = scalar_lea.vmem [#allocation0], 160
    %s375 = scalar_lea.vmem %s374, 7 [#allocation0]
    %v376 = vld [vmem:[%s375] ss:$-1 sm:$0xff]
    %v377 = vrot.slane %v376, 6
    %378 = vst [vmem:[%s373] sm:$0xff] %v377
    %s379 = scalar_lea.vmem %s374, 8 [#allocation0]
    %s380 = scalar_lea.vmem %s379, 7 [#allocation0]
    %v381 = vld [vmem:[%s380] ss:$-1 sm:$0xff]
    %v382 = vrot.slane %v381, 6
    %v383 = vlaneseq
    %v384 = vshrl.u32 %v383, 7
    %vm385 = vcmp.lt.s32.totalorder %v384, 2
    %386 = vst.msk [vmem:[%s373] sm:$0xff] %vm385, %v382
    %s387 = scalar_lea.vmem [#allocation2], 88
    %s388 = scalar_lea.vmem [#allocation0], 176
    %s389 = scalar_lea.vmem %s388, 7 [#allocation0]
    %v390 = vld [vmem:[%s389] ss:$-1 sm:$0xff]
    %v391 = vrot.slane %v390, 6
    %392 = vst [vmem:[%s387] sm:$0xff] %v391
    %s393 = scalar_lea.vmem %s388, 8 [#allocation0]
    %s394 = scalar_lea.vmem %s393, 7 [#allocation0]
    %v395 = vld [vmem:[%s394] ss:$-1 sm:$0xff]
    %v396 = vrot.slane %v395, 6
    %v397 = vlaneseq
    %v398 = vshrl.u32 %v397, 7
    %vm399 = vcmp.lt.s32.totalorder %v398, 2
    %400 = vst.msk [vmem:[%s387] sm:$0xff] %vm399, %v396
    %s401 = scalar_lea.vmem [#allocation2], 96
    %s402 = scalar_lea.vmem [#allocation0], 192
    %s403 = scalar_lea.vmem %s402, 7 [#allocation0]
    %v404 = vld [vmem:[%s403] ss:$-1 sm:$0xff]
    %v405 = vrot.slane %v404, 6
    %406 = vst [vmem:[%s401] sm:$0xff] %v405
    %s407 = scalar_lea.vmem %s402, 8 [#allocation0]
    %s408 = scalar_lea.vmem %s407, 7 [#allocation0]
    %v409 = vld [vmem:[%s408] ss:$-1 sm:$0xff]
    %v410 = vrot.slane %v409, 6
    %v411 = vlaneseq
    %v412 = vshrl.u32 %v411, 7
    %vm413 = vcmp.lt.s32.totalorder %v412, 2
    %414 = vst.msk [vmem:[%s401] sm:$0xff] %vm413, %v410
    %s415 = scalar_lea.vmem [#allocation2], 104
    %s416 = scalar_lea.vmem [#allocation0], 208
    %s417 = scalar_lea.vmem %s416, 7 [#allocation0]
    %v418 = vld [vmem:[%s417] ss:$-1 sm:$0xff]
    %v419 = vrot.slane %v418, 6
    %420 = vst [vmem:[%s415] sm:$0xff] %v419
    %s421 = scalar_lea.vmem %s416, 8 [#allocation0]
    %s422 = scalar_lea.vmem %s421, 7 [#allocation0]
    %v423 = vld [vmem:[%s422] ss:$-1 sm:$0xff]
    %v424 = vrot.slane %v423, 6
    %v425 = vlaneseq
    %v426 = vshrl.u32 %v425, 7
    %vm427 = vcmp.lt.s32.totalorder %v426, 2
    %428 = vst.msk [vmem:[%s415] sm:$0xff] %vm427, %v424
    %s430 = sshll.u32 1, 2
    %s431 = ssub.s32 %s430, 1
    %v433 = vld [vmem:[#allocation2] sm:%s431]
    %s434 = sshll.u32 1, 2
    %s435 = ssub.s32 %s434, 1
    %436 = vst [vmem:[#allocation3] sm:%s435] %v433
    %s437 = scalar_lea.vmem [#allocation2], 8
    %v438 = vld [vmem:[%s437] sm:%s431]
    %s439 = sshll.u32 1, 2
    %s440 = ssub.s32 %s439, 1
    %s441 = scalar_lea.vmem [#allocation3], 2
    %442 = vst [vmem:[%s441] sm:%s440] %v438
    %s443 = scalar_lea.vmem [#allocation2], 16
    %v444 = vld [vmem:[%s443] sm:%s431]
    %s445 = sshll.u32 1, 2
    %s446 = ssub.s32 %s445, 1
    %s447 = smul.addr 2, 2
    %s448 = scalar_lea.vmem [#allocation3], %s447
    %449 = vst [vmem:[%s448] sm:%s446] %v444
    %s450 = scalar_lea.vmem [#allocation2], 24
    %v451 = vld [vmem:[%s450] sm:%s431]
    %s452 = sshll.u32 1, 2
    %s453 = ssub.s32 %s452, 1
    %s454 = smul.addr 2, 3
    %s455 = scalar_lea.vmem [#allocation3], %s454
    %456 = vst [vmem:[%s455] sm:%s453] %v451
    %s457 = scalar_lea.vmem [#allocation2], 32
    %v458 = vld [vmem:[%s457] sm:%s431]
    %s459 = sshll.u32 1, 2
    %s460 = ssub.s32 %s459, 1
    %s461 = smul.addr 2, 4
    %s462 = scalar_lea.vmem [#allocation3], %s461
    %463 = vst [vmem:[%s462] sm:%s460] %v458
    %s464 = scalar_lea.vmem [#allocation2], 40
    %v465 = vld [vmem:[%s464] sm:%s431]
    %s466 = sshll.u32 1, 2
    %s467 = ssub.s32 %s466, 1
    %s468 = smul.addr 2, 5
    %s469 = scalar_lea.vmem [#allocation3], %s468
    %470 = vst [vmem:[%s469] sm:%s467] %v465
    %s471 = scalar_lea.vmem [#allocation2], 48
    %v472 = vld [vmem:[%s471] sm:%s431]
    %s473 = sshll.u32 1, 2
    %s474 = ssub.s32 %s473, 1
    %s475 = smul.addr 2, 6
    %s476 = scalar_lea.vmem [#allocation3], %s475
    %477 = vst [vmem:[%s476] sm:%s474] %v472
    %s478 = scalar_lea.vmem [#allocation2], 56
    %v479 = vld [vmem:[%s478] sm:%s431]
    %s480 = sshll.u32 1, 2
    %s481 = ssub.s32 %s480, 1
    %s482 = smul.addr 2, 7
    %s483 = scalar_lea.vmem [#allocation3], %s482
    %484 = vst [vmem:[%s483] sm:%s481] %v479
    %s485 = scalar_lea.vmem [#allocation2], 64
    %v486 = vld [vmem:[%s485] sm:%s431]
    %s487 = sshll.u32 1, 2
    %s488 = ssub.s32 %s487, 1
    %s489 = smul.addr 2, 8
    %s490 = scalar_lea.vmem [#allocation3], %s489
    %491 = vst [vmem:[%s490] sm:%s488] %v486
    %s492 = scalar_lea.vmem [#allocation2], 72
    %v493 = vld [vmem:[%s492] sm:%s431]
    %s494 = sshll.u32 1, 2
    %s495 = ssub.s32 %s494, 1
    %s496 = smul.addr 2, 9
    %s497 = scalar_lea.vmem [#allocation3], %s496
    %498 = vst [vmem:[%s497] sm:%s495] %v493
    %s499 = scalar_lea.vmem [#allocation2], 80
    %v500 = vld [vmem:[%s499] sm:%s431]
    %s501 = sshll.u32 1, 2
    %s502 = ssub.s32 %s501, 1
    %s503 = smul.addr 2, 10
    %s504 = scalar_lea.vmem [#allocation3], %s503
    %505 = vst [vmem:[%s504] sm:%s502] %v500
    %s506 = scalar_lea.vmem [#allocation2], 88
    %v507 = vld [vmem:[%s506] sm:%s431]
    %s508 = sshll.u32 1, 2
    %s509 = ssub.s32 %s508, 1
    %s510 = smul.addr 2, 11
    %s511 = scalar_lea.vmem [#allocation3], %s510
    %512 = vst [vmem:[%s511] sm:%s509] %v507
    %s513 = scalar_lea.vmem [#allocation2], 96
    %v514 = vld [vmem:[%s513] sm:%s431]
    %s515 = sshll.u32 1, 2
    %s516 = ssub.s32 %s515, 1
    %s517 = smul.addr 2, 12
    %s518 = scalar_lea.vmem [#allocation3], %s517
    %519 = vst [vmem:[%s518] sm:%s516] %v514
    %s520 = scalar_lea.vmem [#allocation2], 104
    %v521 = vld [vmem:[%s520] sm:%s431]
    %s522 = sshll.u32 1, 2
    %s523 = ssub.s32 %s522, 1
    %s524 = smul.addr 2, 13
    %s525 = scalar_lea.vmem [#allocation3], %s524
    %526 = vst [vmem:[%s525] sm:%s523] %v521
    // Predicated region
    $region39: #{reverse} parent=1 // pred_check
      _
    $region40: #{reverse} parent=1 // pred_check_branch
      %528 = sbr.rel (0) target = $region42
    $region41: #{reverse} parent=1 // pred_region
      // Predicated region
      $region43: #{reverse} parent=41 // pred_check
        _
      $region44: #{reverse} parent=41 // pred_check_branch
        %530 = sbr.rel target = $region46
      $region45: #{reverse} parent=41 // pred_region
        // Predicated region
        $region58: #{reverse} parent=45 // pred_check
          _
        $region59: #{reverse} parent=45 // pred_check_branch
          %572 = sbr.rel (0) target = $region61
        $region60: #{reverse} parent=45 // pred_region
          loop: start=0, step=1, limit=1
          $region62: #{reverse} parent=60 // loop_pre_header
            _
          $region63: #{reverse} parent=60 // loop_header
            %s574 = sphi 0, %s578
            %p575 = scmp.ge.s32.totalorder %s574, 1
            %s579 = sphi [#allocation3], [#allocation3]
            %s580 = sphi %s1, %s1
          $region64: #{reverse} parent=60 // loop_header_branch
            %577 = sbr.rel (%p575) target = $region68
          $region65: #{reverse} parent=60 // loop_body
            _
          $region66: #{reverse} parent=60 // loop_footer
            %s578 = sadd.s32 1, %s574
          $region67: #{reverse} parent=60 // loop_footer_branch
            %573 = sbr.rel target = $region63
          $region68: #{reverse} parent=60 // loop_exit
            _
          %s582 = ssub.s32 4, 1
          loop: start=0, step=1, limit=1
          $region69: #{reverse} parent=60 // loop_pre_header
            _
          $region70: #{reverse} parent=60 // loop_header
            %s584 = sphi 0, %s588
            %p585 = scmp.ge.s32.totalorder %s584, 1
            %s589 = sphi [#allocation3], [#allocation3]
            %s590 = sphi %s1, %s1
          $region71: #{reverse} parent=60 // loop_header_branch
            %587 = sbr.rel (%p585) target = $region75
          $region72: #{reverse} parent=60 // loop_body
            %v591 = vld [vmem:[%s589] sm:%s582]
            %592 = vst [vmem:[%s590] sm:%s582] %v591
            %v593 = vld [vmem:[%s589 + $0x2] sm:%s582]
            %594 = vst [vmem:[%s590 + $0x2] sm:%s582] %v593
            %v595 = vld [vmem:[%s589 + $0x4] sm:%s582]
            %596 = vst [vmem:[%s590 + $0x4] sm:%s582] %v595
            %v597 = vld [vmem:[%s589 + $0x6] sm:%s582]
            %598 = vst [vmem:[%s590 + $0x6] sm:%s582] %v597
            %v599 = vld [vmem:[%s589 + $0x8] sm:%s582]
            %600 = vst [vmem:[%s590 + $0x8] sm:%s582] %v599
            %v601 = vld [vmem:[%s589 + $0xa] sm:%s582]
            %602 = vst [vmem:[%s590 + $0xa] sm:%s582] %v601
            %v603 = vld [vmem:[%s589 + $0xc] sm:%s582]
            %604 = vst [vmem:[%s590 + $0xc] sm:%s582] %v603
            %v605 = vld [vmem:[%s589 + $0xe] sm:%s582]
            %606 = vst [vmem:[%s590 + $0xe] sm:%s582] %v605
            %v607 = vld [vmem:[%s589 + $0x10] sm:%s582]
            %608 = vst [vmem:[%s590 + $0x10] sm:%s582] %v607
            %v609 = vld [vmem:[%s589 + $0x12] sm:%s582]
            %610 = vst [vmem:[%s590 + $0x12] sm:%s582] %v609
            %v611 = vld [vmem:[%s589 + $0x14] sm:%s582]
            %612 = vst [vmem:[%s590 + $0x14] sm:%s582] %v611
            %v613 = vld [vmem:[%s589 + $0x16] sm:%s582]
            %614 = vst [vmem:[%s590 + $0x16] sm:%s582] %v613
            %v615 = vld [vmem:[%s589 + $0x18] sm:%s582]
            %616 = vst [vmem:[%s590 + $0x18] sm:%s582] %v615
            %v617 = vld [vmem:[%s589 + $0x1a] sm:%s582]
            %618 = vst [vmem:[%s590 + $0x1a] sm:%s582] %v617
          $region73: #{reverse} parent=60 // loop_footer
            %s588 = sadd.s32 1, %s584
          $region74: #{reverse} parent=60 // loop_footer_branch
            %583 = sbr.rel target = $region70
          $region75: #{reverse} parent=60 // loop_exit
            _
        $region61: #{reverse} parent=45 // pred_fallthru
          _
      $region46: #{reverse} parent=41 // pred_fallthru
        _
      // Predicated region
      $region47: #{reverse} parent=41 // pred_check
        _
      $region48: #{reverse} parent=41 // pred_check_branch
        %532 = sbr.rel (0) target = $region50
      $region49: #{reverse} parent=41 // pred_region
        %s534 = ssub.s32 4, 1
        loop: start=0, step=1, limit=1
        $region51: #{reverse} parent=49 // loop_pre_header
          _
        $region52: #{reverse} parent=49 // loop_header
          %s536 = sphi 0, %s540
          %p537 = scmp.ge.s32.totalorder %s536, 1
          %s541 = sphi [#allocation3], [#allocation3]
          %s542 = sphi %s1, %s1
        $region53: #{reverse} parent=49 // loop_header_branch
          %539 = sbr.rel (%p537) target = $region57
        $region54: #{reverse} parent=49 // loop_body
          %v543 = vld [vmem:[%s541] sm:%s534]
          %544 = vst [vmem:[%s542] sm:%s534] %v543
          %v545 = vld [vmem:[%s541 + $0x2] sm:%s534]
          %546 = vst [vmem:[%s542 + $0x2] sm:%s534] %v545
          %v547 = vld [vmem:[%s541 + $0x4] sm:%s534]
          %548 = vst [vmem:[%s542 + $0x4] sm:%s534] %v547
          %v549 = vld [vmem:[%s541 + $0x6] sm:%s534]
          %550 = vst [vmem:[%s542 + $0x6] sm:%s534] %v549
          %v551 = vld [vmem:[%s541 + $0x8] sm:%s534]
          %552 = vst [vmem:[%s542 + $0x8] sm:%s534] %v551
          %v553 = vld [vmem:[%s541 + $0xa] sm:%s534]
          %554 = vst [vmem:[%s542 + $0xa] sm:%s534] %v553
          %v555 = vld [vmem:[%s541 + $0xc] sm:%s534]
          %556 = vst [vmem:[%s542 + $0xc] sm:%s534] %v555
          %v557 = vld [vmem:[%s541 + $0xe] sm:%s534]
          %558 = vst [vmem:[%s542 + $0xe] sm:%s534] %v557
          %v559 = vld [vmem:[%s541 + $0x10] sm:%s534]
          %560 = vst [vmem:[%s542 + $0x10] sm:%s534] %v559
          %v561 = vld [vmem:[%s541 + $0x12] sm:%s534]
          %562 = vst [vmem:[%s542 + $0x12] sm:%s534] %v561
          %v563 = vld [vmem:[%s541 + $0x14] sm:%s534]
          %564 = vst [vmem:[%s542 + $0x14] sm:%s534] %v563
          %v565 = vld [vmem:[%s541 + $0x16] sm:%s534]
          %566 = vst [vmem:[%s542 + $0x16] sm:%s534] %v565
          %v567 = vld [vmem:[%s541 + $0x18] sm:%s534]
          %568 = vst [vmem:[%s542 + $0x18] sm:%s534] %v567
          %v569 = vld [vmem:[%s541 + $0x1a] sm:%s534]
          %570 = vst [vmem:[%s542 + $0x1a] sm:%s534] %v569
        $region55: #{reverse} parent=49 // loop_footer
          %s540 = sadd.s32 1, %s536
        $region56: #{reverse} parent=49 // loop_footer_branch
          %535 = sbr.rel target = $region52
        $region57: #{reverse} parent=49 // loop_exit
          _
      $region50: #{reverse} parent=41 // pred_fallthru
        _
    $region42: #{reverse} parent=1 // pred_fallthru
      _
    %619 = vnop

// kernel: reverse.9
$region0: #{reverse.9}
  %s0 = inlined_call_operand.vmem [shape: f32[2,8,1,2], index: 0, kind: input, shape index: {}]
  %s1 = inlined_call_operand.vmem [shape: f32[2,8,1,2], index: 1, kind: output, shape index: {}]
  $region1: #{reverse.9} parent=0
    #allocation0 [shape = 'u8[131072]{0}', space=vmem, size = 0x20000, scoped, tag = 'operand span for operand 0']
    #allocation1 [shape = 'u8[32768]{0}', space=vmem, size = 0x8000, scoped, tag = 'packed  for operand 0']
    #allocation2 [shape = 'u8[65536]{0}', space=vmem, size = 0x10000, scoped, tag = 'operand span for operand 1']
    #allocation3 [shape = 'u8[16384]{0}', space=vmem, size = 0x4000, scoped, tag = 'packed  for operand 1']
    %s2 = scalar_lea.vmem [#allocation1], 2
    // Predicated region
    $region2: #{reverse.9} parent=1 // pred_check
      _
    $region3: #{reverse.9} parent=1 // pred_check_branch
      %4 = sbr.rel (0) target = $region5
    $region4: #{reverse.9} parent=1 // pred_region
      // Predicated region
      $region6: #{reverse.9} parent=4 // pred_check
        _
      $region7: #{reverse.9} parent=4 // pred_check_branch
        %6 = sbr.rel target = $region9
      $region8: #{reverse.9} parent=4 // pred_region
        // Predicated region
        $region21: #{reverse.9} parent=8 // pred_check
          _
        $region22: #{reverse.9} parent=8 // pred_check_branch
          %52 = sbr.rel (0) target = $region24
        $region23: #{reverse.9} parent=8 // pred_region
          loop: start=0, step=1, limit=1
          $region25: #{reverse.9} parent=23 // loop_pre_header
            _
          $region26: #{reverse.9} parent=23 // loop_header
            %s54 = sphi 0, %s58
            %p55 = scmp.ge.s32.totalorder %s54, 1
            %s59 = sphi %s0, %s0
            %s60 = sphi %s2, %s2
          $region27: #{reverse.9} parent=23 // loop_header_branch
            %57 = sbr.rel (%p55) target = $region31
          $region28: #{reverse.9} parent=23 // loop_body
            _
          $region29: #{reverse.9} parent=23 // loop_footer
            %s58 = sadd.s32 1, %s54
          $region30: #{reverse.9} parent=23 // loop_footer_branch
            %53 = sbr.rel target = $region26
          $region31: #{reverse.9} parent=23 // loop_exit
            _
          %s62 = ssub.s32 4, 1
          loop: start=0, step=1, limit=1
          $region32: #{reverse.9} parent=23 // loop_pre_header
            _
          $region33: #{reverse.9} parent=23 // loop_header
            %s64 = sphi 0, %s68
            %p65 = scmp.ge.s32.totalorder %s64, 1
            %s69 = sphi %s0, %s0
            %s70 = sphi %s2, %s2
          $region34: #{reverse.9} parent=23 // loop_header_branch
            %67 = sbr.rel (%p65) target = $region38
          $region35: #{reverse.9} parent=23 // loop_body
            %v71 = vld [vmem:[%s69] sm:%s62]
            %72 = vst [vmem:[%s70] sm:%s62] %v71
            %v73 = vld [vmem:[%s69 + $0x2] sm:%s62]
            %74 = vst [vmem:[%s70 + $0x4] sm:%s62] %v73
            %v75 = vld [vmem:[%s69 + $0x4] sm:%s62]
            %76 = vst [vmem:[%s70 + $0x8] sm:%s62] %v75
            %v77 = vld [vmem:[%s69 + $0x6] sm:%s62]
            %78 = vst [vmem:[%s70 + $0xc] sm:%s62] %v77
            %v79 = vld [vmem:[%s69 + $0x8] sm:%s62]
            %80 = vst [vmem:[%s70 + $0x10] sm:%s62] %v79
            %v81 = vld [vmem:[%s69 + $0xa] sm:%s62]
            %82 = vst [vmem:[%s70 + $0x14] sm:%s62] %v81
            %v83 = vld [vmem:[%s69 + $0xc] sm:%s62]
            %84 = vst [vmem:[%s70 + $0x18] sm:%s62] %v83
            %v85 = vld [vmem:[%s69 + $0xe] sm:%s62]
            %86 = vst [vmem:[%s70 + $0x1c] sm:%s62] %v85
            %v87 = vld [vmem:[%s69 + $0x10] sm:%s62]
            %88 = vst [vmem:[%s70 + $0x20] sm:%s62] %v87
            %v89 = vld [vmem:[%s69 + $0x12] sm:%s62]
            %90 = vst [vmem:[%s70 + $0x24] sm:%s62] %v89
            %v91 = vld [vmem:[%s69 + $0x14] sm:%s62]
            %92 = vst [vmem:[%s70 + $0x28] sm:%s62] %v91
            %v93 = vld [vmem:[%s69 + $0x16] sm:%s62]
            %94 = vst [vmem:[%s70 + $0x2c] sm:%s62] %v93
            %v95 = vld [vmem:[%s69 + $0x18] sm:%s62]
            %96 = vst [vmem:[%s70 + $0x30] sm:%s62] %v95
            %v97 = vld [vmem:[%s69 + $0x1a] sm:%s62]
            %98 = vst [vmem:[%s70 + $0x34] sm:%s62] %v97
            %v99 = vld [vmem:[%s69 + $0x1c] sm:%s62]
            %100 = vst [vmem:[%s70 + $0x38] sm:%s62] %v99
            %v101 = vld [vmem:[%s69 + $0x1e] sm:%s62]
            %102 = vst [vmem:[%s70 + $0x3c] sm:%s62] %v101
          $region36: #{reverse.9} parent=23 // loop_footer
            %s68 = sadd.s32 1, %s64
          $region37: #{reverse.9} parent=23 // loop_footer_branch
            %63 = sbr.rel target = $region33
          $region38: #{reverse.9} parent=23 // loop_exit
            _
        $region24: #{reverse.9} parent=8 // pred_fallthru
          _
      $region9: #{reverse.9} parent=4 // pred_fallthru
        _
      // Predicated region
      $region10: #{reverse.9} parent=4 // pred_check
        _
      $region11: #{reverse.9} parent=4 // pred_check_branch
        %8 = sbr.rel (0) target = $region13
      $region12: #{reverse.9} parent=4 // pred_region
        %s10 = ssub.s32 4, 1
        loop: start=0, step=1, limit=1
        $region14: #{reverse.9} parent=12 // loop_pre_header
          _
        $region15: #{reverse.9} parent=12 // loop_header
          %s12 = sphi 0, %s16
          %p13 = scmp.ge.s32.totalorder %s12, 1
          %s17 = sphi %s0, %s0
          %s18 = sphi %s2, %s2
        $region16: #{reverse.9} parent=12 // loop_header_branch
          %15 = sbr.rel (%p13) target = $region20
        $region17: #{reverse.9} parent=12 // loop_body
          %v19 = vld [vmem:[%s17] sm:%s10]
          %20 = vst [vmem:[%s18] sm:%s10] %v19
          %v21 = vld [vmem:[%s17 + $0x2] sm:%s10]
          %22 = vst [vmem:[%s18 + $0x4] sm:%s10] %v21
          %v23 = vld [vmem:[%s17 + $0x4] sm:%s10]
          %24 = vst [vmem:[%s18 + $0x8] sm:%s10] %v23
          %v25 = vld [vmem:[%s17 + $0x6] sm:%s10]
          %26 = vst [vmem:[%s18 + $0xc] sm:%s10] %v25
          %v27 = vld [vmem:[%s17 + $0x8] sm:%s10]
          %28 = vst [vmem:[%s18 + $0x10] sm:%s10] %v27
          %v29 = vld [vmem:[%s17 + $0xa] sm:%s10]
          %30 = vst [vmem:[%s18 + $0x14] sm:%s10] %v29
          %v31 = vld [vmem:[%s17 + $0xc] sm:%s10]
          %32 = vst [vmem:[%s18 + $0x18] sm:%s10] %v31
          %v33 = vld [vmem:[%s17 + $0xe] sm:%s10]
          %34 = vst [vmem:[%s18 + $0x1c] sm:%s10] %v33
          %v35 = vld [vmem:[%s17 + $0x10] sm:%s10]
          %36 = vst [vmem:[%s18 + $0x20] sm:%s10] %v35
          %v37 = vld [vmem:[%s17 + $0x12] sm:%s10]
          %38 = vst [vmem:[%s18 + $0x24] sm:%s10] %v37
          %v39 = vld [vmem:[%s17 + $0x14] sm:%s10]
          %40 = vst [vmem:[%s18 + $0x28] sm:%s10] %v39
          %v41 = vld [vmem:[%s17 + $0x16] sm:%s10]
          %42 = vst [vmem:[%s18 + $0x2c] sm:%s10] %v41
          %v43 = vld [vmem:[%s17 + $0x18] sm:%s10]
          %44 = vst [vmem:[%s18 + $0x30] sm:%s10] %v43
          %v45 = vld [vmem:[%s17 + $0x1a] sm:%s10]
          %46 = vst [vmem:[%s18 + $0x34] sm:%s10] %v45
          %v47 = vld [vmem:[%s17 + $0x1c] sm:%s10]
          %48 = vst [vmem:[%s18 + $0x38] sm:%s10] %v47
          %v49 = vld [vmem:[%s17 + $0x1e] sm:%s10]
          %50 = vst [vmem:[%s18 + $0x3c] sm:%s10] %v49
        $region18: #{reverse.9} parent=12 // loop_footer
          %s16 = sadd.s32 1, %s12
        $region19: #{reverse.9} parent=12 // loop_footer_branch
          %11 = sbr.rel target = $region15
        $region20: #{reverse.9} parent=12 // loop_exit
          _
      $region13: #{reverse.9} parent=4 // pred_fallthru
        _
    $region5: #{reverse.9} parent=1 // pred_fallthru
      _
    %103 = vnop
    %s105 = sshll.u32 1, 2
    %s106 = ssub.s32 %s105, 1
    %s107 = smul.addr 2, 31
    %s108 = scalar_lea.vmem [#allocation1], %s107
    %v109 = vld [vmem:[%s108] sm:%s106]
    %s110 = scalar_lea.vmem [#allocation0], 248
    %111 = vst [vmem:[%s110] sm:%s106] %v109
    %s112 = smul.addr 2, 30
    %s113 = scalar_lea.vmem [#allocation1], %s112
    %v114 = vld [vmem:[%s113] sm:%s106]
    %s115 = scalar_lea.vmem [#allocation0], 240
    %116 = vst [vmem:[%s115] sm:%s106] %v114
    %s117 = smul.addr 2, 29
    %s118 = scalar_lea.vmem [#allocation1], %s117
    %v119 = vld [vmem:[%s118] sm:%s106]
    %s120 = scalar_lea.vmem [#allocation0], 232
    %121 = vst [vmem:[%s120] sm:%s106] %v119
    %s122 = smul.addr 2, 28
    %s123 = scalar_lea.vmem [#allocation1], %s122
    %v124 = vld [vmem:[%s123] sm:%s106]
    %s125 = scalar_lea.vmem [#allocation0], 224
    %126 = vst [vmem:[%s125] sm:%s106] %v124
    %s127 = smul.addr 2, 27
    %s128 = scalar_lea.vmem [#allocation1], %s127
    %v129 = vld [vmem:[%s128] sm:%s106]
    %s130 = scalar_lea.vmem [#allocation0], 216
    %131 = vst [vmem:[%s130] sm:%s106] %v129
    %s132 = smul.addr 2, 26
    %s133 = scalar_lea.vmem [#allocation1], %s132
    %v134 = vld [vmem:[%s133] sm:%s106]
    %s135 = scalar_lea.vmem [#allocation0], 208
    %136 = vst [vmem:[%s135] sm:%s106] %v134
    %s137 = smul.addr 2, 25
    %s138 = scalar_lea.vmem [#allocation1], %s137
    %v139 = vld [vmem:[%s138] sm:%s106]
    %s140 = scalar_lea.vmem [#allocation0], 200
    %141 = vst [vmem:[%s140] sm:%s106] %v139
    %s142 = smul.addr 2, 24
    %s143 = scalar_lea.vmem [#allocation1], %s142
    %v144 = vld [vmem:[%s143] sm:%s106]
    %s145 = scalar_lea.vmem [#allocation0], 192
    %146 = vst [vmem:[%s145] sm:%s106] %v144
    %s147 = smul.addr 2, 23
    %s148 = scalar_lea.vmem [#allocation1], %s147
    %v149 = vld [vmem:[%s148] sm:%s106]
    %s150 = scalar_lea.vmem [#allocation0], 184
    %151 = vst [vmem:[%s150] sm:%s106] %v149
    %s152 = smul.addr 2, 22
    %s153 = scalar_lea.vmem [#allocation1], %s152
    %v154 = vld [vmem:[%s153] sm:%s106]
    %s155 = scalar_lea.vmem [#allocation0], 176
    %156 = vst [vmem:[%s155] sm:%s106] %v154
    %s157 = smul.addr 2, 21
    %s158 = scalar_lea.vmem [#allocation1], %s157
    %v159 = vld [vmem:[%s158] sm:%s106]
    %s160 = scalar_lea.vmem [#allocation0], 168
    %161 = vst [vmem:[%s160] sm:%s106] %v159
    %s162 = smul.addr 2, 20
    %s163 = scalar_lea.vmem [#allocation1], %s162
    %v164 = vld [vmem:[%s163] sm:%s106]
    %s165 = scalar_lea.vmem [#allocation0], 160
    %166 = vst [vmem:[%s165] sm:%s106] %v164
    %s167 = smul.addr 2, 19
    %s168 = scalar_lea.vmem [#allocation1], %s167
    %v169 = vld [vmem:[%s168] sm:%s106]
    %s170 = scalar_lea.vmem [#allocation0], 152
    %171 = vst [vmem:[%s170] sm:%s106] %v169
    %s172 = smul.addr 2, 18
    %s173 = scalar_lea.vmem [#allocation1], %s172
    %v174 = vld [vmem:[%s173] sm:%s106]
    %s175 = scalar_lea.vmem [#allocation0], 144
    %176 = vst [vmem:[%s175] sm:%s106] %v174
    %s177 = smul.addr 2, 17
    %s178 = scalar_lea.vmem [#allocation1], %s177
    %v179 = vld [vmem:[%s178] sm:%s106]
    %s180 = scalar_lea.vmem [#allocation0], 136
    %181 = vst [vmem:[%s180] sm:%s106] %v179
    %s182 = smul.addr 2, 16
    %s183 = scalar_lea.vmem [#allocation1], %s182
    %v184 = vld [vmem:[%s183] sm:%s106]
    %s185 = scalar_lea.vmem [#allocation0], 128
    %186 = vst [vmem:[%s185] sm:%s106] %v184
    %s187 = smul.addr 2, 15
    %s188 = scalar_lea.vmem [#allocation1], %s187
    %v189 = vld [vmem:[%s188] sm:%s106]
    %s190 = scalar_lea.vmem [#allocation0], 120
    %191 = vst [vmem:[%s190] sm:%s106] %v189
    %s192 = smul.addr 2, 14
    %s193 = scalar_lea.vmem [#allocation1], %s192
    %v194 = vld [vmem:[%s193] sm:%s106]
    %s195 = scalar_lea.vmem [#allocation0], 112
    %196 = vst [vmem:[%s195] sm:%s106] %v194
    %s197 = smul.addr 2, 13
    %s198 = scalar_lea.vmem [#allocation1], %s197
    %v199 = vld [vmem:[%s198] sm:%s106]
    %s200 = scalar_lea.vmem [#allocation0], 104
    %201 = vst [vmem:[%s200] sm:%s106] %v199
    %s202 = smul.addr 2, 12
    %s203 = scalar_lea.vmem [#allocation1], %s202
    %v204 = vld [vmem:[%s203] sm:%s106]
    %s205 = scalar_lea.vmem [#allocation0], 96
    %206 = vst [vmem:[%s205] sm:%s106] %v204
    %s207 = smul.addr 2, 11
    %s208 = scalar_lea.vmem [#allocation1], %s207
    %v209 = vld [vmem:[%s208] sm:%s106]
    %s210 = scalar_lea.vmem [#allocation0], 88
    %211 = vst [vmem:[%s210] sm:%s106] %v209
    %s212 = smul.addr 2, 10
    %s213 = scalar_lea.vmem [#allocation1], %s212
    %v214 = vld [vmem:[%s213] sm:%s106]
    %s215 = scalar_lea.vmem [#allocation0], 80
    %216 = vst [vmem:[%s215] sm:%s106] %v214
    %s217 = smul.addr 2, 9
    %s218 = scalar_lea.vmem [#allocation1], %s217
    %v219 = vld [vmem:[%s218] sm:%s106]
    %s220 = scalar_lea.vmem [#allocation0], 72
    %221 = vst [vmem:[%s220] sm:%s106] %v219
    %s222 = smul.addr 2, 8
    %s223 = scalar_lea.vmem [#allocation1], %s222
    %v224 = vld [vmem:[%s223] sm:%s106]
    %s225 = scalar_lea.vmem [#allocation0], 64
    %226 = vst [vmem:[%s225] sm:%s106] %v224
    %s227 = smul.addr 2, 7
    %s228 = scalar_lea.vmem [#allocation1], %s227
    %v229 = vld [vmem:[%s228] sm:%s106]
    %s230 = scalar_lea.vmem [#allocation0], 56
    %231 = vst [vmem:[%s230] sm:%s106] %v229
    %s232 = smul.addr 2, 6
    %s233 = scalar_lea.vmem [#allocation1], %s232
    %v234 = vld [vmem:[%s233] sm:%s106]
    %s235 = scalar_lea.vmem [#allocation0], 48
    %236 = vst [vmem:[%s235] sm:%s106] %v234
    %s237 = smul.addr 2, 5
    %s238 = scalar_lea.vmem [#allocation1], %s237
    %v239 = vld [vmem:[%s238] sm:%s106]
    %s240 = scalar_lea.vmem [#allocation0], 40
    %241 = vst [vmem:[%s240] sm:%s106] %v239
    %s242 = smul.addr 2, 4
    %s243 = scalar_lea.vmem [#allocation1], %s242
    %v244 = vld [vmem:[%s243] sm:%s106]
    %s245 = scalar_lea.vmem [#allocation0], 32
    %246 = vst [vmem:[%s245] sm:%s106] %v244
    %s247 = smul.addr 2, 3
    %s248 = scalar_lea.vmem [#allocation1], %s247
    %v249 = vld [vmem:[%s248] sm:%s106]
    %s250 = scalar_lea.vmem [#allocation0], 24
    %251 = vst [vmem:[%s250] sm:%s106] %v249
    %s252 = smul.addr 2, 2
    %s253 = scalar_lea.vmem [#allocation1], %s252
    %v254 = vld [vmem:[%s253] sm:%s106]
    %s255 = scalar_lea.vmem [#allocation0], 16
    %256 = vst [vmem:[%s255] sm:%s106] %v254
    %s257 = scalar_lea.vmem [#allocation1], 2
    %v258 = vld [vmem:[%s257] sm:%s106]
    %s259 = scalar_lea.vmem [#allocation0], 8
    %260 = vst [vmem:[%s259] sm:%s106] %v258
    %v261 = vld [vmem:[#allocation1] sm:%s106]
    %262 = vst [vmem:[#allocation0] sm:%s106] %v261
    %s263 = scalar_lea.vmem [#allocation0], 7
    %v264 = vld [vmem:[%s263] ss:$-1 sm:$0xff]
    %v265 = vrot.slane %v264, 6
    %266 = vst [vmem:[#allocation2] sm:$0xff] %v265
    %s267 = scalar_lea.vmem [#allocation0], 8
    %s268 = scalar_lea.vmem %s267, 7 [#allocation0]
    %v269 = vld [vmem:[%s268] ss:$-1 sm:$0xff]
    %v270 = vrot.slane %v269, 6
    %v271 = vlaneseq
    %v272 = vshrl.u32 %v271, 7
    %vm273 = vcmp.lt.s32.totalorder %v272, 2
    %274 = vst.msk [vmem:[#allocation2] sm:$0xff] %vm273, %v270
    %s275 = scalar_lea.vmem [#allocation2], 8
    %s276 = scalar_lea.vmem [#allocation0], 16
    %s277 = scalar_lea.vmem %s276, 7 [#allocation0]
    %v278 = vld [vmem:[%s277] ss:$-1 sm:$0xff]
    %v279 = vrot.slane %v278, 6
    %280 = vst [vmem:[%s275] sm:$0xff] %v279
    %s281 = scalar_lea.vmem %s276, 8 [#allocation0]
    %s282 = scalar_lea.vmem %s281, 7 [#allocation0]
    %v283 = vld [vmem:[%s282] ss:$-1 sm:$0xff]
    %v284 = vrot.slane %v283, 6
    %v285 = vlaneseq
    %v286 = vshrl.u32 %v285, 7
    %vm287 = vcmp.lt.s32.totalorder %v286, 2
    %288 = vst.msk [vmem:[%s275] sm:$0xff] %vm287, %v284
    %s289 = scalar_lea.vmem [#allocation2], 16
    %s290 = scalar_lea.vmem [#allocation0], 32
    %s291 = scalar_lea.vmem %s290, 7 [#allocation0]
    %v292 = vld [vmem:[%s291] ss:$-1 sm:$0xff]
    %v293 = vrot.slane %v292, 6
    %294 = vst [vmem:[%s289] sm:$0xff] %v293
    %s295 = scalar_lea.vmem %s290, 8 [#allocation0]
    %s296 = scalar_lea.vmem %s295, 7 [#allocation0]
    %v297 = vld [vmem:[%s296] ss:$-1 sm:$0xff]
    %v298 = vrot.slane %v297, 6
    %v299 = vlaneseq
    %v300 = vshrl.u32 %v299, 7
    %vm301 = vcmp.lt.s32.totalorder %v300, 2
    %302 = vst.msk [vmem:[%s289] sm:$0xff] %vm301, %v298
    %s303 = scalar_lea.vmem [#allocation2], 24
    %s304 = scalar_lea.vmem [#allocation0], 48
    %s305 = scalar_lea.vmem %s304, 7 [#allocation0]
    %v306 = vld [vmem:[%s305] ss:$-1 sm:$0xff]
    %v307 = vrot.slane %v306, 6
    %308 = vst [vmem:[%s303] sm:$0xff] %v307
    %s309 = scalar_lea.vmem %s304, 8 [#allocation0]
    %s310 = scalar_lea.vmem %s309, 7 [#allocation0]
    %v311 = vld [vmem:[%s310] ss:$-1 sm:$0xff]
    %v312 = vrot.slane %v311, 6
    %v313 = vlaneseq
    %v314 = vshrl.u32 %v313, 7
    %vm315 = vcmp.lt.s32.totalorder %v314, 2
    %316 = vst.msk [vmem:[%s303] sm:$0xff] %vm315, %v312
    %s317 = scalar_lea.vmem [#allocation2], 32
    %s318 = scalar_lea.vmem [#allocation0], 64
    %s319 = scalar_lea.vmem %s318, 7 [#allocation0]
    %v320 = vld [vmem:[%s319] ss:$-1 sm:$0xff]
    %v321 = vrot.slane %v320, 6
    %322 = vst [vmem:[%s317] sm:$0xff] %v321
    %s323 = scalar_lea.vmem %s318, 8 [#allocation0]
    %s324 = scalar_lea.vmem %s323, 7 [#allocation0]
    %v325 = vld [vmem:[%s324] ss:$-1 sm:$0xff]
    %v326 = vrot.slane %v325, 6
    %v327 = vlaneseq
    %v328 = vshrl.u32 %v327, 7
    %vm329 = vcmp.lt.s32.totalorder %v328, 2
    %330 = vst.msk [vmem:[%s317] sm:$0xff] %vm329, %v326
    %s331 = scalar_lea.vmem [#allocation2], 40
    %s332 = scalar_lea.vmem [#allocation0], 80
    %s333 = scalar_lea.vmem %s332, 7 [#allocation0]
    %v334 = vld [vmem:[%s333] ss:$-1 sm:$0xff]
    %v335 = vrot.slane %v334, 6
    %336 = vst [vmem:[%s331] sm:$0xff] %v335
    %s337 = scalar_lea.vmem %s332, 8 [#allocation0]
    %s338 = scalar_lea.vmem %s337, 7 [#allocation0]
    %v339 = vld [vmem:[%s338] ss:$-1 sm:$0xff]
    %v340 = vrot.slane %v339, 6
    %v341 = vlaneseq
    %v342 = vshrl.u32 %v341, 7
    %vm343 = vcmp.lt.s32.totalorder %v342, 2
    %344 = vst.msk [vmem:[%s331] sm:$0xff] %vm343, %v340
    %s345 = scalar_lea.vmem [#allocation2], 48
    %s346 = scalar_lea.vmem [#allocation0], 96
    %s347 = scalar_lea.vmem %s346, 7 [#allocation0]
    %v348 = vld [vmem:[%s347] ss:$-1 sm:$0xff]
    %v349 = vrot.slane %v348, 6
    %350 = vst [vmem:[%s345] sm:$0xff] %v349
    %s351 = scalar_lea.vmem %s346, 8 [#allocation0]
    %s352 = scalar_lea.vmem %s351, 7 [#allocation0]
    %v353 = vld [vmem:[%s352] ss:$-1 sm:$0xff]
    %v354 = vrot.slane %v353, 6
    %v355 = vlaneseq
    %v356 = vshrl.u32 %v355, 7
    %vm357 = vcmp.lt.s32.totalorder %v356, 2
    %358 = vst.msk [vmem:[%s345] sm:$0xff] %vm357, %v354
    %s359 = scalar_lea.vmem [#allocation2], 56
    %s360 = scalar_lea.vmem [#allocation0], 112
    %s361 = scalar_lea.vmem %s360, 7 [#allocation0]
    %v362 = vld [vmem:[%s361] ss:$-1 sm:$0xff]
    %v363 = vrot.slane %v362, 6
    %364 = vst [vmem:[%s359] sm:$0xff] %v363
    %s365 = scalar_lea.vmem %s360, 8 [#allocation0]
    %s366 = scalar_lea.vmem %s365, 7 [#allocation0]
    %v367 = vld [vmem:[%s366] ss:$-1 sm:$0xff]
    %v368 = vrot.slane %v367, 6
    %v369 = vlaneseq
    %v370 = vshrl.u32 %v369, 7
    %vm371 = vcmp.lt.s32.totalorder %v370, 2
    %372 = vst.msk [vmem:[%s359] sm:$0xff] %vm371, %v368
    %s373 = scalar_lea.vmem [#allocation2], 64
    %s374 = scalar_lea.vmem [#allocation0], 128
    %s375 = scalar_lea.vmem %s374, 7 [#allocation0]
    %v376 = vld [vmem:[%s375] ss:$-1 sm:$0xff]
    %v377 = vrot.slane %v376, 6
    %378 = vst [vmem:[%s373] sm:$0xff] %v377
    %s379 = scalar_lea.vmem %s374, 8 [#allocation0]
    %s380 = scalar_lea.vmem %s379, 7 [#allocation0]
    %v381 = vld [vmem:[%s380] ss:$-1 sm:$0xff]
    %v382 = vrot.slane %v381, 6
    %v383 = vlaneseq
    %v384 = vshrl.u32 %v383, 7
    %vm385 = vcmp.lt.s32.totalorder %v384, 2
    %386 = vst.msk [vmem:[%s373] sm:$0xff] %vm385, %v382
    %s387 = scalar_lea.vmem [#allocation2], 72
    %s388 = scalar_lea.vmem [#allocation0], 144
    %s389 = scalar_lea.vmem %s388, 7 [#allocation0]
    %v390 = vld [vmem:[%s389] ss:$-1 sm:$0xff]
    %v391 = vrot.slane %v390, 6
    %392 = vst [vmem:[%s387] sm:$0xff] %v391
    %s393 = scalar_lea.vmem %s388, 8 [#allocation0]
    %s394 = scalar_lea.vmem %s393, 7 [#allocation0]
    %v395 = vld [vmem:[%s394] ss:$-1 sm:$0xff]
    %v396 = vrot.slane %v395, 6
    %v397 = vlaneseq
    %v398 = vshrl.u32 %v397, 7
    %vm399 = vcmp.lt.s32.totalorder %v398, 2
    %400 = vst.msk [vmem:[%s387] sm:$0xff] %vm399, %v396
    %s401 = scalar_lea.vmem [#allocation2], 80
    %s402 = scalar_lea.vmem [#allocation0], 160
    %s403 = scalar_lea.vmem %s402, 7 [#allocation0]
    %v404 = vld [vmem:[%s403] ss:$-1 sm:$0xff]
    %v405 = vrot.slane %v404, 6
    %406 = vst [vmem:[%s401] sm:$0xff] %v405
    %s407 = scalar_lea.vmem %s402, 8 [#allocation0]
    %s408 = scalar_lea.vmem %s407, 7 [#allocation0]
    %v409 = vld [vmem:[%s408] ss:$-1 sm:$0xff]
    %v410 = vrot.slane %v409, 6
    %v411 = vlaneseq
    %v412 = vshrl.u32 %v411, 7
    %vm413 = vcmp.lt.s32.totalorder %v412, 2
    %414 = vst.msk [vmem:[%s401] sm:$0xff] %vm413, %v410
    %s415 = scalar_lea.vmem [#allocation2], 88
    %s416 = scalar_lea.vmem [#allocation0], 176
    %s417 = scalar_lea.vmem %s416, 7 [#allocation0]
    %v418 = vld [vmem:[%s417] ss:$-1 sm:$0xff]
    %v419 = vrot.slane %v418, 6
    %420 = vst [vmem:[%s415] sm:$0xff] %v419
    %s421 = scalar_lea.vmem %s416, 8 [#allocation0]
    %s422 = scalar_lea.vmem %s421, 7 [#allocation0]
    %v423 = vld [vmem:[%s422] ss:$-1 sm:$0xff]
    %v424 = vrot.slane %v423, 6
    %v425 = vlaneseq
    %v426 = vshrl.u32 %v425, 7
    %vm427 = vcmp.lt.s32.totalorder %v426, 2
    %428 = vst.msk [vmem:[%s415] sm:$0xff] %vm427, %v424
    %s429 = scalar_lea.vmem [#allocation2], 96
    %s430 = scalar_lea.vmem [#allocation0], 192
    %s431 = scalar_lea.vmem %s430, 7 [#allocation0]
    %v432 = vld [vmem:[%s431] ss:$-1 sm:$0xff]
    %v433 = vrot.slane %v432, 6
    %434 = vst [vmem:[%s429] sm:$0xff] %v433
    %s435 = scalar_lea.vmem %s430, 8 [#allocation0]
    %s436 = scalar_lea.vmem %s435, 7 [#allocation0]
    %v437 = vld [vmem:[%s436] ss:$-1 sm:$0xff]
    %v438 = vrot.slane %v437, 6
    %v439 = vlaneseq
    %v440 = vshrl.u32 %v439, 7
    %vm441 = vcmp.lt.s32.totalorder %v440, 2
    %442 = vst.msk [vmem:[%s429] sm:$0xff] %vm441, %v438
    %s443 = scalar_lea.vmem [#allocation2], 104
    %s444 = scalar_lea.vmem [#allocation0], 208
    %s445 = scalar_lea.vmem %s444, 7 [#allocation0]
    %v446 = vld [vmem:[%s445] ss:$-1 sm:$0xff]
    %v447 = vrot.slane %v446, 6
    %448 = vst [vmem:[%s443] sm:$0xff] %v447
    %s449 = scalar_lea.vmem %s444, 8 [#allocation0]
    %s450 = scalar_lea.vmem %s449, 7 [#allocation0]
    %v451 = vld [vmem:[%s450] ss:$-1 sm:$0xff]
    %v452 = vrot.slane %v451, 6
    %v453 = vlaneseq
    %v454 = vshrl.u32 %v453, 7
    %vm455 = vcmp.lt.s32.totalorder %v454, 2
    %456 = vst.msk [vmem:[%s443] sm:$0xff] %vm455, %v452
    %s457 = scalar_lea.vmem [#allocation2], 112
    %s458 = scalar_lea.vmem [#allocation0], 224
    %s459 = scalar_lea.vmem %s458, 7 [#allocation0]
    %v460 = vld [vmem:[%s459] ss:$-1 sm:$0xff]
    %v461 = vrot.slane %v460, 6
    %462 = vst [vmem:[%s457] sm:$0xff] %v461
    %s463 = scalar_lea.vmem %s458, 8 [#allocation0]
    %s464 = scalar_lea.vmem %s463, 7 [#allocation0]
    %v465 = vld [vmem:[%s464] ss:$-1 sm:$0xff]
    %v466 = vrot.slane %v465, 6
    %v467 = vlaneseq
    %v468 = vshrl.u32 %v467, 7
    %vm469 = vcmp.lt.s32.totalorder %v468, 2
    %470 = vst.msk [vmem:[%s457] sm:$0xff] %vm469, %v466
    %s471 = scalar_lea.vmem [#allocation2], 120
    %s472 = scalar_lea.vmem [#allocation0], 240
    %s473 = scalar_lea.vmem %s472, 7 [#allocation0]
    %v474 = vld [vmem:[%s473] ss:$-1 sm:$0xff]
    %v475 = vrot.slane %v474, 6
    %476 = vst [vmem:[%s471] sm:$0xff] %v475
    %s477 = scalar_lea.vmem %s472, 8 [#allocation0]
    %s478 = scalar_lea.vmem %s477, 7 [#allocation0]
    %v479 = vld [vmem:[%s478] ss:$-1 sm:$0xff]
    %v480 = vrot.slane %v479, 6
    %v481 = vlaneseq
    %v482 = vshrl.u32 %v481, 7
    %vm483 = vcmp.lt.s32.totalorder %v482, 2
    %484 = vst.msk [vmem:[%s471] sm:$0xff] %vm483, %v480
    %s486 = sshll.u32 1, 2
    %s487 = ssub.s32 %s486, 1
    %v489 = vld [vmem:[#allocation2] sm:%s487]
    %s490 = sshll.u32 1, 2
    %s491 = ssub.s32 %s490, 1
    %492 = vst [vmem:[#allocation3] sm:%s491] %v489
    %s493 = scalar_lea.vmem [#allocation2], 8
    %v494 = vld [vmem:[%s493] sm:%s487]
    %s495 = sshll.u32 1, 2
    %s496 = ssub.s32 %s495, 1
    %s497 = scalar_lea.vmem [#allocation3], 2
    %498 = vst [vmem:[%s497] sm:%s496] %v494
    %s499 = scalar_lea.vmem [#allocation2], 16
    %v500 = vld [vmem:[%s499] sm:%s487]
    %s501 = sshll.u32 1, 2
    %s502 = ssub.s32 %s501, 1
    %s503 = smul.addr 2, 2
    %s504 = scalar_lea.vmem [#allocation3], %s503
    %505 = vst [vmem:[%s504] sm:%s502] %v500
    %s506 = scalar_lea.vmem [#allocation2], 24
    %v507 = vld [vmem:[%s506] sm:%s487]
    %s508 = sshll.u32 1, 2
    %s509 = ssub.s32 %s508, 1
    %s510 = smul.addr 2, 3
    %s511 = scalar_lea.vmem [#allocation3], %s510
    %512 = vst [vmem:[%s511] sm:%s509] %v507
    %s513 = scalar_lea.vmem [#allocation2], 32
    %v514 = vld [vmem:[%s513] sm:%s487]
    %s515 = sshll.u32 1, 2
    %s516 = ssub.s32 %s515, 1
    %s517 = smul.addr 2, 4
    %s518 = scalar_lea.vmem [#allocation3], %s517
    %519 = vst [vmem:[%s518] sm:%s516] %v514
    %s520 = scalar_lea.vmem [#allocation2], 40
    %v521 = vld [vmem:[%s520] sm:%s487]
    %s522 = sshll.u32 1, 2
    %s523 = ssub.s32 %s522, 1
    %s524 = smul.addr 2, 5
    %s525 = scalar_lea.vmem [#allocation3], %s524
    %526 = vst [vmem:[%s525] sm:%s523] %v521
    %s527 = scalar_lea.vmem [#allocation2], 48
    %v528 = vld [vmem:[%s527] sm:%s487]
    %s529 = sshll.u32 1, 2
    %s530 = ssub.s32 %s529, 1
    %s531 = smul.addr 2, 6
    %s532 = scalar_lea.vmem [#allocation3], %s531
    %533 = vst [vmem:[%s532] sm:%s530] %v528
    %s534 = scalar_lea.vmem [#allocation2], 56
    %v535 = vld [vmem:[%s534] sm:%s487]
    %s536 = sshll.u32 1, 2
    %s537 = ssub.s32 %s536, 1
    %s538 = smul.addr 2, 7
    %s539 = scalar_lea.vmem [#allocation3], %s538
    %540 = vst [vmem:[%s539] sm:%s537] %v535
    %s541 = scalar_lea.vmem [#allocation2], 64
    %v542 = vld [vmem:[%s541] sm:%s487]
    %s543 = sshll.u32 1, 2
    %s544 = ssub.s32 %s543, 1
    %s545 = smul.addr 2, 8
    %s546 = scalar_lea.vmem [#allocation3], %s545
    %547 = vst [vmem:[%s546] sm:%s544] %v542
    %s548 = scalar_lea.vmem [#allocation2], 72
    %v549 = vld [vmem:[%s548] sm:%s487]
    %s550 = sshll.u32 1, 2
    %s551 = ssub.s32 %s550, 1
    %s552 = smul.addr 2, 9
    %s553 = scalar_lea.vmem [#allocation3], %s552
    %554 = vst [vmem:[%s553] sm:%s551] %v549
    %s555 = scalar_lea.vmem [#allocation2], 80
    %v556 = vld [vmem:[%s555] sm:%s487]
    %s557 = sshll.u32 1, 2
    %s558 = ssub.s32 %s557, 1
    %s559 = smul.addr 2, 10
    %s560 = scalar_lea.vmem [#allocation3], %s559
    %561 = vst [vmem:[%s560] sm:%s558] %v556
    %s562 = scalar_lea.vmem [#allocation2], 88
    %v563 = vld [vmem:[%s562] sm:%s487]
    %s564 = sshll.u32 1, 2
    %s565 = ssub.s32 %s564, 1
    %s566 = smul.addr 2, 11
    %s567 = scalar_lea.vmem [#allocation3], %s566
    %568 = vst [vmem:[%s567] sm:%s565] %v563
    %s569 = scalar_lea.vmem [#allocation2], 96
    %v570 = vld [vmem:[%s569] sm:%s487]
    %s571 = sshll.u32 1, 2
    %s572 = ssub.s32 %s571, 1
    %s573 = smul.addr 2, 12
    %s574 = scalar_lea.vmem [#allocation3], %s573
    %575 = vst [vmem:[%s574] sm:%s572] %v570
    %s576 = scalar_lea.vmem [#allocation2], 104
    %v577 = vld [vmem:[%s576] sm:%s487]
    %s578 = sshll.u32 1, 2
    %s579 = ssub.s32 %s578, 1
    %s580 = smul.addr 2, 13
    %s581 = scalar_lea.vmem [#allocation3], %s580
    %582 = vst [vmem:[%s581] sm:%s579] %v577
    %s583 = scalar_lea.vmem [#allocation2], 112
    %v584 = vld [vmem:[%s583] sm:%s487]
    %s585 = sshll.u32 1, 2
    %s586 = ssub.s32 %s585, 1
    %s587 = smul.addr 2, 14
    %s588 = scalar_lea.vmem [#allocation3], %s587
    %589 = vst [vmem:[%s588] sm:%s586] %v584
    %s590 = scalar_lea.vmem [#allocation2], 120
    %v591 = vld [vmem:[%s590] sm:%s487]
    %s592 = sshll.u32 1, 2
    %s593 = ssub.s32 %s592, 1
    %s594 = smul.addr 2, 15
    %s595 = scalar_lea.vmem [#allocation3], %s594
    %596 = vst [vmem:[%s595] sm:%s593] %v591
    // Predicated region
    $region39: #{reverse.9} parent=1 // pred_check
      _
    $region40: #{reverse.9} parent=1 // pred_check_branch
      %598 = sbr.rel (0) target = $region42
    $region41: #{reverse.9} parent=1 // pred_region
      // Predicated region
      $region43: #{reverse.9} parent=41 // pred_check
        _
      $region44: #{reverse.9} parent=41 // pred_check_branch
        %600 = sbr.rel target = $region46
      $region45: #{reverse.9} parent=41 // pred_region
        // Predicated region
        $region58: #{reverse.9} parent=45 // pred_check
          _
        $region59: #{reverse.9} parent=45 // pred_check_branch
          %646 = sbr.rel (0) target = $region61
        $region60: #{reverse.9} parent=45 // pred_region
          loop: start=0, step=1, limit=1
          $region62: #{reverse.9} parent=60 // loop_pre_header
            _
          $region63: #{reverse.9} parent=60 // loop_header
            %s648 = sphi 0, %s652
            %p649 = scmp.ge.s32.totalorder %s648, 1
            %s653 = sphi [#allocation3], [#allocation3]
            %s654 = sphi %s1, %s1
          $region64: #{reverse.9} parent=60 // loop_header_branch
            %651 = sbr.rel (%p649) target = $region68
          $region65: #{reverse.9} parent=60 // loop_body
            _
          $region66: #{reverse.9} parent=60 // loop_footer
            %s652 = sadd.s32 1, %s648
          $region67: #{reverse.9} parent=60 // loop_footer_branch
            %647 = sbr.rel target = $region63
          $region68: #{reverse.9} parent=60 // loop_exit
            _
          %s656 = ssub.s32 4, 1
          loop: start=0, step=1, limit=1
          $region69: #{reverse.9} parent=60 // loop_pre_header
            _
          $region70: #{reverse.9} parent=60 // loop_header
            %s658 = sphi 0, %s662
            %p659 = scmp.ge.s32.totalorder %s658, 1
            %s663 = sphi [#allocation3], [#allocation3]
            %s664 = sphi %s1, %s1
          $region71: #{reverse.9} parent=60 // loop_header_branch
            %661 = sbr.rel (%p659) target = $region75
          $region72: #{reverse.9} parent=60 // loop_body
            %v665 = vld [vmem:[%s663] sm:%s656]
            %666 = vst [vmem:[%s664] sm:%s656] %v665
            %v667 = vld [vmem:[%s663 + $0x2] sm:%s656]
            %668 = vst [vmem:[%s664 + $0x2] sm:%s656] %v667
            %v669 = vld [vmem:[%s663 + $0x4] sm:%s656]
            %670 = vst [vmem:[%s664 + $0x4] sm:%s656] %v669
            %v671 = vld [vmem:[%s663 + $0x6] sm:%s656]
            %672 = vst [vmem:[%s664 + $0x6] sm:%s656] %v671
            %v673 = vld [vmem:[%s663 + $0x8] sm:%s656]
            %674 = vst [vmem:[%s664 + $0x8] sm:%s656] %v673
            %v675 = vld [vmem:[%s663 + $0xa] sm:%s656]
            %676 = vst [vmem:[%s664 + $0xa] sm:%s656] %v675
            %v677 = vld [vmem:[%s663 + $0xc] sm:%s656]
            %678 = vst [vmem:[%s664 + $0xc] sm:%s656] %v677
            %v679 = vld [vmem:[%s663 + $0xe] sm:%s656]
            %680 = vst [vmem:[%s664 + $0xe] sm:%s656] %v679
            %v681 = vld [vmem:[%s663 + $0x10] sm:%s656]
            %682 = vst [vmem:[%s664 + $0x10] sm:%s656] %v681
            %v683 = vld [vmem:[%s663 + $0x12] sm:%s656]
            %684 = vst [vmem:[%s664 + $0x12] sm:%s656] %v683
            %v685 = vld [vmem:[%s663 + $0x14] sm:%s656]
            %686 = vst [vmem:[%s664 + $0x14] sm:%s656] %v685
            %v687 = vld [vmem:[%s663 + $0x16] sm:%s656]
            %688 = vst [vmem:[%s664 + $0x16] sm:%s656] %v687
            %v689 = vld [vmem:[%s663 + $0x18] sm:%s656]
            %690 = vst [vmem:[%s664 + $0x18] sm:%s656] %v689
            %v691 = vld [vmem:[%s663 + $0x1a] sm:%s656]
            %692 = vst [vmem:[%s664 + $0x1a] sm:%s656] %v691
            %v693 = vld [vmem:[%s663 + $0x1c] sm:%s656]
            %694 = vst [vmem:[%s664 + $0x1c] sm:%s656] %v693
            %v695 = vld [vmem:[%s663 + $0x1e] sm:%s656]
            %696 = vst [vmem:[%s664 + $0x1e] sm:%s656] %v695
          $region73: #{reverse.9} parent=60 // loop_footer
            %s662 = sadd.s32 1, %s658
          $region74: #{reverse.9} parent=60 // loop_footer_branch
            %657 = sbr.rel target = $region70
          $region75: #{reverse.9} parent=60 // loop_exit
            _
        $region61: #{reverse.9} parent=45 // pred_fallthru
          _
      $region46: #{reverse.9} parent=41 // pred_fallthru
        _
      // Predicated region
      $region47: #{reverse.9} parent=41 // pred_check
        _
      $region48: #{reverse.9} parent=41 // pred_check_branch
        %602 = sbr.rel (0) target = $region50
      $region49: #{reverse.9} parent=41 // pred_region
        %s604 = ssub.s32 4, 1
        loop: start=0, step=1, limit=1
        $region51: #{reverse.9} parent=49 // loop_pre_header
          _
        $region52: #{reverse.9} parent=49 // loop_header
          %s606 = sphi 0, %s610
          %p607 = scmp.ge.s32.totalorder %s606, 1
          %s611 = sphi [#allocation3], [#allocation3]
          %s612 = sphi %s1, %s1
        $region53: #{reverse.9} parent=49 // loop_header_branch
          %609 = sbr.rel (%p607) target = $region57
        $region54: #{reverse.9} parent=49 // loop_body
          %v613 = vld [vmem:[%s611] sm:%s604]
          %614 = vst [vmem:[%s612] sm:%s604] %v613
          %v615 = vld [vmem:[%s611 + $0x2] sm:%s604]
          %616 = vst [vmem:[%s612 + $0x2] sm:%s604] %v615
          %v617 = vld [vmem:[%s611 + $0x4] sm:%s604]
          %618 = vst [vmem:[%s612 + $0x4] sm:%s604] %v617
          %v619 = vld [vmem:[%s611 + $0x6] sm:%s604]
          %620 = vst [vmem:[%s612 + $0x6] sm:%s604] %v619
          %v621 = vld [vmem:[%s611 + $0x8] sm:%s604]
          %622 = vst [vmem:[%s612 + $0x8] sm:%s604] %v621
          %v623 = vld [vmem:[%s611 + $0xa] sm:%s604]
          %624 = vst [vmem:[%s612 + $0xa] sm:%s604] %v623
          %v625 = vld [vmem:[%s611 + $0xc] sm:%s604]
          %626 = vst [vmem:[%s612 + $0xc] sm:%s604] %v625
          %v627 = vld [vmem:[%s611 + $0xe] sm:%s604]
          %628 = vst [vmem:[%s612 + $0xe] sm:%s604] %v627
          %v629 = vld [vmem:[%s611 + $0x10] sm:%s604]
          %630 = vst [vmem:[%s612 + $0x10] sm:%s604] %v629
          %v631 = vld [vmem:[%s611 + $0x12] sm:%s604]
          %632 = vst [vmem:[%s612 + $0x12] sm:%s604] %v631
          %v633 = vld [vmem:[%s611 + $0x14] sm:%s604]
          %634 = vst [vmem:[%s612 + $0x14] sm:%s604] %v633
          %v635 = vld [vmem:[%s611 + $0x16] sm:%s604]
          %636 = vst [vmem:[%s612 + $0x16] sm:%s604] %v635
          %v637 = vld [vmem:[%s611 + $0x18] sm:%s604]
          %638 = vst [vmem:[%s612 + $0x18] sm:%s604] %v637
          %v639 = vld [vmem:[%s611 + $0x1a] sm:%s604]
          %640 = vst [vmem:[%s612 + $0x1a] sm:%s604] %v639
          %v641 = vld [vmem:[%s611 + $0x1c] sm:%s604]
          %642 = vst [vmem:[%s612 + $0x1c] sm:%s604] %v641
          %v643 = vld [vmem:[%s611 + $0x1e] sm:%s604]
          %644 = vst [vmem:[%s612 + $0x1e] sm:%s604] %v643
        $region55: #{reverse.9} parent=49 // loop_footer
          %s610 = sadd.s32 1, %s606
        $region56: #{reverse.9} parent=49 // loop_footer_branch
          %605 = sbr.rel target = $region52
        $region57: #{reverse.9} parent=49 // loop_exit
          _
      $region50: #{reverse.9} parent=41 // pred_fallthru
        _
    $region42: #{reverse.9} parent=1 // pred_fallthru
      _
    %697 = vnop

// kernel: reverse.8
$region0: #{reverse.8}
  %s0 = inlined_call_operand.vmem [shape: f32[2,8,7,2], index: 0, kind: input, shape index: {}]
  %s1 = inlined_call_operand.vmem [shape: f32[2,8,7,2], index: 1, kind: output, shape index: {}]
  $region1: #{reverse.8} parent=0
    #allocation0 [shape = 'u8[131072]{0}', space=vmem, size = 0x20000, scoped, tag = 'operand span for operand 0']
    #allocation1 [shape = 'u8[32768]{0}', space=vmem, size = 0x8000, scoped, tag = 'packed  for operand 0']
    #allocation2 [shape = 'u8[65536]{0}', space=vmem, size = 0x10000, scoped, tag = 'operand span for operand 1']
    #allocation3 [shape = 'u8[16384]{0}', space=vmem, size = 0x4000, scoped, tag = 'packed  for operand 1']
    %s2 = scalar_lea.vmem [#allocation1], 2
    // Predicated region
    $region2: #{reverse.8} parent=1 // pred_check
      _
    $region3: #{reverse.8} parent=1 // pred_check_branch
      %4 = sbr.rel (0) target = $region5
    $region4: #{reverse.8} parent=1 // pred_region
      // Predicated region
      $region6: #{reverse.8} parent=4 // pred_check
        _
      $region7: #{reverse.8} parent=4 // pred_check_branch
        %6 = sbr.rel target = $region9
      $region8: #{reverse.8} parent=4 // pred_region
        // Predicated region
        $region21: #{reverse.8} parent=8 // pred_check
          _
        $region22: #{reverse.8} parent=8 // pred_check_branch
          %52 = sbr.rel (0) target = $region24
        $region23: #{reverse.8} parent=8 // pred_region
          loop: start=0, step=1, limit=1
          $region25: #{reverse.8} parent=23 // loop_pre_header
            _
          $region26: #{reverse.8} parent=23 // loop_header
            %s54 = sphi 0, %s58
            %p55 = scmp.ge.s32.totalorder %s54, 1
            %s59 = sphi %s0, %s0
            %s60 = sphi %s2, %s2
          $region27: #{reverse.8} parent=23 // loop_header_branch
            %57 = sbr.rel (%p55) target = $region31
          $region28: #{reverse.8} parent=23 // loop_body
            _
          $region29: #{reverse.8} parent=23 // loop_footer
            %s58 = sadd.s32 1, %s54
          $region30: #{reverse.8} parent=23 // loop_footer_branch
            %53 = sbr.rel target = $region26
          $region31: #{reverse.8} parent=23 // loop_exit
            _
          %s62 = ssub.s32 4, 1
          loop: start=0, step=1, limit=1
          $region32: #{reverse.8} parent=23 // loop_pre_header
            _
          $region33: #{reverse.8} parent=23 // loop_header
            %s64 = sphi 0, %s68
            %p65 = scmp.ge.s32.totalorder %s64, 1
            %s69 = sphi %s0, %s0
            %s70 = sphi %s2, %s2
          $region34: #{reverse.8} parent=23 // loop_header_branch
            %67 = sbr.rel (%p65) target = $region38
          $region35: #{reverse.8} parent=23 // loop_body
            %v71 = vld [vmem:[%s69] sm:%s62]
            %72 = vst [vmem:[%s70] sm:%s62] %v71
            %v73 = vld [vmem:[%s69 + $0x2] sm:%s62]
            %74 = vst [vmem:[%s70 + $0x4] sm:%s62] %v73
            %v75 = vld [vmem:[%s69 + $0x4] sm:%s62]
            %76 = vst [vmem:[%s70 + $0x8] sm:%s62] %v75
            %v77 = vld [vmem:[%s69 + $0x6] sm:%s62]
            %78 = vst [vmem:[%s70 + $0xc] sm:%s62] %v77
            %v79 = vld [vmem:[%s69 + $0x8] sm:%s62]
            %80 = vst [vmem:[%s70 + $0x10] sm:%s62] %v79
            %v81 = vld [vmem:[%s69 + $0xa] sm:%s62]
            %82 = vst [vmem:[%s70 + $0x14] sm:%s62] %v81
            %v83 = vld [vmem:[%s69 + $0xc] sm:%s62]
            %84 = vst [vmem:[%s70 + $0x18] sm:%s62] %v83
            %v85 = vld [vmem:[%s69 + $0xe] sm:%s62]
            %86 = vst [vmem:[%s70 + $0x1c] sm:%s62] %v85
            %v87 = vld [vmem:[%s69 + $0x10] sm:%s62]
            %88 = vst [vmem:[%s70 + $0x20] sm:%s62] %v87
            %v89 = vld [vmem:[%s69 + $0x12] sm:%s62]
            %90 = vst [vmem:[%s70 + $0x24] sm:%s62] %v89
            %v91 = vld [vmem:[%s69 + $0x14] sm:%s62]
            %92 = vst [vmem:[%s70 + $0x28] sm:%s62] %v91
            %v93 = vld [vmem:[%s69 + $0x16] sm:%s62]
            %94 = vst [vmem:[%s70 + $0x2c] sm:%s62] %v93
            %v95 = vld [vmem:[%s69 + $0x18] sm:%s62]
            %96 = vst [vmem:[%s70 + $0x30] sm:%s62] %v95
            %v97 = vld [vmem:[%s69 + $0x1a] sm:%s62]
            %98 = vst [vmem:[%s70 + $0x34] sm:%s62] %v97
            %v99 = vld [vmem:[%s69 + $0x1c] sm:%s62]
            %100 = vst [vmem:[%s70 + $0x38] sm:%s62] %v99
            %v101 = vld [vmem:[%s69 + $0x1e] sm:%s62]
            %102 = vst [vmem:[%s70 + $0x3c] sm:%s62] %v101
          $region36: #{reverse.8} parent=23 // loop_footer
            %s68 = sadd.s32 1, %s64
          $region37: #{reverse.8} parent=23 // loop_footer_branch
            %63 = sbr.rel target = $region33
          $region38: #{reverse.8} parent=23 // loop_exit
            _
        $region24: #{reverse.8} parent=8 // pred_fallthru
          _
      $region9: #{reverse.8} parent=4 // pred_fallthru
        _
      // Predicated region
      $region10: #{reverse.8} parent=4 // pred_check
        _
      $region11: #{reverse.8} parent=4 // pred_check_branch
        %8 = sbr.rel (0) target = $region13
      $region12: #{reverse.8} parent=4 // pred_region
        %s10 = ssub.s32 4, 1
        loop: start=0, step=1, limit=1
        $region14: #{reverse.8} parent=12 // loop_pre_header
          _
        $region15: #{reverse.8} parent=12 // loop_header
          %s12 = sphi 0, %s16
          %p13 = scmp.ge.s32.totalorder %s12, 1
          %s17 = sphi %s0, %s0
          %s18 = sphi %s2, %s2
        $region16: #{reverse.8} parent=12 // loop_header_branch
          %15 = sbr.rel (%p13) target = $region20
        $region17: #{reverse.8} parent=12 // loop_body
          %v19 = vld [vmem:[%s17] sm:%s10]
          %20 = vst [vmem:[%s18] sm:%s10] %v19
          %v21 = vld [vmem:[%s17 + $0x2] sm:%s10]
          %22 = vst [vmem:[%s18 + $0x4] sm:%s10] %v21
          %v23 = vld [vmem:[%s17 + $0x4] sm:%s10]
          %24 = vst [vmem:[%s18 + $0x8] sm:%s10] %v23
          %v25 = vld [vmem:[%s17 + $0x6] sm:%s10]
          %26 = vst [vmem:[%s18 + $0xc] sm:%s10] %v25
          %v27 = vld [vmem:[%s17 + $0x8] sm:%s10]
          %28 = vst [vmem:[%s18 + $0x10] sm:%s10] %v27
          %v29 = vld [vmem:[%s17 + $0xa] sm:%s10]
          %30 = vst [vmem:[%s18 + $0x14] sm:%s10] %v29
          %v31 = vld [vmem:[%s17 + $0xc] sm:%s10]
          %32 = vst [vmem:[%s18 + $0x18] sm:%s10] %v31
          %v33 = vld [vmem:[%s17 + $0xe] sm:%s10]
          %34 = vst [vmem:[%s18 + $0x1c] sm:%s10] %v33
          %v35 = vld [vmem:[%s17 + $0x10] sm:%s10]
          %36 = vst [vmem:[%s18 + $0x20] sm:%s10] %v35
          %v37 = vld [vmem:[%s17 + $0x12] sm:%s10]
          %38 = vst [vmem:[%s18 + $0x24] sm:%s10] %v37
          %v39 = vld [vmem:[%s17 + $0x14] sm:%s10]
          %40 = vst [vmem:[%s18 + $0x28] sm:%s10] %v39
          %v41 = vld [vmem:[%s17 + $0x16] sm:%s10]
          %42 = vst [vmem:[%s18 + $0x2c] sm:%s10] %v41
          %v43 = vld [vmem:[%s17 + $0x18] sm:%s10]
          %44 = vst [vmem:[%s18 + $0x30] sm:%s10] %v43
          %v45 = vld [vmem:[%s17 + $0x1a] sm:%s10]
          %46 = vst [vmem:[%s18 + $0x34] sm:%s10] %v45
          %v47 = vld [vmem:[%s17 + $0x1c] sm:%s10]
          %48 = vst [vmem:[%s18 + $0x38] sm:%s10] %v47
          %v49 = vld [vmem:[%s17 + $0x1e] sm:%s10]
          %50 = vst [vmem:[%s18 + $0x3c] sm:%s10] %v49
        $region18: #{reverse.8} parent=12 // loop_footer
          %s16 = sadd.s32 1, %s12
        $region19: #{reverse.8} parent=12 // loop_footer_branch
          %11 = sbr.rel target = $region15
        $region20: #{reverse.8} parent=12 // loop_exit
          _
      $region13: #{reverse.8} parent=4 // pred_fallthru
        _
    $region5: #{reverse.8} parent=1 // pred_fallthru
      _
    %103 = vnop
    %s105 = sshll.u32 1, 2
    %s106 = ssub.s32 %s105, 1
    %s107 = smul.addr 2, 31
    %s108 = scalar_lea.vmem [#allocation1], %s107
    %v109 = vld [vmem:[%s108] sm:%s106]
    %s110 = scalar_lea.vmem [#allocation0], 248
    %111 = vst [vmem:[%s110] sm:%s106] %v109
    %s112 = smul.addr 2, 30
    %s113 = scalar_lea.vmem [#allocation1], %s112
    %v114 = vld [vmem:[%s113] sm:%s106]
    %s115 = scalar_lea.vmem [#allocation0], 240
    %116 = vst [vmem:[%s115] sm:%s106] %v114
    %s117 = smul.addr 2, 29
    %s118 = scalar_lea.vmem [#allocation1], %s117
    %v119 = vld [vmem:[%s118] sm:%s106]
    %s120 = scalar_lea.vmem [#allocation0], 232
    %121 = vst [vmem:[%s120] sm:%s106] %v119
    %s122 = smul.addr 2, 28
    %s123 = scalar_lea.vmem [#allocation1], %s122
    %v124 = vld [vmem:[%s123] sm:%s106]
    %s125 = scalar_lea.vmem [#allocation0], 224
    %126 = vst [vmem:[%s125] sm:%s106] %v124
    %s127 = smul.addr 2, 27
    %s128 = scalar_lea.vmem [#allocation1], %s127
    %v129 = vld [vmem:[%s128] sm:%s106]
    %s130 = scalar_lea.vmem [#allocation0], 216
    %131 = vst [vmem:[%s130] sm:%s106] %v129
    %s132 = smul.addr 2, 26
    %s133 = scalar_lea.vmem [#allocation1], %s132
    %v134 = vld [vmem:[%s133] sm:%s106]
    %s135 = scalar_lea.vmem [#allocation0], 208
    %136 = vst [vmem:[%s135] sm:%s106] %v134
    %s137 = smul.addr 2, 25
    %s138 = scalar_lea.vmem [#allocation1], %s137
    %v139 = vld [vmem:[%s138] sm:%s106]
    %s140 = scalar_lea.vmem [#allocation0], 200
    %141 = vst [vmem:[%s140] sm:%s106] %v139
    %s142 = smul.addr 2, 24
    %s143 = scalar_lea.vmem [#allocation1], %s142
    %v144 = vld [vmem:[%s143] sm:%s106]
    %s145 = scalar_lea.vmem [#allocation0], 192
    %146 = vst [vmem:[%s145] sm:%s106] %v144
    %s147 = smul.addr 2, 23
    %s148 = scalar_lea.vmem [#allocation1], %s147
    %v149 = vld [vmem:[%s148] sm:%s106]
    %s150 = scalar_lea.vmem [#allocation0], 184
    %151 = vst [vmem:[%s150] sm:%s106] %v149
    %s152 = smul.addr 2, 22
    %s153 = scalar_lea.vmem [#allocation1], %s152
    %v154 = vld [vmem:[%s153] sm:%s106]
    %s155 = scalar_lea.vmem [#allocation0], 176
    %156 = vst [vmem:[%s155] sm:%s106] %v154
    %s157 = smul.addr 2, 21
    %s158 = scalar_lea.vmem [#allocation1], %s157
    %v159 = vld [vmem:[%s158] sm:%s106]
    %s160 = scalar_lea.vmem [#allocation0], 168
    %161 = vst [vmem:[%s160] sm:%s106] %v159
    %s162 = smul.addr 2, 20
    %s163 = scalar_lea.vmem [#allocation1], %s162
    %v164 = vld [vmem:[%s163] sm:%s106]
    %s165 = scalar_lea.vmem [#allocation0], 160
    %166 = vst [vmem:[%s165] sm:%s106] %v164
    %s167 = smul.addr 2, 19
    %s168 = scalar_lea.vmem [#allocation1], %s167
    %v169 = vld [vmem:[%s168] sm:%s106]
    %s170 = scalar_lea.vmem [#allocation0], 152
    %171 = vst [vmem:[%s170] sm:%s106] %v169
    %s172 = smul.addr 2, 18
    %s173 = scalar_lea.vmem [#allocation1], %s172
    %v174 = vld [vmem:[%s173] sm:%s106]
    %s175 = scalar_lea.vmem [#allocation0], 144
    %176 = vst [vmem:[%s175] sm:%s106] %v174
    %s177 = smul.addr 2, 17
    %s178 = scalar_lea.vmem [#allocation1], %s177
    %v179 = vld [vmem:[%s178] sm:%s106]
    %s180 = scalar_lea.vmem [#allocation0], 136
    %181 = vst [vmem:[%s180] sm:%s106] %v179
    %s182 = smul.addr 2, 16
    %s183 = scalar_lea.vmem [#allocation1], %s182
    %v184 = vld [vmem:[%s183] sm:%s106]
    %s185 = scalar_lea.vmem [#allocation0], 128
    %186 = vst [vmem:[%s185] sm:%s106] %v184
    %s187 = smul.addr 2, 15
    %s188 = scalar_lea.vmem [#allocation1], %s187
    %v189 = vld [vmem:[%s188] sm:%s106]
    %s190 = scalar_lea.vmem [#allocation0], 120
    %191 = vst [vmem:[%s190] sm:%s106] %v189
    %s192 = smul.addr 2, 14
    %s193 = scalar_lea.vmem [#allocation1], %s192
    %v194 = vld [vmem:[%s193] sm:%s106]
    %s195 = scalar_lea.vmem [#allocation0], 112
    %196 = vst [vmem:[%s195] sm:%s106] %v194
    %s197 = smul.addr 2, 13
    %s198 = scalar_lea.vmem [#allocation1], %s197
    %v199 = vld [vmem:[%s198] sm:%s106]
    %s200 = scalar_lea.vmem [#allocation0], 104
    %201 = vst [vmem:[%s200] sm:%s106] %v199
    %s202 = smul.addr 2, 12
    %s203 = scalar_lea.vmem [#allocation1], %s202
    %v204 = vld [vmem:[%s203] sm:%s106]
    %s205 = scalar_lea.vmem [#allocation0], 96
    %206 = vst [vmem:[%s205] sm:%s106] %v204
    %s207 = smul.addr 2, 11
    %s208 = scalar_lea.vmem [#allocation1], %s207
    %v209 = vld [vmem:[%s208] sm:%s106]
    %s210 = scalar_lea.vmem [#allocation0], 88
    %211 = vst [vmem:[%s210] sm:%s106] %v209
    %s212 = smul.addr 2, 10
    %s213 = scalar_lea.vmem [#allocation1], %s212
    %v214 = vld [vmem:[%s213] sm:%s106]
    %s215 = scalar_lea.vmem [#allocation0], 80
    %216 = vst [vmem:[%s215] sm:%s106] %v214
    %s217 = smul.addr 2, 9
    %s218 = scalar_lea.vmem [#allocation1], %s217
    %v219 = vld [vmem:[%s218] sm:%s106]
    %s220 = scalar_lea.vmem [#allocation0], 72
    %221 = vst [vmem:[%s220] sm:%s106] %v219
    %s222 = smul.addr 2, 8
    %s223 = scalar_lea.vmem [#allocation1], %s222
    %v224 = vld [vmem:[%s223] sm:%s106]
    %s225 = scalar_lea.vmem [#allocation0], 64
    %226 = vst [vmem:[%s225] sm:%s106] %v224
    %s227 = smul.addr 2, 7
    %s228 = scalar_lea.vmem [#allocation1], %s227
    %v229 = vld [vmem:[%s228] sm:%s106]
    %s230 = scalar_lea.vmem [#allocation0], 56
    %231 = vst [vmem:[%s230] sm:%s106] %v229
    %s232 = smul.addr 2, 6
    %s233 = scalar_lea.vmem [#allocation1], %s232
    %v234 = vld [vmem:[%s233] sm:%s106]
    %s235 = scalar_lea.vmem [#allocation0], 48
    %236 = vst [vmem:[%s235] sm:%s106] %v234
    %s237 = smul.addr 2, 5
    %s238 = scalar_lea.vmem [#allocation1], %s237
    %v239 = vld [vmem:[%s238] sm:%s106]
    %s240 = scalar_lea.vmem [#allocation0], 40
    %241 = vst [vmem:[%s240] sm:%s106] %v239
    %s242 = smul.addr 2, 4
    %s243 = scalar_lea.vmem [#allocation1], %s242
    %v244 = vld [vmem:[%s243] sm:%s106]
    %s245 = scalar_lea.vmem [#allocation0], 32
    %246 = vst [vmem:[%s245] sm:%s106] %v244
    %s247 = smul.addr 2, 3
    %s248 = scalar_lea.vmem [#allocation1], %s247
    %v249 = vld [vmem:[%s248] sm:%s106]
    %s250 = scalar_lea.vmem [#allocation0], 24
    %251 = vst [vmem:[%s250] sm:%s106] %v249
    %s252 = smul.addr 2, 2
    %s253 = scalar_lea.vmem [#allocation1], %s252
    %v254 = vld [vmem:[%s253] sm:%s106]
    %s255 = scalar_lea.vmem [#allocation0], 16
    %256 = vst [vmem:[%s255] sm:%s106] %v254
    %s257 = scalar_lea.vmem [#allocation1], 2
    %v258 = vld [vmem:[%s257] sm:%s106]
    %s259 = scalar_lea.vmem [#allocation0], 8
    %260 = vst [vmem:[%s259] sm:%s106] %v258
    %v261 = vld [vmem:[#allocation1] sm:%s106]
    %262 = vst [vmem:[#allocation0] sm:%s106] %v261
    %s263 = scalar_lea.vmem [#allocation0], 7
    %v264 = vld [vmem:[%s263] ss:$-1 sm:$0xff]
    %v265 = vrot.slane %v264, 6
    %266 = vst [vmem:[#allocation2] sm:$0xff] %v265
    %s267 = scalar_lea.vmem [#allocation0], 8
    %s268 = scalar_lea.vmem %s267, 7 [#allocation0]
    %v269 = vld [vmem:[%s268] ss:$-1 sm:$0xff]
    %v270 = vrot.slane %v269, 6
    %v271 = vlaneseq
    %v272 = vshrl.u32 %v271, 7
    %vm273 = vcmp.lt.s32.totalorder %v272, 2
    %274 = vst.msk [vmem:[#allocation2] sm:$0xff] %vm273, %v270
    %s275 = scalar_lea.vmem [#allocation2], 8
    %s276 = scalar_lea.vmem [#allocation0], 16
    %s277 = scalar_lea.vmem %s276, 7 [#allocation0]
    %v278 = vld [vmem:[%s277] ss:$-1 sm:$0xff]
    %v279 = vrot.slane %v278, 6
    %280 = vst [vmem:[%s275] sm:$0xff] %v279
    %s281 = scalar_lea.vmem %s276, 8 [#allocation0]
    %s282 = scalar_lea.vmem %s281, 7 [#allocation0]
    %v283 = vld [vmem:[%s282] ss:$-1 sm:$0xff]
    %v284 = vrot.slane %v283, 6
    %v285 = vlaneseq
    %v286 = vshrl.u32 %v285, 7
    %vm287 = vcmp.lt.s32.totalorder %v286, 2
    %288 = vst.msk [vmem:[%s275] sm:$0xff] %vm287, %v284
    %s289 = scalar_lea.vmem [#allocation2], 16
    %s290 = scalar_lea.vmem [#allocation0], 32
    %s291 = scalar_lea.vmem %s290, 7 [#allocation0]
    %v292 = vld [vmem:[%s291] ss:$-1 sm:$0xff]
    %v293 = vrot.slane %v292, 6
    %294 = vst [vmem:[%s289] sm:$0xff] %v293
    %s295 = scalar_lea.vmem %s290, 8 [#allocation0]
    %s296 = scalar_lea.vmem %s295, 7 [#allocation0]
    %v297 = vld [vmem:[%s296] ss:$-1 sm:$0xff]
    %v298 = vrot.slane %v297, 6
    %v299 = vlaneseq
    %v300 = vshrl.u32 %v299, 7
    %vm301 = vcmp.lt.s32.totalorder %v300, 2
    %302 = vst.msk [vmem:[%s289] sm:$0xff] %vm301, %v298
    %s303 = scalar_lea.vmem [#allocation2], 24
    %s304 = scalar_lea.vmem [#allocation0], 48
    %s305 = scalar_lea.vmem %s304, 7 [#allocation0]
    %v306 = vld [vmem:[%s305] ss:$-1 sm:$0xff]
    %v307 = vrot.slane %v306, 6
    %308 = vst [vmem:[%s303] sm:$0xff] %v307
    %s309 = scalar_lea.vmem %s304, 8 [#allocation0]
    %s310 = scalar_lea.vmem %s309, 7 [#allocation0]
    %v311 = vld [vmem:[%s310] ss:$-1 sm:$0xff]
    %v312 = vrot.slane %v311, 6
    %v313 = vlaneseq
    %v314 = vshrl.u32 %v313, 7
    %vm315 = vcmp.lt.s32.totalorder %v314, 2
    %316 = vst.msk [vmem:[%s303] sm:$0xff] %vm315, %v312
    %s317 = scalar_lea.vmem [#allocation2], 32
    %s318 = scalar_lea.vmem [#allocation0], 64
    %s319 = scalar_lea.vmem %s318, 7 [#allocation0]
    %v320 = vld [vmem:[%s319] ss:$-1 sm:$0xff]
    %v321 = vrot.slane %v320, 6
    %322 = vst [vmem:[%s317] sm:$0xff] %v321
    %s323 = scalar_lea.vmem %s318, 8 [#allocation0]
    %s324 = scalar_lea.vmem %s323, 7 [#allocation0]
    %v325 = vld [vmem:[%s324] ss:$-1 sm:$0xff]
    %v326 = vrot.slane %v325, 6
    %v327 = vlaneseq
    %v328 = vshrl.u32 %v327, 7
    %vm329 = vcmp.lt.s32.totalorder %v328, 2
    %330 = vst.msk [vmem:[%s317] sm:$0xff] %vm329, %v326
    %s331 = scalar_lea.vmem [#allocation2], 40
    %s332 = scalar_lea.vmem [#allocation0], 80
    %s333 = scalar_lea.vmem %s332, 7 [#allocation0]
    %v334 = vld [vmem:[%s333] ss:$-1 sm:$0xff]
    %v335 = vrot.slane %v334, 6
    %336 = vst [vmem:[%s331] sm:$0xff] %v335
    %s337 = scalar_lea.vmem %s332, 8 [#allocation0]
    %s338 = scalar_lea.vmem %s337, 7 [#allocation0]
    %v339 = vld [vmem:[%s338] ss:$-1 sm:$0xff]
    %v340 = vrot.slane %v339, 6
    %v341 = vlaneseq
    %v342 = vshrl.u32 %v341, 7
    %vm343 = vcmp.lt.s32.totalorder %v342, 2
    %344 = vst.msk [vmem:[%s331] sm:$0xff] %vm343, %v340
    %s345 = scalar_lea.vmem [#allocation2], 48
    %s346 = scalar_lea.vmem [#allocation0], 96
    %s347 = scalar_lea.vmem %s346, 7 [#allocation0]
    %v348 = vld [vmem:[%s347] ss:$-1 sm:$0xff]
    %v349 = vrot.slane %v348, 6
    %350 = vst [vmem:[%s345] sm:$0xff] %v349
    %s351 = scalar_lea.vmem %s346, 8 [#allocation0]
    %s352 = scalar_lea.vmem %s351, 7 [#allocation0]
    %v353 = vld [vmem:[%s352] ss:$-1 sm:$0xff]
    %v354 = vrot.slane %v353, 6
    %v355 = vlaneseq
    %v356 = vshrl.u32 %v355, 7
    %vm357 = vcmp.lt.s32.totalorder %v356, 2
    %358 = vst.msk [vmem:[%s345] sm:$0xff] %vm357, %v354
    %s359 = scalar_lea.vmem [#allocation2], 56
    %s360 = scalar_lea.vmem [#allocation0], 112
    %s361 = scalar_lea.vmem %s360, 7 [#allocation0]
    %v362 = vld [vmem:[%s361] ss:$-1 sm:$0xff]
    %v363 = vrot.slane %v362, 6
    %364 = vst [vmem:[%s359] sm:$0xff] %v363
    %s365 = scalar_lea.vmem %s360, 8 [#allocation0]
    %s366 = scalar_lea.vmem %s365, 7 [#allocation0]
    %v367 = vld [vmem:[%s366] ss:$-1 sm:$0xff]
    %v368 = vrot.slane %v367, 6
    %v369 = vlaneseq
    %v370 = vshrl.u32 %v369, 7
    %vm371 = vcmp.lt.s32.totalorder %v370, 2
    %372 = vst.msk [vmem:[%s359] sm:$0xff] %vm371, %v368
    %s373 = scalar_lea.vmem [#allocation2], 64
    %s374 = scalar_lea.vmem [#allocation0], 128
    %s375 = scalar_lea.vmem %s374, 7 [#allocation0]
    %v376 = vld [vmem:[%s375] ss:$-1 sm:$0xff]
    %v377 = vrot.slane %v376, 6
    %378 = vst [vmem:[%s373] sm:$0xff] %v377
    %s379 = scalar_lea.vmem %s374, 8 [#allocation0]
    %s380 = scalar_lea.vmem %s379, 7 [#allocation0]
    %v381 = vld [vmem:[%s380] ss:$-1 sm:$0xff]
    %v382 = vrot.slane %v381, 6
    %v383 = vlaneseq
    %v384 = vshrl.u32 %v383, 7
    %vm385 = vcmp.lt.s32.totalorder %v384, 2
    %386 = vst.msk [vmem:[%s373] sm:$0xff] %vm385, %v382
    %s387 = scalar_lea.vmem [#allocation2], 72
    %s388 = scalar_lea.vmem [#allocation0], 144
    %s389 = scalar_lea.vmem %s388, 7 [#allocation0]
    %v390 = vld [vmem:[%s389] ss:$-1 sm:$0xff]
    %v391 = vrot.slane %v390, 6
    %392 = vst [vmem:[%s387] sm:$0xff] %v391
    %s393 = scalar_lea.vmem %s388, 8 [#allocation0]
    %s394 = scalar_lea.vmem %s393, 7 [#allocation0]
    %v395 = vld [vmem:[%s394] ss:$-1 sm:$0xff]
    %v396 = vrot.slane %v395, 6
    %v397 = vlaneseq
    %v398 = vshrl.u32 %v397, 7
    %vm399 = vcmp.lt.s32.totalorder %v398, 2
    %400 = vst.msk [vmem:[%s387] sm:$0xff] %vm399, %v396
    %s401 = scalar_lea.vmem [#allocation2], 80
    %s402 = scalar_lea.vmem [#allocation0], 160
    %s403 = scalar_lea.vmem %s402, 7 [#allocation0]
    %v404 = vld [vmem:[%s403] ss:$-1 sm:$0xff]
    %v405 = vrot.slane %v404, 6
    %406 = vst [vmem:[%s401] sm:$0xff] %v405
    %s407 = scalar_lea.vmem %s402, 8 [#allocation0]
    %s408 = scalar_lea.vmem %s407, 7 [#allocation0]
    %v409 = vld [vmem:[%s408] ss:$-1 sm:$0xff]
    %v410 = vrot.slane %v409, 6
    %v411 = vlaneseq
    %v412 = vshrl.u32 %v411, 7
    %vm413 = vcmp.lt.s32.totalorder %v412, 2
    %414 = vst.msk [vmem:[%s401] sm:$0xff] %vm413, %v410
    %s415 = scalar_lea.vmem [#allocation2], 88
    %s416 = scalar_lea.vmem [#allocation0], 176
    %s417 = scalar_lea.vmem %s416, 7 [#allocation0]
    %v418 = vld [vmem:[%s417] ss:$-1 sm:$0xff]
    %v419 = vrot.slane %v418, 6
    %420 = vst [vmem:[%s415] sm:$0xff] %v419
    %s421 = scalar_lea.vmem %s416, 8 [#allocation0]
    %s422 = scalar_lea.vmem %s421, 7 [#allocation0]
    %v423 = vld [vmem:[%s422] ss:$-1 sm:$0xff]
    %v424 = vrot.slane %v423, 6
    %v425 = vlaneseq
    %v426 = vshrl.u32 %v425, 7
    %vm427 = vcmp.lt.s32.totalorder %v426, 2
    %428 = vst.msk [vmem:[%s415] sm:$0xff] %vm427, %v424
    %s429 = scalar_lea.vmem [#allocation2], 96
    %s430 = scalar_lea.vmem [#allocation0], 192
    %s431 = scalar_lea.vmem %s430, 7 [#allocation0]
    %v432 = vld [vmem:[%s431] ss:$-1 sm:$0xff]
    %v433 = vrot.slane %v432, 6
    %434 = vst [vmem:[%s429] sm:$0xff] %v433
    %s435 = scalar_lea.vmem %s430, 8 [#allocation0]
    %s436 = scalar_lea.vmem %s435, 7 [#allocation0]
    %v437 = vld [vmem:[%s436] ss:$-1 sm:$0xff]
    %v438 = vrot.slane %v437, 6
    %v439 = vlaneseq
    %v440 = vshrl.u32 %v439, 7
    %vm441 = vcmp.lt.s32.totalorder %v440, 2
    %442 = vst.msk [vmem:[%s429] sm:$0xff] %vm441, %v438
    %s443 = scalar_lea.vmem [#allocation2], 104
    %s444 = scalar_lea.vmem [#allocation0], 208
    %s445 = scalar_lea.vmem %s444, 7 [#allocation0]
    %v446 = vld [vmem:[%s445] ss:$-1 sm:$0xff]
    %v447 = vrot.slane %v446, 6
    %448 = vst [vmem:[%s443] sm:$0xff] %v447
    %s449 = scalar_lea.vmem %s444, 8 [#allocation0]
    %s450 = scalar_lea.vmem %s449, 7 [#allocation0]
    %v451 = vld [vmem:[%s450] ss:$-1 sm:$0xff]
    %v452 = vrot.slane %v451, 6
    %v453 = vlaneseq
    %v454 = vshrl.u32 %v453, 7
    %vm455 = vcmp.lt.s32.totalorder %v454, 2
    %456 = vst.msk [vmem:[%s443] sm:$0xff] %vm455, %v452
    %s457 = scalar_lea.vmem [#allocation2], 112
    %s458 = scalar_lea.vmem [#allocation0], 224
    %s459 = scalar_lea.vmem %s458, 7 [#allocation0]
    %v460 = vld [vmem:[%s459] ss:$-1 sm:$0xff]
    %v461 = vrot.slane %v460, 6
    %462 = vst [vmem:[%s457] sm:$0xff] %v461
    %s463 = scalar_lea.vmem %s458, 8 [#allocation0]
    %s464 = scalar_lea.vmem %s463, 7 [#allocation0]
    %v465 = vld [vmem:[%s464] ss:$-1 sm:$0xff]
    %v466 = vrot.slane %v465, 6
    %v467 = vlaneseq
    %v468 = vshrl.u32 %v467, 7
    %vm469 = vcmp.lt.s32.totalorder %v468, 2
    %470 = vst.msk [vmem:[%s457] sm:$0xff] %vm469, %v466
    %s471 = scalar_lea.vmem [#allocation2], 120
    %s472 = scalar_lea.vmem [#allocation0], 240
    %s473 = scalar_lea.vmem %s472, 7 [#allocation0]
    %v474 = vld [vmem:[%s473] ss:$-1 sm:$0xff]
    %v475 = vrot.slane %v474, 6
    %476 = vst [vmem:[%s471] sm:$0xff] %v475
    %s477 = scalar_lea.vmem %s472, 8 [#allocation0]
    %s478 = scalar_lea.vmem %s477, 7 [#allocation0]
    %v479 = vld [vmem:[%s478] ss:$-1 sm:$0xff]
    %v480 = vrot.slane %v479, 6
    %v481 = vlaneseq
    %v482 = vshrl.u32 %v481, 7
    %vm483 = vcmp.lt.s32.totalorder %v482, 2
    %484 = vst.msk [vmem:[%s471] sm:$0xff] %vm483, %v480
    %s486 = sshll.u32 1, 2
    %s487 = ssub.s32 %s486, 1
    %v489 = vld [vmem:[#allocation2] sm:%s487]
    %s490 = sshll.u32 1, 2
    %s491 = ssub.s32 %s490, 1
    %492 = vst [vmem:[#allocation3] sm:%s491] %v489
    %s493 = scalar_lea.vmem [#allocation2], 8
    %v494 = vld [vmem:[%s493] sm:%s487]
    %s495 = sshll.u32 1, 2
    %s496 = ssub.s32 %s495, 1
    %s497 = scalar_lea.vmem [#allocation3], 2
    %498 = vst [vmem:[%s497] sm:%s496] %v494
    %s499 = scalar_lea.vmem [#allocation2], 16
    %v500 = vld [vmem:[%s499] sm:%s487]
    %s501 = sshll.u32 1, 2
    %s502 = ssub.s32 %s501, 1
    %s503 = smul.addr 2, 2
    %s504 = scalar_lea.vmem [#allocation3], %s503
    %505 = vst [vmem:[%s504] sm:%s502] %v500
    %s506 = scalar_lea.vmem [#allocation2], 24
    %v507 = vld [vmem:[%s506] sm:%s487]
    %s508 = sshll.u32 1, 2
    %s509 = ssub.s32 %s508, 1
    %s510 = smul.addr 2, 3
    %s511 = scalar_lea.vmem [#allocation3], %s510
    %512 = vst [vmem:[%s511] sm:%s509] %v507
    %s513 = scalar_lea.vmem [#allocation2], 32
    %v514 = vld [vmem:[%s513] sm:%s487]
    %s515 = sshll.u32 1, 2
    %s516 = ssub.s32 %s515, 1
    %s517 = smul.addr 2, 4
    %s518 = scalar_lea.vmem [#allocation3], %s517
    %519 = vst [vmem:[%s518] sm:%s516] %v514
    %s520 = scalar_lea.vmem [#allocation2], 40
    %v521 = vld [vmem:[%s520] sm:%s487]
    %s522 = sshll.u32 1, 2
    %s523 = ssub.s32 %s522, 1
    %s524 = smul.addr 2, 5
    %s525 = scalar_lea.vmem [#allocation3], %s524
    %526 = vst [vmem:[%s525] sm:%s523] %v521
    %s527 = scalar_lea.vmem [#allocation2], 48
    %v528 = vld [vmem:[%s527] sm:%s487]
    %s529 = sshll.u32 1, 2
    %s530 = ssub.s32 %s529, 1
    %s531 = smul.addr 2, 6
    %s532 = scalar_lea.vmem [#allocation3], %s531
    %533 = vst [vmem:[%s532] sm:%s530] %v528
    %s534 = scalar_lea.vmem [#allocation2], 56
    %v535 = vld [vmem:[%s534] sm:%s487]
    %s536 = sshll.u32 1, 2
    %s537 = ssub.s32 %s536, 1
    %s538 = smul.addr 2, 7
    %s539 = scalar_lea.vmem [#allocation3], %s538
    %540 = vst [vmem:[%s539] sm:%s537] %v535
    %s541 = scalar_lea.vmem [#allocation2], 64
    %v542 = vld [vmem:[%s541] sm:%s487]
    %s543 = sshll.u32 1, 2
    %s544 = ssub.s32 %s543, 1
    %s545 = smul.addr 2, 8
    %s546 = scalar_lea.vmem [#allocation3], %s545
    %547 = vst [vmem:[%s546] sm:%s544] %v542
    %s548 = scalar_lea.vmem [#allocation2], 72
    %v549 = vld [vmem:[%s548] sm:%s487]
    %s550 = sshll.u32 1, 2
    %s551 = ssub.s32 %s550, 1
    %s552 = smul.addr 2, 9
    %s553 = scalar_lea.vmem [#allocation3], %s552
    %554 = vst [vmem:[%s553] sm:%s551] %v549
    %s555 = scalar_lea.vmem [#allocation2], 80
    %v556 = vld [vmem:[%s555] sm:%s487]
    %s557 = sshll.u32 1, 2
    %s558 = ssub.s32 %s557, 1
    %s559 = smul.addr 2, 10
    %s560 = scalar_lea.vmem [#allocation3], %s559
    %561 = vst [vmem:[%s560] sm:%s558] %v556
    %s562 = scalar_lea.vmem [#allocation2], 88
    %v563 = vld [vmem:[%s562] sm:%s487]
    %s564 = sshll.u32 1, 2
    %s565 = ssub.s32 %s564, 1
    %s566 = smul.addr 2, 11
    %s567 = scalar_lea.vmem [#allocation3], %s566
    %568 = vst [vmem:[%s567] sm:%s565] %v563
    %s569 = scalar_lea.vmem [#allocation2], 96
    %v570 = vld [vmem:[%s569] sm:%s487]
    %s571 = sshll.u32 1, 2
    %s572 = ssub.s32 %s571, 1
    %s573 = smul.addr 2, 12
    %s574 = scalar_lea.vmem [#allocation3], %s573
    %575 = vst [vmem:[%s574] sm:%s572] %v570
    %s576 = scalar_lea.vmem [#allocation2], 104
    %v577 = vld [vmem:[%s576] sm:%s487]
    %s578 = sshll.u32 1, 2
    %s579 = ssub.s32 %s578, 1
    %s580 = smul.addr 2, 13
    %s581 = scalar_lea.vmem [#allocation3], %s580
    %582 = vst [vmem:[%s581] sm:%s579] %v577
    %s583 = scalar_lea.vmem [#allocation2], 112
    %v584 = vld [vmem:[%s583] sm:%s487]
    %s585 = sshll.u32 1, 2
    %s586 = ssub.s32 %s585, 1
    %s587 = smul.addr 2, 14
    %s588 = scalar_lea.vmem [#allocation3], %s587
    %589 = vst [vmem:[%s588] sm:%s586] %v584
    %s590 = scalar_lea.vmem [#allocation2], 120
    %v591 = vld [vmem:[%s590] sm:%s487]
    %s592 = sshll.u32 1, 2
    %s593 = ssub.s32 %s592, 1
    %s594 = smul.addr 2, 15
    %s595 = scalar_lea.vmem [#allocation3], %s594
    %596 = vst [vmem:[%s595] sm:%s593] %v591
    // Predicated region
    $region39: #{reverse.8} parent=1 // pred_check
      _
    $region40: #{reverse.8} parent=1 // pred_check_branch
      %598 = sbr.rel (0) target = $region42
    $region41: #{reverse.8} parent=1 // pred_region
      // Predicated region
      $region43: #{reverse.8} parent=41 // pred_check
        _
      $region44: #{reverse.8} parent=41 // pred_check_branch
        %600 = sbr.rel target = $region46
      $region45: #{reverse.8} parent=41 // pred_region
        // Predicated region
        $region58: #{reverse.8} parent=45 // pred_check
          _
        $region59: #{reverse.8} parent=45 // pred_check_branch
          %646 = sbr.rel (0) target = $region61
        $region60: #{reverse.8} parent=45 // pred_region
          loop: start=0, step=1, limit=1
          $region62: #{reverse.8} parent=60 // loop_pre_header
            _
          $region63: #{reverse.8} parent=60 // loop_header
            %s648 = sphi 0, %s652
            %p649 = scmp.ge.s32.totalorder %s648, 1
            %s653 = sphi [#allocation3], [#allocation3]
            %s654 = sphi %s1, %s1
          $region64: #{reverse.8} parent=60 // loop_header_branch
            %651 = sbr.rel (%p649) target = $region68
          $region65: #{reverse.8} parent=60 // loop_body
            _
          $region66: #{reverse.8} parent=60 // loop_footer
            %s652 = sadd.s32 1, %s648
          $region67: #{reverse.8} parent=60 // loop_footer_branch
            %647 = sbr.rel target = $region63
          $region68: #{reverse.8} parent=60 // loop_exit
            _
          %s656 = ssub.s32 4, 1
          loop: start=0, step=1, limit=1
          $region69: #{reverse.8} parent=60 // loop_pre_header
            _
          $region70: #{reverse.8} parent=60 // loop_header
            %s658 = sphi 0, %s662
            %p659 = scmp.ge.s32.totalorder %s658, 1
            %s663 = sphi [#allocation3], [#allocation3]
            %s664 = sphi %s1, %s1
          $region71: #{reverse.8} parent=60 // loop_header_branch
            %661 = sbr.rel (%p659) target = $region75
          $region72: #{reverse.8} parent=60 // loop_body
            %v665 = vld [vmem:[%s663] sm:%s656]
            %666 = vst [vmem:[%s664] sm:%s656] %v665
            %v667 = vld [vmem:[%s663 + $0x2] sm:%s656]
            %668 = vst [vmem:[%s664 + $0x2] sm:%s656] %v667
            %v669 = vld [vmem:[%s663 + $0x4] sm:%s656]
            %670 = vst [vmem:[%s664 + $0x4] sm:%s656] %v669
            %v671 = vld [vmem:[%s663 + $0x6] sm:%s656]
            %672 = vst [vmem:[%s664 + $0x6] sm:%s656] %v671
            %v673 = vld [vmem:[%s663 + $0x8] sm:%s656]
            %674 = vst [vmem:[%s664 + $0x8] sm:%s656] %v673
            %v675 = vld [vmem:[%s663 + $0xa] sm:%s656]
            %676 = vst [vmem:[%s664 + $0xa] sm:%s656] %v675
            %v677 = vld [vmem:[%s663 + $0xc] sm:%s656]
            %678 = vst [vmem:[%s664 + $0xc] sm:%s656] %v677
            %v679 = vld [vmem:[%s663 + $0xe] sm:%s656]
            %680 = vst [vmem:[%s664 + $0xe] sm:%s656] %v679
            %v681 = vld [vmem:[%s663 + $0x10] sm:%s656]
            %682 = vst [vmem:[%s664 + $0x10] sm:%s656] %v681
            %v683 = vld [vmem:[%s663 + $0x12] sm:%s656]
            %684 = vst [vmem:[%s664 + $0x12] sm:%s656] %v683
            %v685 = vld [vmem:[%s663 + $0x14] sm:%s656]
            %686 = vst [vmem:[%s664 + $0x14] sm:%s656] %v685
            %v687 = vld [vmem:[%s663 + $0x16] sm:%s656]
            %688 = vst [vmem:[%s664 + $0x16] sm:%s656] %v687
            %v689 = vld [vmem:[%s663 + $0x18] sm:%s656]
            %690 = vst [vmem:[%s664 + $0x18] sm:%s656] %v689
            %v691 = vld [vmem:[%s663 + $0x1a] sm:%s656]
            %692 = vst [vmem:[%s664 + $0x1a] sm:%s656] %v691
            %v693 = vld [vmem:[%s663 + $0x1c] sm:%s656]
            %694 = vst [vmem:[%s664 + $0x1c] sm:%s656] %v693
            %v695 = vld [vmem:[%s663 + $0x1e] sm:%s656]
            %696 = vst [vmem:[%s664 + $0x1e] sm:%s656] %v695
          $region73: #{reverse.8} parent=60 // loop_footer
            %s662 = sadd.s32 1, %s658
          $region74: #{reverse.8} parent=60 // loop_footer_branch
            %657 = sbr.rel target = $region70
          $region75: #{reverse.8} parent=60 // loop_exit
            _
        $region61: #{reverse.8} parent=45 // pred_fallthru
          _
      $region46: #{reverse.8} parent=41 // pred_fallthru
        _
      // Predicated region
      $region47: #{reverse.8} parent=41 // pred_check
        _
      $region48: #{reverse.8} parent=41 // pred_check_branch
        %602 = sbr.rel (0) target = $region50
      $region49: #{reverse.8} parent=41 // pred_region
        %s604 = ssub.s32 4, 1
        loop: start=0, step=1, limit=1
        $region51: #{reverse.8} parent=49 // loop_pre_header
          _
        $region52: #{reverse.8} parent=49 // loop_header
          %s606 = sphi 0, %s610
          %p607 = scmp.ge.s32.totalorder %s606, 1
          %s611 = sphi [#allocation3], [#allocation3]
          %s612 = sphi %s1, %s1
        $region53: #{reverse.8} parent=49 // loop_header_branch
          %609 = sbr.rel (%p607) target = $region57
        $region54: #{reverse.8} parent=49 // loop_body
          %v613 = vld [vmem:[%s611] sm:%s604]
          %614 = vst [vmem:[%s612] sm:%s604] %v613
          %v615 = vld [vmem:[%s611 + $0x2] sm:%s604]
          %616 = vst [vmem:[%s612 + $0x2] sm:%s604] %v615
          %v617 = vld [vmem:[%s611 + $0x4] sm:%s604]
          %618 = vst [vmem:[%s612 + $0x4] sm:%s604] %v617
          %v619 = vld [vmem:[%s611 + $0x6] sm:%s604]
          %620 = vst [vmem:[%s612 + $0x6] sm:%s604] %v619
          %v621 = vld [vmem:[%s611 + $0x8] sm:%s604]
          %622 = vst [vmem:[%s612 + $0x8] sm:%s604] %v621
          %v623 = vld [vmem:[%s611 + $0xa] sm:%s604]
          %624 = vst [vmem:[%s612 + $0xa] sm:%s604] %v623
          %v625 = vld [vmem:[%s611 + $0xc] sm:%s604]
          %626 = vst [vmem:[%s612 + $0xc] sm:%s604] %v625
          %v627 = vld [vmem:[%s611 + $0xe] sm:%s604]
          %628 = vst [vmem:[%s612 + $0xe] sm:%s604] %v627
          %v629 = vld [vmem:[%s611 + $0x10] sm:%s604]
          %630 = vst [vmem:[%s612 + $0x10] sm:%s604] %v629
          %v631 = vld [vmem:[%s611 + $0x12] sm:%s604]
          %632 = vst [vmem:[%s612 + $0x12] sm:%s604] %v631
          %v633 = vld [vmem:[%s611 + $0x14] sm:%s604]
          %634 = vst [vmem:[%s612 + $0x14] sm:%s604] %v633
          %v635 = vld [vmem:[%s611 + $0x16] sm:%s604]
          %636 = vst [vmem:[%s612 + $0x16] sm:%s604] %v635
          %v637 = vld [vmem:[%s611 + $0x18] sm:%s604]
          %638 = vst [vmem:[%s612 + $0x18] sm:%s604] %v637
          %v639 = vld [vmem:[%s611 + $0x1a] sm:%s604]
          %640 = vst [vmem:[%s612 + $0x1a] sm:%s604] %v639
          %v641 = vld [vmem:[%s611 + $0x1c] sm:%s604]
          %642 = vst [vmem:[%s612 + $0x1c] sm:%s604] %v641
          %v643 = vld [vmem:[%s611 + $0x1e] sm:%s604]
          %644 = vst [vmem:[%s612 + $0x1e] sm:%s604] %v643
        $region55: #{reverse.8} parent=49 // loop_footer
          %s610 = sadd.s32 1, %s606
        $region56: #{reverse.8} parent=49 // loop_footer_branch
          %605 = sbr.rel target = $region52
        $region57: #{reverse.8} parent=49 // loop_exit
          _
      $region50: #{reverse.8} parent=41 // pred_fallthru
        _
    $region42: #{reverse.8} parent=1 // pred_fallthru
      _
    %697 = vnop

// kernel: custom-call
$region0: #{custom-call}
  %s0 = inlined_call_operand.vmem [shape: c64[2,2,8,8], index: 0, kind: input, shape index: {}]
  %s1 = inlined_call_operand.vmem [shape: f32[2,2,8,8], index: 1, kind: output, shape index: {}]
  %v2 = vld [vmem:[%s0] sm:$0xff]
  %3 = vst [vmem:[%s1] sm:$0xff] %v2
  %s4 = scalar_lea.vmem %s1, 8
  %s5 = scalar_lea.vmem %s0, 8
  %v6 = vld [vmem:[%s5] sm:$0xff]
  %7 = vst [vmem:[%s4] sm:$0xff] %v6
  %s8 = scalar_lea.vmem %s1, 16
  %s9 = scalar_lea.vmem %s0, 16
  %v10 = vld [vmem:[%s9] sm:$0xff]
  %11 = vst [vmem:[%s8] sm:$0xff] %v10
  %s12 = scalar_lea.vmem %s1, 24
  %s13 = scalar_lea.vmem %s0, 24
  %v14 = vld [vmem:[%s13] sm:$0xff]
  %15 = vst [vmem:[%s12] sm:$0xff] %v14

// kernel: custom-call.1
$region0: #{custom-call.1}
  %s0 = inlined_call_operand.vmem [shape: c64[2,2,8,8], index: 0, kind: input, shape index: {}]
  %s1 = inlined_call_operand.vmem [shape: f32[2,2,8,8], index: 1, kind: output, shape index: {}]
  %s2 = scalar_lea.vmem %s0, 32
  %v3 = vld [vmem:[%s2] sm:$0xff]
  %4 = vst [vmem:[%s1] sm:$0xff] %v3
  %s5 = scalar_lea.vmem %s1, 8
  %s6 = scalar_lea.vmem %s2, 8
  %v7 = vld [vmem:[%s6] sm:$0xff]
  %8 = vst [vmem:[%s5] sm:$0xff] %v7
  %s9 = scalar_lea.vmem %s1, 16
  %s10 = scalar_lea.vmem %s2, 16
  %v11 = vld [vmem:[%s10] sm:$0xff]
  %12 = vst [vmem:[%s9] sm:$0xff] %v11
  %s13 = scalar_lea.vmem %s1, 24
  %s14 = scalar_lea.vmem %s2, 24
  %v15 = vld [vmem:[%s14] sm:$0xff]
  %16 = vst [vmem:[%s13] sm:$0xff] %v15

// kernel: custom-call.2
$region0: #{custom-call.2}
  %s0 = inlined_call_operand.vmem [shape: f32[2,32], index: 0, kind: input, shape index: {}]
  %s1 = inlined_call_operand.vmem [shape: f32[2,32], index: 1, kind: input, shape index: {}]
  %s2 = inlined_call_operand.hbm [shape: c64[2,32], index: 2, kind: output, shape index: {}]
  %s3 = scalar_lea.hbm %s2, 32
  $region1: #{custom-call.2} parent=0
    #allocation0 [shape = 's32[1]{0}', space=sflag, size = 0x4, scoped, tag = 'scoped memory for custom-call.2']
    %4 = vsyncpa [#allocation0], 0
    %s5 = sshll.u32 %s0, 4
    %s6 = int_to_ptr.vmem [resolvable:$true] %s5
    %8 = dma.vmem_to_hbm [thread:$0]  %s6, 32, %s2, [#allocation0]
    %9 = dma.done [#allocation0], 32
    %10 = vsyncpa [#allocation0], 1
  $region2: #{custom-call.2} parent=0
    #allocation1 [shape = 's32[1]{0}', space=sflag, size = 0x4, scoped, tag = 'scoped memory for custom-call.2']
    %11 = vsyncpa [#allocation1], 0
    %s12 = sshll.u32 %s1, 4
    %s13 = int_to_ptr.vmem [resolvable:$true] %s12
    %15 = dma.vmem_to_hbm [thread:$0]  %s13, 32, %s3, [#allocation1]
    %16 = dma.done [#allocation1], 32
    %17 = vsyncpa [#allocation1], 1

// kernel: neural_preconditioner_forward.1
$region0: #{neural_preconditioner_forward.1}
  #allocation0 [shape = 'u32[]', space=smem, size = 0x4, offset = 0x4, fixed_abs, tag = 'smem constant byte address 0x4 - core index']
  #allocation1 [shape = 'u32[144,128]{1,0:T(1,128)}', space=vmem, size = 0x12000, scoped, tag = 'internal scratch']
  #allocation2 [shape = 'f32[1,1]{1,0:T(1,128)S(6)}', space=smem, size = 0x200, scoped, tag = 'scoped memory for neural_preconditioner_forward.1']
  %s0 = inlined_call_operand.vmem [shape: f32[18,256], index: 0, kind: input, shape index: {}]
  %s1 = inlined_call_operand.vmem [shape: f32[16,256], index: 1, kind: input, shape index: {}]
  %s2 = inlined_call_operand.vmem [shape: f32[512,128], index: 2, kind: input, shape index: {}]
  %s3 = inlined_call_operand.vmem [shape: f32[3,128], index: 3, kind: input, shape index: {}]
  %s4 = inlined_call_operand.<no memory space> [shape: f32[1,1], index: 4, kind: input, shape index: {}]
  %s5 = inlined_call_operand.vmem [shape: f32[128,128], index: 5, kind: input, shape index: {}]
  %s6 = inlined_call_operand.vmem [shape: f32[1,128], index: 6, kind: input, shape index: {}]
  %s7 = inlined_call_operand.vmem [shape: f32[2,128], index: 7, kind: output, shape index: {}]
  %s8 = sld [smem:[#allocation0]]
  $region38: #{neural_preconditioner_forward.1} parent=0
    _
  %s10 = ssub.s32 1, %s8
  %s11 = scalar_select 0, %s10, %s8
  %12 = sst [smem:[#allocation2]] %s4
  // Predicated region
  $region2: #{neural_preconditioner_forward.1} parent=0 // pred_check
    _
  $region3: #{neural_preconditioner_forward.1} parent=0 // pred_check_branch
    %14 = sbr.rel (0) target = $region5
  $region4: #{neural_preconditioner_forward.1} parent=0 // pred_region
    _
  $region5: #{neural_preconditioner_forward.1} parent=0 // pred_fallthru
    _
  // Predicated region
  $region6: #{neural_preconditioner_forward.1} parent=0 // pred_check
    _
  $region7: #{neural_preconditioner_forward.1} parent=0 // pred_check_branch
    %16 = sbr.rel (0) target = $region9
  $region8: #{neural_preconditioner_forward.1} parent=0 // pred_region
    _
  $region9: #{neural_preconditioner_forward.1} parent=0 // pred_fallthru
    _
  // Predicated region
  $region10: #{neural_preconditioner_forward.1} parent=0 // pred_check
    _
  $region11: #{neural_preconditioner_forward.1} parent=0 // pred_check_branch
    %18 = sbr.rel (0) target = $region13
  $region12: #{neural_preconditioner_forward.1} parent=0 // pred_region
    _
  $region13: #{neural_preconditioner_forward.1} parent=0 // pred_fallthru
    _
  // Predicated region
  $region14: #{neural_preconditioner_forward.1} parent=0 // pred_check
    _
  $region15: #{neural_preconditioner_forward.1} parent=0 // pred_check_branch
    %20 = sbr.rel (0) target = $region17
  $region16: #{neural_preconditioner_forward.1} parent=0 // pred_region
    _
  $region17: #{neural_preconditioner_forward.1} parent=0 // pred_fallthru
    _
  // Predicated region
  $region18: #{neural_preconditioner_forward.1} parent=0 // pred_check
    _
  $region19: #{neural_preconditioner_forward.1} parent=0 // pred_check_branch
    %22 = sbr.rel (0) target = $region21
  $region20: #{neural_preconditioner_forward.1} parent=0 // pred_region
    _
  $region21: #{neural_preconditioner_forward.1} parent=0 // pred_fallthru
    _
  // Predicated region
  $region22: #{neural_preconditioner_forward.1} parent=0 // pred_check
    _
  $region23: #{neural_preconditioner_forward.1} parent=0 // pred_check_branch
    %24 = sbr.rel (0) target = $region25
  $region24: #{neural_preconditioner_forward.1} parent=0 // pred_region
    _
  $region25: #{neural_preconditioner_forward.1} parent=0 // pred_fallthru
    _
  // Predicated region
  $region26: #{neural_preconditioner_forward.1} parent=0 // pred_check
    _
  $region27: #{neural_preconditioner_forward.1} parent=0 // pred_check_branch
    %26 = sbr.rel (0) target = $region29
  $region28: #{neural_preconditioner_forward.1} parent=0 // pred_region
    _
  $region29: #{neural_preconditioner_forward.1} parent=0 // pred_fallthru
    _
  %v27 = vlaneseq
  %v28 = vand.u32 %v27, 127
  %v29 = vadd.s32 %v28, 128
  %vm30 = vcmp.lt.s32.totalorder %v28, 0
  %v31 = vsub.s32 0, %v28
  %v32 = vsel %vm30, %v31, %v28
  %v33 = vshrl.u32 %v32, 1
  %v34 = vand.u32 %v32, 1
  %v35 = vsub.s32 0, %v34
  %v36 = vsel %vm30, %v35, %v34
  %vm37 = vcmp.lt.s32.totalorder %v29, 0
  %v38 = vsub.s32 0, %v29
  %v39 = vsel %vm37, %v38, %v29
  %v40 = vshrl.u32 %v39, 1
  %v41 = vand.u32 %v39, 1
  %v42 = vsub.s32 0, %v41
  %v43 = vsel %vm37, %v42, %v41
  %vm44 = vcmp.ne.s32.totalorder %v36, 0
  %vm45 = vcmp.ne.s32.totalorder %v43, 0
  %vm46 = vcmp.lt.s32.totalorder %v36, 0
  %vm47 = vcmp.lt.s32.totalorder %v43, 0
  %vm48 = vmand %vm46, %vm44
  %vm49 = vmand %vm47, %vm45
  %v50 = vadd.s32 %v36, 2
  %v51 = vadd.s32 %v43, 2
  %v52 = vsel %vm48, %v50, %v36
  %v53 = vsel %vm49, %v51, %v43
  %vm54 = vcmp.eq.s32.totalorder %v52, 0
  %vm55 = vcmp.eq.s32.totalorder %v53, 0
  %v56 = vsel %vm54, -1.0, 1.0
  %v57 = vsel %vm55, -1.0, 1.0
  %v58 = vld [vmem:[%s1] sm:$0x3]
  %v59 = vld [vmem:[%s1 + $0x8] sm:$0x3]
  %v60 = vld [vmem:[%s1] sm:$0xc]
  %v61 = vld [vmem:[%s1 + $0x8] sm:$0xc]
  %v62 = vld [vmem:[%s1] sm:$0x30]
  %v63 = vld [vmem:[%s1 + $0x8] sm:$0x30]
  %v64 = vld [vmem:[%s1] sm:$0xc0]
  %v65 = vld [vmem:[%s1 + $0x8] sm:$0xc0]
  %v66 = vld [vmem:[%s1 + $0x10] sm:$0x3]
  %v67 = vld [vmem:[%s1 + $0x18] sm:$0x3]
  %v68 = vld [vmem:[%s1 + $0x10] sm:$0xc]
  %v69 = vld [vmem:[%s1 + $0x18] sm:$0xc]
  %v70 = vld [vmem:[%s1 + $0x10] sm:$0x30]
  %v71 = vld [vmem:[%s1 + $0x18] sm:$0x30]
  %v72 = vld [vmem:[%s1 + $0x10] sm:$0xc0]
  %v73 = vld [vmem:[%s1 + $0x18] sm:$0xc0]
  %v74 = vld [vmem:[%s0] ss:$8 sm:$0x3]
  %s75 = scalar_lea.vmem %s0, 1
  %v76 = vld [vmem:[%s75] ss:$8 sm:$0x3]
  %s77 = scalar_lea.vmem %s0, 2
  %v78 = vld [vmem:[%s77] ss:$8 sm:$0x3]
  %s79 = scalar_lea.vmem %s0, 3
  %v80 = vld [vmem:[%s79] ss:$8 sm:$0x3]
  %s81 = scalar_lea.vmem %s0, 4
  %v82 = vld [vmem:[%s81] ss:$8 sm:$0x3]
  %s83 = scalar_lea.vmem %s0, 5
  %v84 = vld [vmem:[%s83] ss:$8 sm:$0x3]
  %s85 = scalar_lea.vmem %s0, 6
  %v86 = vld [vmem:[%s85] ss:$8 sm:$0x3]
  %s87 = scalar_lea.vmem %s0, 7
  %v88 = vld [vmem:[%s87] ss:$8 sm:$0x3]
  %s89 = scalar_lea.vmem %s0, 16
  %v90 = vld [vmem:[%s89] ss:$8 sm:$0x3]
  %s91 = scalar_lea.vmem %s0, 17
  %v92 = vld [vmem:[%s91] ss:$8 sm:$0x3]
  %s93 = scalar_lea.vmem %s0, 18
  %v94 = vld [vmem:[%s93] ss:$8 sm:$0x3]
  %s95 = scalar_lea.vmem %s0, 19
  %v96 = vld [vmem:[%s95] ss:$8 sm:$0x3]
  %s97 = scalar_lea.vmem %s0, 20
  %v98 = vld [vmem:[%s97] ss:$8 sm:$0x3]
  %s99 = scalar_lea.vmem %s0, 21
  %v100 = vld [vmem:[%s99] ss:$8 sm:$0x3]
  %s101 = scalar_lea.vmem %s0, 22
  %v102 = vld [vmem:[%s101] ss:$8 sm:$0x3]
  %s103 = scalar_lea.vmem %s0, 23
  %v104 = vld [vmem:[%s103] ss:$8 sm:$0x3]
  %s105 = scalar_lea.vmem %s0, 32
  %v106 = vld [vmem:[%s105] ss:$8 sm:$0x3]
  %s107 = scalar_lea.vmem %s0, 33
  %v108 = vld [vmem:[%s107] ss:$8 sm:$0x3]
  %v110 = vlaneseq
  %v111 = vshrl.u32 %v110, 7
  %v112 = vsub.s32 0, %v111
  %v113 = vrot.slane %v78, %v112
  %v114 = vlaneseq
  %v115 = vshrl.u32 %v114, 7
  %v116 = vsub.s32 1, %v115
  %v117 = vrot.slane %v78, %v116
  %v120 = vmul.f32 %v58, %v113
  %v121 = vmul.f32 %v59, %v117
  %v123 = vlaneseq
  %v124 = vshrl.u32 %v123, 7
  %v125 = vsub.s32 0, %v124
  %v126 = vrot.slane %v80, %v125
  %v127 = vlaneseq
  %v128 = vshrl.u32 %v127, 7
  %v129 = vsub.s32 1, %v128
  %v130 = vrot.slane %v80, %v129
  %v133 = vmul.f32 %v60, %v126
  %v134 = vmul.f32 %v61, %v130
  %v137 = vrot.slane %v133, 2
  %v138 = vrot.slane %v134, 2
  %v141 = vsub.f32 %v120, %v137
  %v142 = vsub.f32 %v121, %v138
  %v143 = vmul.f32 %v58, %v126
  %v144 = vmul.f32 %v59, %v130
  %v145 = vmul.f32 %v60, %v113
  %v146 = vmul.f32 %v61, %v117
  %v149 = vrot.slane %v145, 2
  %v150 = vrot.slane %v146, 2
  %v153 = vadd.f32 %v143, %v149
  %v154 = vadd.f32 %v144, %v150
  %v156 = vlaneseq
  %v157 = vshrl.u32 %v156, 7
  %v158 = vsub.s32 0, %v157
  %v159 = vrot.slane %v82, %v158
  %v160 = vlaneseq
  %v161 = vshrl.u32 %v160, 7
  %v162 = vsub.s32 1, %v161
  %v163 = vrot.slane %v82, %v162
  %v166 = vmul.f32 %v58, %v159
  %v167 = vmul.f32 %v59, %v163
  %v169 = vlaneseq
  %v170 = vshrl.u32 %v169, 7
  %v171 = vsub.s32 0, %v170
  %v172 = vrot.slane %v84, %v171
  %v173 = vlaneseq
  %v174 = vshrl.u32 %v173, 7
  %v175 = vsub.s32 1, %v174
  %v176 = vrot.slane %v84, %v175
  %v179 = vmul.f32 %v60, %v172
  %v180 = vmul.f32 %v61, %v176
  %v183 = vrot.slane %v179, 2
  %v184 = vrot.slane %v180, 2
  %v187 = vsub.f32 %v166, %v183
  %v188 = vsub.f32 %v167, %v184
  %v189 = vmul.f32 %v58, %v172
  %v190 = vmul.f32 %v59, %v176
  %v191 = vmul.f32 %v60, %v159
  %v192 = vmul.f32 %v61, %v163
  %v195 = vrot.slane %v191, 2
  %v196 = vrot.slane %v192, 2
  %v199 = vadd.f32 %v189, %v195
  %v200 = vadd.f32 %v190, %v196
  %v202 = vlaneseq
  %v203 = vshrl.u32 %v202, 7
  %v204 = vsub.s32 0, %v203
  %v205 = vrot.slane %v86, %v204
  %v206 = vlaneseq
  %v207 = vshrl.u32 %v206, 7
  %v208 = vsub.s32 1, %v207
  %v209 = vrot.slane %v86, %v208
  %v212 = vmul.f32 %v62, %v205
  %v213 = vmul.f32 %v63, %v209
  %v215 = vlaneseq
  %v216 = vshrl.u32 %v215, 7
  %v217 = vsub.s32 0, %v216
  %v218 = vrot.slane %v88, %v217
  %v219 = vlaneseq
  %v220 = vshrl.u32 %v219, 7
  %v221 = vsub.s32 1, %v220
  %v222 = vrot.slane %v88, %v221
  %v225 = vmul.f32 %v64, %v218
  %v226 = vmul.f32 %v65, %v222
  %v229 = vrot.slane %v225, 2
  %v230 = vrot.slane %v226, 2
  %v233 = vadd.f32 %v212, %v229
  %v234 = vadd.f32 %v213, %v230
  %v235 = vmul.f32 %v62, %v218
  %v236 = vmul.f32 %v63, %v222
  %v237 = vmul.f32 %v64, %v205
  %v238 = vmul.f32 %v65, %v209
  %v241 = vrot.slane %v237, 2
  %v242 = vrot.slane %v238, 2
  %v245 = vsub.f32 %v235, %v241
  %v246 = vsub.f32 %v236, %v242
  %v248 = vlaneseq
  %v249 = vshrl.u32 %v248, 7
  %v250 = vsub.s32 0, %v249
  %v251 = vrot.slane %v90, %v250
  %v252 = vlaneseq
  %v253 = vshrl.u32 %v252, 7
  %v254 = vsub.s32 1, %v253
  %v255 = vrot.slane %v90, %v254
  %v258 = vmul.f32 %v62, %v251
  %v259 = vmul.f32 %v63, %v255
  %v261 = vlaneseq
  %v262 = vshrl.u32 %v261, 7
  %v263 = vsub.s32 0, %v262
  %v264 = vrot.slane %v92, %v263
  %v265 = vlaneseq
  %v266 = vshrl.u32 %v265, 7
  %v267 = vsub.s32 1, %v266
  %v268 = vrot.slane %v92, %v267
  %v271 = vmul.f32 %v64, %v264
  %v272 = vmul.f32 %v65, %v268
  %v275 = vrot.slane %v271, 2
  %v276 = vrot.slane %v272, 2
  %v279 = vadd.f32 %v258, %v275
  %v280 = vadd.f32 %v259, %v276
  %v281 = vmul.f32 %v62, %v264
  %v282 = vmul.f32 %v63, %v268
  %v283 = vmul.f32 %v64, %v251
  %v284 = vmul.f32 %v65, %v255
  %v287 = vrot.slane %v283, 2
  %v288 = vrot.slane %v284, 2
  %v291 = vsub.f32 %v281, %v287
  %v292 = vsub.f32 %v282, %v288
  %v293 = vsub.f32 %v141, %v187
  %v294 = vsub.f32 %v142, %v188
  %v295 = vadd.f32 %v233, %v279
  %v296 = vadd.f32 %v234, %v280
  %v299 = vrot.slane %v295, 4
  %v300 = vrot.slane %v296, 4
  %v303 = vadd.f32 %v293, %v299
  %v304 = vadd.f32 %v294, %v300
  %v305 = vsub.f32 %v153, %v199
  %v306 = vsub.f32 %v154, %v200
  %v307 = vadd.f32 %v245, %v291
  %v308 = vadd.f32 %v246, %v292
  %v311 = vrot.slane %v307, 4
  %v312 = vrot.slane %v308, 4
  %v315 = vadd.f32 %v305, %v311
  %v316 = vadd.f32 %v306, %v312
  %v318 = vlaneseq
  %v319 = vshrl.u32 %v318, 7
  %v320 = vsub.s32 0, %v319
  %v321 = vrot.slane %v94, %v320
  %v322 = vlaneseq
  %v323 = vshrl.u32 %v322, 7
  %v324 = vsub.s32 1, %v323
  %v325 = vrot.slane %v94, %v324
  %v328 = vmul.f32 %v66, %v321
  %v329 = vmul.f32 %v67, %v325
  %v331 = vlaneseq
  %v332 = vshrl.u32 %v331, 7
  %v333 = vsub.s32 0, %v332
  %v334 = vrot.slane %v96, %v333
  %v335 = vlaneseq
  %v336 = vshrl.u32 %v335, 7
  %v337 = vsub.s32 1, %v336
  %v338 = vrot.slane %v96, %v337
  %v341 = vmul.f32 %v68, %v334
  %v342 = vmul.f32 %v69, %v338
  %v345 = vrot.slane %v341, 2
  %v346 = vrot.slane %v342, 2
  %v349 = vsub.f32 %v328, %v345
  %v350 = vsub.f32 %v329, %v346
  %v351 = vmul.f32 %v66, %v334
  %v352 = vmul.f32 %v67, %v338
  %v353 = vmul.f32 %v68, %v321
  %v354 = vmul.f32 %v69, %v325
  %v357 = vrot.slane %v353, 2
  %v358 = vrot.slane %v354, 2
  %v361 = vadd.f32 %v351, %v357
  %v362 = vadd.f32 %v352, %v358
  %v364 = vlaneseq
  %v365 = vshrl.u32 %v364, 7
  %v366 = vsub.s32 0, %v365
  %v367 = vrot.slane %v98, %v366
  %v368 = vlaneseq
  %v369 = vshrl.u32 %v368, 7
  %v370 = vsub.s32 1, %v369
  %v371 = vrot.slane %v98, %v370
  %v374 = vmul.f32 %v66, %v367
  %v375 = vmul.f32 %v67, %v371
  %v377 = vlaneseq
  %v378 = vshrl.u32 %v377, 7
  %v379 = vsub.s32 0, %v378
  %v380 = vrot.slane %v100, %v379
  %v381 = vlaneseq
  %v382 = vshrl.u32 %v381, 7
  %v383 = vsub.s32 1, %v382
  %v384 = vrot.slane %v100, %v383
  %v387 = vmul.f32 %v68, %v380
  %v388 = vmul.f32 %v69, %v384
  %v391 = vrot.slane %v387, 2
  %v392 = vrot.slane %v388, 2
  %v395 = vsub.f32 %v374, %v391
  %v396 = vsub.f32 %v375, %v392
  %v397 = vmul.f32 %v66, %v380
  %v398 = vmul.f32 %v67, %v384
  %v399 = vmul.f32 %v68, %v367
  %v400 = vmul.f32 %v69, %v371
  %v403 = vrot.slane %v399, 2
  %v404 = vrot.slane %v400, 2
  %v407 = vadd.f32 %v397, %v403
  %v408 = vadd.f32 %v398, %v404
  %v410 = vlaneseq
  %v411 = vshrl.u32 %v410, 7
  %v412 = vsub.s32 0, %v411
  %v413 = vrot.slane %v102, %v412
  %v414 = vlaneseq
  %v415 = vshrl.u32 %v414, 7
  %v416 = vsub.s32 1, %v415
  %v417 = vrot.slane %v102, %v416
  %v420 = vmul.f32 %v70, %v413
  %v421 = vmul.f32 %v71, %v417
  %v423 = vlaneseq
  %v424 = vshrl.u32 %v423, 7
  %v425 = vsub.s32 0, %v424
  %v426 = vrot.slane %v104, %v425
  %v427 = vlaneseq
  %v428 = vshrl.u32 %v427, 7
  %v429 = vsub.s32 1, %v428
  %v430 = vrot.slane %v104, %v429
  %v433 = vmul.f32 %v72, %v426
  %v434 = vmul.f32 %v73, %v430
  %v437 = vrot.slane %v433, 2
  %v438 = vrot.slane %v434, 2
  %v441 = vadd.f32 %v420, %v437
  %v442 = vadd.f32 %v421, %v438
  %v443 = vmul.f32 %v70, %v426
  %v444 = vmul.f32 %v71, %v430
  %v445 = vmul.f32 %v72, %v413
  %v446 = vmul.f32 %v73, %v417
  %v449 = vrot.slane %v445, 2
  %v450 = vrot.slane %v446, 2
  %v453 = vsub.f32 %v443, %v449
  %v454 = vsub.f32 %v444, %v450
  %v456 = vlaneseq
  %v457 = vshrl.u32 %v456, 7
  %v458 = vsub.s32 0, %v457
  %v459 = vrot.slane %v106, %v458
  %v460 = vlaneseq
  %v461 = vshrl.u32 %v460, 7
  %v462 = vsub.s32 1, %v461
  %v463 = vrot.slane %v106, %v462
  %v466 = vmul.f32 %v70, %v459
  %v467 = vmul.f32 %v71, %v463
  %v469 = vlaneseq
  %v470 = vshrl.u32 %v469, 7
  %v471 = vsub.s32 0, %v470
  %v472 = vrot.slane %v108, %v471
  %v473 = vlaneseq
  %v474 = vshrl.u32 %v473, 7
  %v475 = vsub.s32 1, %v474
  %v476 = vrot.slane %v108, %v475
  %v479 = vmul.f32 %v72, %v472
  %v480 = vmul.f32 %v73, %v476
  %v483 = vrot.slane %v479, 2
  %v484 = vrot.slane %v480, 2
  %v487 = vadd.f32 %v466, %v483
  %v488 = vadd.f32 %v467, %v484
  %v489 = vmul.f32 %v70, %v472
  %v490 = vmul.f32 %v71, %v476
  %v491 = vmul.f32 %v72, %v459
  %v492 = vmul.f32 %v73, %v463
  %v495 = vrot.slane %v491, 2
  %v496 = vrot.slane %v492, 2
  %v499 = vsub.f32 %v489, %v495
  %v500 = vsub.f32 %v490, %v496
  %v501 = vmul.f32 %v56, %v407
  %v502 = vmul.f32 %v57, %v408
  %v503 = vadd.f32 %v349, %v501
  %v504 = vadd.f32 %v350, %v502
  %v505 = vmul.f32 %v56, %v499
  %v506 = vmul.f32 %v57, %v500
  %v507 = vsub.f32 %v441, %v505
  %v508 = vsub.f32 %v442, %v506
  %v511 = vrot.slane %v507, 4
  %v512 = vrot.slane %v508, 4
  %v515 = vadd.f32 %v503, %v511
  %v516 = vadd.f32 %v504, %v512
  %v517 = vadd.f32 %v303, %v515
  %v518 = vadd.f32 %v304, %v516
  %v519 = vmul.f32 %v56, %v395
  %v520 = vmul.f32 %v57, %v396
  %v521 = vsub.f32 %v361, %v519
  %v522 = vsub.f32 %v362, %v520
  %v523 = vmul.f32 %v56, %v487
  %v524 = vmul.f32 %v57, %v488
  %v525 = vadd.f32 %v453, %v523
  %v526 = vadd.f32 %v454, %v524
  %v529 = vrot.slane %v525, 4
  %v530 = vrot.slane %v526, 4
  %v533 = vadd.f32 %v521, %v529
  %v534 = vadd.f32 %v522, %v530
  %v535 = vadd.f32 %v315, %v533
  %v536 = vadd.f32 %v316, %v534
  %v537 = vmul.f32 %v517, 0.276
  %v538 = vmul.f32 %v518, 0.276
  %v540 = vlaneseq
  %v541 = vshrl.u32 %v540, 7
  %v542 = vsub.s32 0, %v541
  %v543 = vrot.slane %v74, %v542
  %v544 = vlaneseq
  %v545 = vshrl.u32 %v544, 7
  %v546 = vsub.s32 1, %v545
  %v547 = vrot.slane %v74, %v546
  %v550 = vsub.f32 %v543, %v537
  %v551 = vsub.f32 %v547, %v538
  %v552 = vmul.f32 %v535, 0.276
  %v553 = vmul.f32 %v536, 0.276
  %v555 = vlaneseq
  %v556 = vshrl.u32 %v555, 7
  %v557 = vsub.s32 0, %v556
  %v558 = vrot.slane %v76, %v557
  %v559 = vlaneseq
  %v560 = vshrl.u32 %v559, 7
  %v561 = vsub.s32 1, %v560
  %v562 = vrot.slane %v76, %v561
  %v565 = vsub.f32 %v558, %v552
  %v566 = vsub.f32 %v562, %v553
  %v567 = vld [vmem:[%s3] sm:$0x1]
  %v568 = vld [vmem:[%s2] sm:$0xff]
  %v569 = vld [vmem:[%s2 + $0x8] sm:$0xff]
  %v570 = vld [vmem:[%s2 + $0x10] sm:$0xff]
  %v571 = vld [vmem:[%s2 + $0x18] sm:$0xff]
  %v572 = vld [vmem:[%s2 + $0x20] sm:$0xff]
  %v573 = vld [vmem:[%s2 + $0x28] sm:$0xff]
  %v574 = vld [vmem:[%s2 + $0x30] sm:$0xff]
  %v575 = vld [vmem:[%s2 + $0x38] sm:$0xff]
  %v576 = vld [vmem:[%s2 + $0x40] sm:$0xff]
  %v577 = vld [vmem:[%s2 + $0x48] sm:$0xff]
  %v578 = vld [vmem:[%s2 + $0x50] sm:$0xff]
  %v579 = vld [vmem:[%s2 + $0x58] sm:$0xff]
  %v580 = vld [vmem:[%s2 + $0x60] sm:$0xff]
  %v581 = vld [vmem:[%s2 + $0x68] sm:$0xff]
  %v582 = vld [vmem:[%s2 + $0x70] sm:$0xff]
  %v583 = vld [vmem:[%s2 + $0x78] sm:$0xff]
  %v584 = vld [vmem:[%s2 + $0x80] sm:$0xff]
  %v585 = vld [vmem:[%s2 + $0x88] sm:$0xff]
  %v586 = vld [vmem:[%s2 + $0x90] sm:$0xff]
  %v587 = vld [vmem:[%s2 + $0x98] sm:$0xff]
  %v588 = vld [vmem:[%s2 + $0xa0] sm:$0xff]
  %v589 = vld [vmem:[%s2 + $0xa8] sm:$0xff]
  %v590 = vld [vmem:[%s2 + $0xb0] sm:$0xff]
  %v591 = vld [vmem:[%s2 + $0xb8] sm:$0xff]
  %v592 = vld [vmem:[%s2 + $0xc0] sm:$0xff]
  %v593 = vld [vmem:[%s2 + $0xc8] sm:$0xff]
  %v594 = vld [vmem:[%s2 + $0xd0] sm:$0xff]
  %v595 = vld [vmem:[%s2 + $0xd8] sm:$0xff]
  %v596 = vld [vmem:[%s2 + $0xe0] sm:$0xff]
  %v597 = vld [vmem:[%s2 + $0xe8] sm:$0xff]
  %v598 = vld [vmem:[%s2 + $0xf0] sm:$0xff]
  %v599 = vld [vmem:[%s2 + $0xf8] sm:$0xff]
  %600 = vmatprep.subr.mxu0 0.0
  %601 = vmatpush1.msra.mxu0 %v583
  %602 = vmatprep.subr.mxu0 0.0
  %603 = vmatpush1.msra.mxu0 %v582
  %604 = vmatprep.subr.mxu0 0.0
  %605 = vmatpush1.msra.mxu0 %v581
  %606 = vmatprep.subr.mxu0 0.0
  %607 = vmatpush1.msra.mxu0 %v580
  %608 = vmatprep.subr.mxu0 0.0
  %609 = vmatpush1.msra.mxu0 %v579
  %610 = vmatprep.subr.mxu0 0.0
  %611 = vmatpush1.msra.mxu0 %v578
  %612 = vmatprep.subr.mxu0 0.0
  %613 = vmatpush1.msra.mxu0 %v577
  %614 = vmatprep.subr.mxu0 0.0
  %615 = vmatpush1.msra.mxu0 %v576
  %616 = vmatprep.subr.mxu0 0.0
  %617 = vmatpush1.msra.mxu0 %v575
  %618 = vmatprep.subr.mxu0 0.0
  %619 = vmatpush1.msra.mxu0 %v574
  %620 = vmatprep.subr.mxu0 0.0
  %621 = vmatpush1.msra.mxu0 %v573
  %622 = vmatprep.subr.mxu0 0.0
  %623 = vmatpush1.msra.mxu0 %v572
  %624 = vmatprep.subr.mxu0 0.0
  %625 = vmatpush1.msra.mxu0 %v571
  %626 = vmatprep.subr.mxu0 0.0
  %627 = vmatpush1.msra.mxu0 %v570
  %628 = vmatprep.subr.mxu0 0.0
  %629 = vmatpush1.msra.mxu0 %v569
  %630 = vmatprep.subr.mxu0 0.0
  %631 = vmatpush1.msra.mxu0 %v568
  %632 = vmatprep.subr.mxu0 0.0
  %633 = vmatpush2.msra.mxu0 %v599
  %634 = vmatprep.subr.mxu0 0.0
  %635 = vmatpush2.msra.mxu0 %v598
  %636 = vmatprep.subr.mxu0 0.0
  %637 = vmatpush2.msra.mxu0 %v597
  %638 = vmatprep.subr.mxu0 0.0
  %639 = vmatpush2.msra.mxu0 %v596
  %640 = vmatprep.subr.mxu0 0.0
  %641 = vmatpush2.msra.mxu0 %v595
  %642 = vmatprep.subr.mxu0 0.0
  %643 = vmatpush2.msra.mxu0 %v594
  %644 = vmatprep.subr.mxu0 0.0
  %645 = vmatpush2.msra.mxu0 %v593
  %646 = vmatprep.subr.mxu0 0.0
  %647 = vmatpush2.msra.mxu0 %v592
  %648 = vmatprep.subr.mxu0 0.0
  %649 = vmatpush2.msra.mxu0 %v591
  %650 = vmatprep.subr.mxu0 0.0
  %651 = vmatpush2.msra.mxu0 %v590
  %652 = vmatprep.subr.mxu0 0.0
  %653 = vmatpush2.msra.mxu0 %v589
  %654 = vmatprep.subr.mxu0 0.0
  %655 = vmatpush2.msra.mxu0 %v588
  %656 = vmatprep.subr.mxu0 0.0
  %657 = vmatpush2.msra.mxu0 %v587
  %658 = vmatprep.subr.mxu0 0.0
  %659 = vmatpush2.msra.mxu0 %v586
  %660 = vmatprep.subr.mxu0 0.0
  %661 = vmatpush2.msra.mxu0 %v585
  %662 = vmatprep.subr.mxu0 0.0
  %663 = vmatpush2.msra.mxu0 %v584
  %664 = vmatprep.mubr.f32.mxu0 %v551
  %665 = vmatmul.mubr.f32.gmra.mxu0 %v550
  %v666 = vpop.f32.mrf.mxu0
  %v667 = vadd.f32 0.0, %v666
  %v668 = vpop.f32.mrf.mxu0
  %669 = vdwg.mxu0
  %v670 = vlaneseq
  %v671 = vshrl.u32 %v670, 7
  %v672 = vsub.s32 0, %v671
  %v673 = vrot.slane %v567, %v672
  %v674 = vadd.f32 %v673, %v667
  %v675 = vld [vmem:[%s2 + $0x100] sm:$0xff]
  %v676 = vld [vmem:[%s2 + $0x108] sm:$0xff]
  %v677 = vld [vmem:[%s2 + $0x110] sm:$0xff]
  %v678 = vld [vmem:[%s2 + $0x118] sm:$0xff]
  %v679 = vld [vmem:[%s2 + $0x120] sm:$0xff]
  %v680 = vld [vmem:[%s2 + $0x128] sm:$0xff]
  %v681 = vld [vmem:[%s2 + $0x130] sm:$0xff]
  %v682 = vld [vmem:[%s2 + $0x138] sm:$0xff]
  %v683 = vld [vmem:[%s2 + $0x140] sm:$0xff]
  %v684 = vld [vmem:[%s2 + $0x148] sm:$0xff]
  %v685 = vld [vmem:[%s2 + $0x150] sm:$0xff]
  %v686 = vld [vmem:[%s2 + $0x158] sm:$0xff]
  %v687 = vld [vmem:[%s2 + $0x160] sm:$0xff]
  %v688 = vld [vmem:[%s2 + $0x168] sm:$0xff]
  %v689 = vld [vmem:[%s2 + $0x170] sm:$0xff]
  %v690 = vld [vmem:[%s2 + $0x178] sm:$0xff]
  %v691 = vld [vmem:[%s2 + $0x180] sm:$0xff]
  %v692 = vld [vmem:[%s2 + $0x188] sm:$0xff]
  %v693 = vld [vmem:[%s2 + $0x190] sm:$0xff]
  %v694 = vld [vmem:[%s2 + $0x198] sm:$0xff]
  %v695 = vld [vmem:[%s2 + $0x1a0] sm:$0xff]
  %v696 = vld [vmem:[%s2 + $0x1a8] sm:$0xff]
  %v697 = vld [vmem:[%s2 + $0x1b0] sm:$0xff]
  %v698 = vld [vmem:[%s2 + $0x1b8] sm:$0xff]
  %v699 = vld [vmem:[%s2 + $0x1c0] sm:$0xff]
  %v700 = vld [vmem:[%s2 + $0x1c8] sm:$0xff]
  %v701 = vld [vmem:[%s2 + $0x1d0] sm:$0xff]
  %v702 = vld [vmem:[%s2 + $0x1d8] sm:$0xff]
  %v703 = vld [vmem:[%s2 + $0x1e0] sm:$0xff]
  %v704 = vld [vmem:[%s2 + $0x1e8] sm:$0xff]
  %v705 = vld [vmem:[%s2 + $0x1f0] sm:$0xff]
  %v706 = vld [vmem:[%s2 + $0x1f8] sm:$0xff]
  %707 = vmatprep.subr.mxu0 0.0
  %708 = vmatpush1.msra.mxu0 %v690
  %709 = vmatprep.subr.mxu0 0.0
  %710 = vmatpush1.msra.mxu0 %v689
  %711 = vmatprep.subr.mxu0 0.0
  %712 = vmatpush1.msra.mxu0 %v688
  %713 = vmatprep.subr.mxu0 0.0
  %714 = vmatpush1.msra.mxu0 %v687
  %715 = vmatprep.subr.mxu0 0.0
  %716 = vmatpush1.msra.mxu0 %v686
  %717 = vmatprep.subr.mxu0 0.0
  %718 = vmatpush1.msra.mxu0 %v685
  %719 = vmatprep.subr.mxu0 0.0
  %720 = vmatpush1.msra.mxu0 %v684
  %721 = vmatprep.subr.mxu0 0.0
  %722 = vmatpush1.msra.mxu0 %v683
  %723 = vmatprep.subr.mxu0 0.0
  %724 = vmatpush1.msra.mxu0 %v682
  %725 = vmatprep.subr.mxu0 0.0
  %726 = vmatpush1.msra.mxu0 %v681
  %727 = vmatprep.subr.mxu0 0.0
  %728 = vmatpush1.msra.mxu0 %v680
  %729 = vmatprep.subr.mxu0 0.0
  %730 = vmatpush1.msra.mxu0 %v679
  %731 = vmatprep.subr.mxu0 0.0
  %732 = vmatpush1.msra.mxu0 %v678
  %733 = vmatprep.subr.mxu0 0.0
  %734 = vmatpush1.msra.mxu0 %v677
  %735 = vmatprep.subr.mxu0 0.0
  %736 = vmatpush1.msra.mxu0 %v676
  %737 = vmatprep.subr.mxu0 0.0
  %738 = vmatpush1.msra.mxu0 %v675
  %739 = vmatprep.subr.mxu0 0.0
  %740 = vmatpush2.msra.mxu0 %v706
  %741 = vmatprep.subr.mxu0 0.0
  %742 = vmatpush2.msra.mxu0 %v705
  %743 = vmatprep.subr.mxu0 0.0
  %744 = vmatpush2.msra.mxu0 %v704
  %745 = vmatprep.subr.mxu0 0.0
  %746 = vmatpush2.msra.mxu0 %v703
  %747 = vmatprep.subr.mxu0 0.0
  %748 = vmatpush2.msra.mxu0 %v702
  %749 = vmatprep.subr.mxu0 0.0
  %750 = vmatpush2.msra.mxu0 %v701
  %751 = vmatprep.subr.mxu0 0.0
  %752 = vmatpush2.msra.mxu0 %v700
  %753 = vmatprep.subr.mxu0 0.0
  %754 = vmatpush2.msra.mxu0 %v699
  %755 = vmatprep.subr.mxu0 0.0
  %756 = vmatpush2.msra.mxu0 %v698
  %757 = vmatprep.subr.mxu0 0.0
  %758 = vmatpush2.msra.mxu0 %v697
  %759 = vmatprep.subr.mxu0 0.0
  %760 = vmatpush2.msra.mxu0 %v696
  %761 = vmatprep.subr.mxu0 0.0
  %762 = vmatpush2.msra.mxu0 %v695
  %763 = vmatprep.subr.mxu0 0.0
  %764 = vmatpush2.msra.mxu0 %v694
  %765 = vmatprep.subr.mxu0 0.0
  %766 = vmatpush2.msra.mxu0 %v693
  %767 = vmatprep.subr.mxu0 0.0
  %768 = vmatpush2.msra.mxu0 %v692
  %769 = vmatprep.subr.mxu0 0.0
  %770 = vmatpush2.msra.mxu0 %v691
  %771 = vmatprep.mubr.f32.mxu0 %v566
  %772 = vmatmul.mubr.f32.gmra.mxu0 %v565
  %v773 = vpop.f32.mrf.mxu0
  %v774 = vadd.f32 0.0, %v773
  %v775 = vpop.f32.mrf.mxu0
  %776 = vdwg.mxu0
  %v777 = vadd.f32 %v674, %v774
  %s778 = sld [smem:[#allocation2]]
  %vm779 = vcmp.ge.f32.partialorder %v777, 0.0
  %v780 = vstv %s778
  %v781 = vmul.f32 %v780, %v777
  %v782 = vsel %vm779, %v777, %v781
  %vm783 = vcmask 1041408
  %v784 = vsel %vm783, %v782, 0.0
  %v785 = vrot.slane %v784, 4
  %v786 = vadd.f32 %v784, %v785
  %v787 = vrot.slane %v786, 2
  %v788 = vadd.f32 %v786, %v787
  %v789 = vrot.slane %v788, 1
  %v790 = vadd.f32 %v788, %v789
  %v791 = vmul.f32 %v790, 0.5
  %v792 = vmul.f32 %v782, %v782
  %v793 = vsel %vm783, %v792, 0.0
  %v794 = vrot.slane %v793, 4
  %v795 = vadd.f32 %v793, %v794
  %v796 = vrot.slane %v795, 2
  %v797 = vadd.f32 %v795, %v796
  %v798 = vrot.slane %v797, 1
  %v799 = vadd.f32 %v797, %v798
  %v800 = vmul.f32 %v799, 0.5
  %v801 = vmul.f32 %v791, %v791
  %v802 = vsub.f32 %v800, %v801
  %v803 = vmax.f32 %v802, 0.0
  %v804 = vld [vmem:[%s3 + $0x1] sm:$0x1]
  %v805 = vadd.f32 %v803, 1e-05
  %v806 = vrsqrt.pop %v805
  %v807 = vmul.f32 %v804, %v806
  %v808 = vld [vmem:[%s3 + $0x2] sm:$0x1]
  %v809 = vmul.f32 %v791, %v807
  %v810 = vsub.f32 %v808, %v809
  %v811 = vlaneseq
  %v812 = vshrl.u32 %v811, 7
  %v813 = vsub.s32 0, %v812
  %v814 = vrot.slane %v807, %v813
  %v815 = vmul.f32 %v782, %v814
  %v816 = vlaneseq
  %v817 = vshrl.u32 %v816, 7
  %v818 = vsub.s32 0, %v817
  %v819 = vrot.slane %v810, %v818
  %v820 = vadd.f32 %v815, %v819
  %v821 = vld [vmem:[%s5] sm:$0xff]
  %v822 = vld [vmem:[%s5 + $0x8] sm:$0xff]
  %v823 = vld [vmem:[%s5 + $0x10] sm:$0xff]
  %v824 = vld [vmem:[%s5 + $0x18] sm:$0xff]
  %v825 = vld [vmem:[%s5 + $0x20] sm:$0xff]
  %v826 = vld [vmem:[%s5 + $0x28] sm:$0xff]
  %v827 = vld [vmem:[%s5 + $0x30] sm:$0xff]
  %v828 = vld [vmem:[%s5 + $0x38] sm:$0xff]
  %v829 = vld [vmem:[%s5 + $0x40] sm:$0xff]
  %v830 = vld [vmem:[%s5 + $0x48] sm:$0xff]
  %v831 = vld [vmem:[%s5 + $0x50] sm:$0xff]
  %v832 = vld [vmem:[%s5 + $0x58] sm:$0xff]
  %v833 = vld [vmem:[%s5 + $0x60] sm:$0xff]
  %v834 = vld [vmem:[%s5 + $0x68] sm:$0xff]
  %v835 = vld [vmem:[%s5 + $0x70] sm:$0xff]
  %v836 = vld [vmem:[%s5 + $0x78] sm:$0xff]
  %v837 = vld [vmem:[%s6] sm:$0x1]
  %v839 = vlaneseq
  %v840 = vshrl.u32 %v839, 7
  %v841 = vsub.s32 0, %v840
  %v842 = vrot.slane %v837, %v841
  %844 = vmatprep.subr.mxu0 0.0
  %845 = vmatpush1.msra.mxu0 %v836
  %846 = vmatprep.subr.mxu0 0.0
  %847 = vmatpush1.msra.mxu0 %v835
  %848 = vmatprep.subr.mxu0 0.0
  %849 = vmatpush1.msra.mxu0 %v834
  %850 = vmatprep.subr.mxu0 0.0
  %851 = vmatpush1.msra.mxu0 %v833
  %852 = vmatprep.subr.mxu0 0.0
  %853 = vmatpush1.msra.mxu0 %v832
  %854 = vmatprep.subr.mxu0 0.0
  %855 = vmatpush1.msra.mxu0 %v831
  %856 = vmatprep.subr.mxu0 0.0
  %857 = vmatpush1.msra.mxu0 %v830
  %858 = vmatprep.subr.mxu0 0.0
  %859 = vmatpush1.msra.mxu0 %v829
  %860 = vmatprep.subr.mxu0 0.0
  %861 = vmatpush1.msra.mxu0 %v828
  %862 = vmatprep.subr.mxu0 0.0
  %863 = vmatpush1.msra.mxu0 %v827
  %864 = vmatprep.subr.mxu0 0.0
  %865 = vmatpush1.msra.mxu0 %v826
  %866 = vmatprep.subr.mxu0 0.0
  %867 = vmatpush1.msra.mxu0 %v825
  %868 = vmatprep.subr.mxu0 0.0
  %869 = vmatpush1.msra.mxu0 %v824
  %870 = vmatprep.subr.mxu0 0.0
  %871 = vmatpush1.msra.mxu0 %v823
  %872 = vmatprep.subr.mxu0 0.0
  %873 = vmatpush1.msra.mxu0 %v822
  %874 = vmatprep.subr.mxu0 0.0
  %875 = vmatpush1.msra.mxu0 %v821
  %876 = vmatprep.subr.mxu0 0.0
  %877 = vmatpush2.msra.mxu0 0.0
  %878 = vmatprep.subr.mxu0 0.0
  %879 = vmatpush2.msra.mxu0 0.0
  %880 = vmatprep.subr.mxu0 0.0
  %881 = vmatpush2.msra.mxu0 0.0
  %882 = vmatprep.subr.mxu0 0.0
  %883 = vmatpush2.msra.mxu0 0.0
  %884 = vmatprep.subr.mxu0 0.0
  %885 = vmatpush2.msra.mxu0 0.0
  %886 = vmatprep.subr.mxu0 0.0
  %887 = vmatpush2.msra.mxu0 0.0
  %888 = vmatprep.subr.mxu0 0.0
  %889 = vmatpush2.msra.mxu0 0.0
  %890 = vmatprep.subr.mxu0 0.0
  %891 = vmatpush2.msra.mxu0 0.0
  %892 = vmatprep.subr.mxu0 0.0
  %893 = vmatpush2.msra.mxu0 0.0
  %894 = vmatprep.subr.mxu0 0.0
  %895 = vmatpush2.msra.mxu0 0.0
  %896 = vmatprep.subr.mxu0 0.0
  %897 = vmatpush2.msra.mxu0 0.0
  %898 = vmatprep.subr.mxu0 0.0
  %899 = vmatpush2.msra.mxu0 0.0
  %900 = vmatprep.subr.mxu0 0.0
  %901 = vmatpush2.msra.mxu0 0.0
  %902 = vmatprep.subr.mxu0 0.0
  %903 = vmatpush2.msra.mxu0 0.0
  %904 = vmatprep.subr.mxu0 0.0
  %905 = vmatpush2.msra.mxu0 0.0
  %906 = vmatprep.subr.mxu0 0.0
  %907 = vmatpush2.msra.mxu0 0.0
  %908 = vmatprep.mubr.f32.mxu0 0.0
  %909 = vmatmul.mubr.f32.gmra.mxu0 %v820
  %v910 = vpop.f32.mrf.mxu0
  %v911 = vadd.f32 %v842, %v910
  %v912 = vpop.f32.mrf.mxu0
  %913 = vdwg.mxu0
  %vm914 = vcmp.gt.f32.partialorder %v911, 20.0
  %v915 = vmul.f32 %v911, 1.442695
  %v916 = vpow.pop %v915
  %v917 = vadd.f32 %v916, 1.0
  %v918 = vlog2.pop %v917
  %v919 = vmul.f32 %v918, 0.6931472
  %v920 = vmul.f32 -0.5, %v916
  %v921 = vadd.f32 %v920, 1.0
  %v922 = vmul.f32 %v921, %v916
  %v923 = vand.u32 2147483647, %v916
  %vm924 = vcmp.lt.f32.partialorder %v923, 0.0004427343
  %v925 = vsel %vm924, %v922, %v919
  %v926 = vsel %vm914, %v911, %v925
  %927 = vst [vmem:[%s7] sm:$0x3] %v926
  // Predicated region
  $region30: #{neural_preconditioner_forward.1} parent=0 // pred_check
    _
  $region31: #{neural_preconditioner_forward.1} parent=0 // pred_check_branch
    %929 = sbr.rel (0) target = $region33
  $region32: #{neural_preconditioner_forward.1} parent=0 // pred_region
    _
  $region33: #{neural_preconditioner_forward.1} parent=0 // pred_fallthru
    _
  // Predicated region
  $region34: #{neural_preconditioner_forward.1} parent=0 // pred_check
    _
  $region35: #{neural_preconditioner_forward.1} parent=0 // pred_check_branch
    %931 = sbr.rel (0) target = $region37
  $region36: #{neural_preconditioner_forward.1} parent=0 // pred_region
    _
  $region37: #{neural_preconditioner_forward.1} parent=0 // pred_fallthru
    _

</llo_original>
